<compile_context>
chip_gen: v5e
topology: v5e:2x2
jax: 0.10.0
libtpu: 0.0.40
codegen_flags: <defaults>
</compile_context>

<pallas_src>
import numpy as np
import jax
import jax.numpy as jnp
from jax.experimental import pallas as pl
from jax.experimental.pallas import tpu as pltpu


# -----------------------------------------------------------------------------
# Host-side constants: 1-D bilinear transposed-conv as a dense matrix.
# -----------------------------------------------------------------------------
def bilinear_filter_1d(k):
    factor = (k + 1) // 2
    center = factor - 1 if k % 2 == 1 else factor - 0.5
    og = np.arange(k, dtype=np.float64)
    return 1.0 - np.abs(og - center) / factor


def upsample_matrix(h_in, k, s, p):
    """U (h_out, h_in) s.t. 1-D bilinear ConvTranspose(k, stride s, pad p)(x) == U @ x."""
    f = bilinear_filter_1d(k)
    h_out = (h_in - 1) * s - 2 * p + k
    U = np.zeros((h_out, h_in), dtype=np.float64)
    for o in range(h_out):
        for i in range(h_in):
            t = o + p - s * i
            if 0 <= t < k:
                U[o, i] = f[t]
    return U


# -----------------------------------------------------------------------------
# Pallas kernel + wrapper.
# -----------------------------------------------------------------------------
def fcn16s_pallas(x4, x5, w4, b4, w5, b5, num_classes, row_tile=128):
    f32, bf16 = jnp.float32, jnp.bfloat16
    N, C4, H4, W4 = x4.shape
    _, C5, H5, W5 = x5.shape
    C = num_classes
    assert C4 == 256 and C5 == 512
    assert H4 == 2 * H5 and W4 == 2 * W5
    OH, OW = 16 * H4, 16 * W4            # final output spatial size (x2 then x8)
    HK = H4 + H5                          # concatenated row-contraction length
    TOH = min(row_tile, OH)               # output-row tile (128: full MXU M rows)
    assert OH % TOH == 0 and TOH % 8 == 0, (OH, TOH)
    J = OH // TOH
    # OW is a multiple of 128 for any W4 >= 8, so output stores are lane-dense.

    # Fused separable bilinear upsample matrices (exact dyadic values -> exact bf16):
    #   upscore(upscore4(S4) + upscore5(S5)) =
    #       (Uhf@Uh4) S4 (Uw4^T Uwf^T) + (Uhf@Uh5) S5 (Uw5^T Uwf^T)
    uh4 = upsample_matrix(H4, 4, 2, 1)               # (2*H4, H4)
    uw4 = upsample_matrix(W4, 4, 2, 1)               # (2*W4, W4)
    uh5 = upsample_matrix(H5, 8, 4, 2)               # (2*H4, H5)
    uw5 = upsample_matrix(W5, 8, 4, 2)               # (2*W4, W5)
    uhf = upsample_matrix(2 * H4, 16, 8, 4)          # (OH, 2*H4)
    uwf = upsample_matrix(2 * W4, 16, 8, 4)          # (OW, 2*W4)
    uh_cat = np.concatenate([uhf @ uh4, uhf @ uh5], axis=1)   # (OH, H4+H5)
    uw4fT = (uwf @ uw4).T                             # (W4, OW)
    uw5fT = (uwf @ uw5).T                             # (W5, OW)

    def kernel(x4_ref, x5_ref, w4_ref, b4_ref, w5_ref, b5_ref,
               uw4_ref, uw5_ref, uh_ref, out_ref, zc_ref):
        j = pl.program_id(1)

        # zc_ref (C, H4+H5, OW) caches the column-upsampled scores for the current
        # batch element; filled at j == 0, reused by every output-row tile (j axis
        # must stay the sequential innermost grid axis).
        @pl.when(j == 0)
        def _prologue():
            # -- score4 / score5: one lane-dense bf16 matmul each, f32 accumulate.
            s4 = jnp.dot(w4_ref[...], x4_ref[0],
                         preferred_element_type=f32) + b4_ref[...]   # (C, H4*W4) f32
            s5 = jnp.dot(w5_ref[...], x5_ref[0],
                         preferred_element_type=f32) + b5_ref[...]   # (C, H5*W5) f32

            # -- column half of the fused upsamples: per source row, a lane-dense
            #    (C, W) @ (W, OW) matmul; results cached as bf16.
            uw4m = uw4_ref[...]                                       # (W4, OW) bf16
            for h in range(H4):
                zc_ref[:, h, :] = jnp.dot(
                    s4[:, h * W4:(h + 1) * W4].astype(bf16), uw4m,
                    preferred_element_type=f32).astype(bf16)          # (C, OW)
            uw5m = uw5_ref[...]                                       # (W5, OW) bf16
            for h in range(H5):
                zc_ref[:, H4 + h, :] = jnp.dot(
                    s5[:, h * W5:(h + 1) * W5].astype(bf16), uw5m,
                    preferred_element_type=f32).astype(bf16)          # (C, OW)

        # -- row half of the fused upsample for this output-row tile: per class, one
        #    (TOH, H4+H5) @ (H4+H5, OW) matmul, emitted directly in NCHW f32.
        uh = uh_ref[...]                                              # (TOH, HK) bf16
        for c in range(C):
            out_ref[0, c] = jnp.dot(uh, zc_ref[c], preferred_element_type=f32)

    grid_spec = pltpu.PrefetchScalarGridSpec(
        num_scalar_prefetch=0,
        grid=(N, J),
        in_specs=[
            pl.BlockSpec((1, C4, H4 * W4), lambda n, j: (n, 0, 0)),
            pl.BlockSpec((1, C5, H5 * W5), lambda n, j: (n, 0, 0)),
            pl.BlockSpec((C, C4), lambda n, j: (0, 0)),
            pl.BlockSpec((C, 1), lambda n, j: (0, 0)),
            pl.BlockSpec((C, C5), lambda n, j: (0, 0)),
            pl.BlockSpec((C, 1), lambda n, j: (0, 0)),
            pl.BlockSpec((W4, OW), lambda n, j: (0, 0)),
            pl.BlockSpec((W5, OW), lambda n, j: (0, 0)),
            pl.BlockSpec((TOH, HK), lambda n, j: (j, 0)),
        ],
        out_specs=pl.BlockSpec((1, C, TOH, OW), lambda n, j: (n, 0, j, 0)),
        scratch_shapes=[pltpu.VMEM((C, HK, OW), bf16)],
    )

    out = pl.pallas_call(
        kernel,
        out_shape=jax.ShapeDtypeStruct((N, C, OH, OW), f32),
        grid_spec=grid_spec,
        compiler_params=pltpu.CompilerParams(
            dimension_semantics=("parallel", "arbitrary"),
            vmem_limit_bytes=48 * 1024 * 1024),
    )(x4.astype(bf16).reshape(N, C4, H4 * W4),
      x5.astype(bf16).reshape(N, C5, H5 * W5),
      jnp.asarray(w4, bf16), jnp.asarray(b4, f32).reshape(C, 1),
      jnp.asarray(w5, bf16), jnp.asarray(b5, f32).reshape(C, 1),
      jnp.asarray(uw4fT, bf16), jnp.asarray(uw5fT, bf16),
      jnp.asarray(uh_cat, bf16))

    return out     # (N, C, OH, OW), already NCHW, only real classes


# -----------------------------------------------------------------------------
# Pure-JAX reference (NCHW, XLA convs) for validation.
# -----------------------------------------------------------------------------
def fcn16s_reference(x4, x5, w4, b4, w5, b5, num_classes):
    C = num_classes

    def score(x, w, b):
        return jnp.einsum('nchw,kc->nkhw', x, w,
                          precision=jax.lax.Precision.HIGHEST) + b[None, :, None, None]

    def up(x, k, s, p):
        f1 = bilinear_filter_1d(k)
        filt = np.outer(f1, f1).astype(np.float32)
        w = np.zeros((C, C, k, k), np.float32)
        for c in range(C):
            w[c, c] = filt[::-1, ::-1]
        return jax.lax.conv_general_dilated(
            x, jnp.asarray(w), window_strides=(1, 1),
            padding=[(k - 1 - p, k - 1 - p)] * 2,
            lhs_dilation=(s, s),
            dimension_numbers=('NCHW', 'OIHW', 'NCHW'),
            precision=jax.lax.Precision.HIGHEST)

    s4 = up(score(x4, w4, b4), 4, 2, 1)
    s5 = up(score(x5, w5, b5), 8, 4, 2)
    return up(s4 + s5, 16, 8, 4)


if __name__ == "__main__":
    num_classes = 8
    N = 2
    key = jax.random.PRNGKey(0)
    k_x, k_p4, k_p5, k_w4, k_b4, k_w5, k_b5 = jax.random.split(key, 7)

    # TODO(synk): the external `encorder` backbone is unspecified; a deterministic
    # plain-JAX stub produces the x4/x5 features consumed by FCN16s.forward.
    x = jax.random.normal(k_x, (N, 3, 256, 256), jnp.float32)

    def pool(v, f):
        n_, c_, h_, w_ = v.shape
        return v.reshape(n_, c_, h_ // f, f, w_ // f, f).mean(axis=(3, 5))

    p4 = 0.1 * jax.random.normal(k_p4, (256, 3), jnp.float32)
    p5 = 0.1 * jax.random.normal(k_p5, (512, 3), jnp.float32)
    x4 = jnp.einsum('kc,nchw->nkhw', p4, pool(x, 16))   # (2, 256, 16, 16)
    x5 = jnp.einsum('kc,nchw->nkhw', p5, pool(x, 32))   # (2, 512, 8, 8)

    # score4 / score5 parameters (shapes from the nn.Conv2d definitions).
    w4 = 0.05 * jax.random.normal(k_w4, (num_classes, 256), jnp.float32)
    b4 = 0.10 * jax.random.normal(k_b4, (num_classes,), jnp.float32)
    w5 = 0.05 * jax.random.normal(k_w5, (num_classes, 512), jnp.float32)
    b5 = 0.10 * jax.random.normal(k_b5, (num_classes,), jnp.float32)

    out = jax.block_until_ready(fcn16s_pallas(x4, x5, w4, b4, w5, b5, num_classes))
    ref = jax.block_until_ready(fcn16s_reference(x4, x5, w4, b4, w5, b5, num_classes))

    assert out.shape == (N, num_classes, 256, 256), out.shape
    err = float(jnp.max(jnp.abs(out - ref)))
    scale = float(jnp.max(jnp.abs(ref))) + 1e-6
    # bf16 operands (exact bilinear matrices; bf16-rounded activations), f32 accumulate.
    assert err / scale < 2e-2, (err, scale)
    print("KERNEL_OK")
</pallas_src>

<mosaic_0001>
module attributes {stable_mosaic.version = 11 : i64} {
  func.func @kernel(%arg0: i32, %arg1: i32, %arg2: memref<1x256x256xbf16, #tpu.memory_space<vmem>>, %arg3: memref<1x512x64xbf16, #tpu.memory_space<vmem>>, %arg4: memref<8x256xbf16, #tpu.memory_space<vmem>>, %arg5: memref<8x1xf32, #tpu.memory_space<vmem>>, %arg6: memref<8x512xbf16, #tpu.memory_space<vmem>>, %arg7: memref<8x1xf32, #tpu.memory_space<vmem>>, %arg8: memref<16x256xbf16, #tpu.memory_space<vmem>>, %arg9: memref<8x256xbf16, #tpu.memory_space<vmem>>, %arg10: memref<128x24xbf16, #tpu.memory_space<vmem>>, %arg11: memref<1x8x128x256xf32, #tpu.memory_space<vmem>>, %arg12: memref<8x24x256xbf16, #tpu.memory_space<vmem>>) attributes {dimension_semantics = [#tpu.dimension_semantics<parallel>, #tpu.dimension_semantics<arbitrary>], iteration_bounds = array<i64: 2, 2>, scalar_prefetch = 0 : i64, scratch_operands = 1 : i64, tpu.core_type = #tpu.core_type<tc>, window_params = [{transform_indices = @transform_0, window_bounds = array<i64: 1, 256, 256>}, {transform_indices = @transform_1, window_bounds = array<i64: 1, 512, 64>}, {pipeline_mode = #tpu.pipeline_mode<synchronous>, transform_indices = @transform_2, window_bounds = array<i64: 8, 256>}, {pipeline_mode = #tpu.pipeline_mode<synchronous>, transform_indices = @transform_3, window_bounds = array<i64: 8, 1>}, {pipeline_mode = #tpu.pipeline_mode<synchronous>, transform_indices = @transform_4, window_bounds = array<i64: 8, 512>}, {pipeline_mode = #tpu.pipeline_mode<synchronous>, transform_indices = @transform_5, window_bounds = array<i64: 8, 1>}, {pipeline_mode = #tpu.pipeline_mode<synchronous>, transform_indices = @transform_6, window_bounds = array<i64: 16, 256>}, {pipeline_mode = #tpu.pipeline_mode<synchronous>, transform_indices = @transform_7, window_bounds = array<i64: 8, 256>}, {transform_indices = @transform_8, window_bounds = array<i64: 128, 24>}, {transform_indices = @transform_9, window_bounds = array<i64: 1, 8, 128, 256>}]} {
    %c0_i32 = arith.constant 0 : i32
    %0 = arith.cmpi eq, %arg1, %c0_i32 : i32
    %1 = arith.extui %0 : i1 to i32
    %c0_i32_0 = arith.constant 0 : i32
    %2 = arith.cmpi ne, %1, %c0_i32_0 : i32
    scf.if %2 {
      %c0_58 = arith.constant 0 : index
      %c0_59 = arith.constant 0 : index
      %52 = vector.load %arg4[%c0_58, %c0_59] : memref<8x256xbf16, #tpu.memory_space<vmem>>, vector<8x256xbf16>
      %c0_60 = arith.constant 0 : index
      %c0_61 = arith.constant 0 : index
      %c0_62 = arith.constant 0 : index
      %53 = vector.load %arg2[%c0_60, %c0_61, %c0_62] : memref<1x256x256xbf16, #tpu.memory_space<vmem>>, vector<1x256x256xbf16>
      %54 = vector.shape_cast %53 : vector<1x256x256xbf16> to vector<256x256xbf16>
      %cst_63 = arith.constant dense<0.000000e+00> : vector<8x256xf32>
      %55 = tpu.matmul %52, %54, %cst_63 {dimension_numbers = #tpu.dot_dimension_numbers<[1], [0], [0], [1], [0, 0, 1, 1], [], []>} : vector<8x256xbf16>, vector<256x256xbf16>, vector<8x256xf32> -> vector<8x256xf32>
      %c0_64 = arith.constant 0 : index
      %c0_65 = arith.constant 0 : index
      %56 = vector.load %arg5[%c0_64, %c0_65] : memref<8x1xf32, #tpu.memory_space<vmem>>, vector<8x1xf32>
      %57 = vector.broadcast %56 : vector<8x1xf32> to vector<8x256xf32>
      %58 = arith.addf %55, %57 : vector<8x256xf32>
      %c0_66 = arith.constant 0 : index
      %c0_67 = arith.constant 0 : index
      %59 = vector.load %arg6[%c0_66, %c0_67] : memref<8x512xbf16, #tpu.memory_space<vmem>>, vector<8x512xbf16>
      %c0_68 = arith.constant 0 : index
      %c0_69 = arith.constant 0 : index
      %c0_70 = arith.constant 0 : index
      %60 = vector.load %arg3[%c0_68, %c0_69, %c0_70] : memref<1x512x64xbf16, #tpu.memory_space<vmem>>, vector<1x512x64xbf16>
      %61 = vector.shape_cast %60 : vector<1x512x64xbf16> to vector<512x64xbf16>
      %cst_71 = arith.constant dense<0.000000e+00> : vector<8x64xf32>
      %62 = tpu.matmul %59, %61, %cst_71 {dimension_numbers = #tpu.dot_dimension_numbers<[1], [0], [0], [1], [0, 0, 1, 1], [], []>} : vector<8x512xbf16>, vector<512x64xbf16>, vector<8x64xf32> -> vector<8x64xf32>
      %c0_72 = arith.constant 0 : index
      %c0_73 = arith.constant 0 : index
      %63 = vector.load %arg7[%c0_72, %c0_73] : memref<8x1xf32, #tpu.memory_space<vmem>>, vector<8x1xf32>
      %64 = vector.broadcast %63 : vector<8x1xf32> to vector<8x64xf32>
      %65 = arith.addf %62, %64 : vector<8x64xf32>
      %c0_74 = arith.constant 0 : index
      %c0_75 = arith.constant 0 : index
      %66 = vector.load %arg8[%c0_74, %c0_75] : memref<16x256xbf16, #tpu.memory_space<vmem>>, vector<16x256xbf16>
      %67 = vector.extract_strided_slice %58 {offsets = [0, 0], sizes = [8, 16], strides = [1, 1]} : vector<8x256xf32> to vector<8x16xf32>
      %68 = arith.truncf %67 : vector<8x16xf32> to vector<8x16xbf16>
      %cst_76 = arith.constant dense<0.000000e+00> : vector<8x256xf32>
      %69 = tpu.matmul %68, %66, %cst_76 {dimension_numbers = #tpu.dot_dimension_numbers<[1], [0], [0], [1], [0, 0, 1, 1], [], []>} : vector<8x16xbf16>, vector<16x256xbf16>, vector<8x256xf32> -> vector<8x256xf32>
      %70 = arith.truncf %69 : vector<8x256xf32> to vector<8x256xbf16>
      %c0_77 = arith.constant 0 : index
      %c0_78 = arith.constant 0 : index
      %c0_79 = arith.constant 0 : index
      %71 = vector.load %arg12[%c0_77, %c0_78, %c0_79] : memref<8x24x256xbf16, #tpu.memory_space<vmem>>, vector<8x1x256xbf16>
      %72 = vector.shape_cast %71 : vector<8x1x256xbf16> to vector<8x256xbf16>
      %73 = vector.shape_cast %70 : vector<8x256xbf16> to vector<8x1x256xbf16>
      tpu.vector_store %arg12[%c0_77, %c0_78, %c0_79], %73 {strides = array<i32>} : memref<8x24x256xbf16, #tpu.memory_space<vmem>>, vector<8x1x256xbf16>,
      %74 = vector.extract_strided_slice %58 {offsets = [0, 16], sizes = [8, 16], strides = [1, 1]} : vector<8x256xf32> to vector<8x16xf32>
      %75 = arith.truncf %74 : vector<8x16xf32> to vector<8x16xbf16>
      %cst_80 = arith.constant dense<0.000000e+00> : vector<8x256xf32>
      %76 = tpu.matmul %75, %66, %cst_80 {dimension_numbers = #tpu.dot_dimension_numbers<[1], [0], [0], [1], [0, 0, 1, 1], [], []>} : vector<8x16xbf16>, vector<16x256xbf16>, vector<8x256xf32> -> vector<8x256xf32>
      %77 = arith.truncf %76 : vector<8x256xf32> to vector<8x256xbf16>
      %c0_81 = arith.constant 0 : index
      %c1_82 = arith.constant 1 : index
      %c0_83 = arith.constant 0 : index
      %78 = vector.load %arg12[%c0_81, %c1_82, %c0_83] : memref<8x24x256xbf16, #tpu.memory_space<vmem>>, vector<8x1x256xbf16>
      %79 = vector.shape_cast %78 : vector<8x1x256xbf16> to vector<8x256xbf16>
      %80 = vector.shape_cast %77 : vector<8x256xbf16> to vector<8x1x256xbf16>
      tpu.vector_store %arg12[%c0_81, %c1_82, %c0_83], %80 {strides = array<i32>} : memref<8x24x256xbf16, #tpu.memory_space<vmem>>, vector<8x1x256xbf16>,
      %81 = vector.extract_strided_slice %58 {offsets = [0, 32], sizes = [8, 16], strides = [1, 1]} : vector<8x256xf32> to vector<8x16xf32>
      %82 = arith.truncf %81 : vector<8x16xf32> to vector<8x16xbf16>
      %cst_84 = arith.constant dense<0.000000e+00> : vector<8x256xf32>
      %83 = tpu.matmul %82, %66, %cst_84 {dimension_numbers = #tpu.dot_dimension_numbers<[1], [0], [0], [1], [0, 0, 1, 1], [], []>} : vector<8x16xbf16>, vector<16x256xbf16>, vector<8x256xf32> -> vector<8x256xf32>
      %84 = arith.truncf %83 : vector<8x256xf32> to vector<8x256xbf16>
      %c0_85 = arith.constant 0 : index
      %c2_86 = arith.constant 2 : index
      %c0_87 = arith.constant 0 : index
      %85 = vector.load %arg12[%c0_85, %c2_86, %c0_87] : memref<8x24x256xbf16, #tpu.memory_space<vmem>>, vector<8x1x256xbf16>
      %86 = vector.shape_cast %85 : vector<8x1x256xbf16> to vector<8x256xbf16>
      %87 = vector.shape_cast %84 : vector<8x256xbf16> to vector<8x1x256xbf16>
      tpu.vector_store %arg12[%c0_85, %c2_86, %c0_87], %87 {strides = array<i32>} : memref<8x24x256xbf16, #tpu.memory_space<vmem>>, vector<8x1x256xbf16>,
      %88 = vector.extract_strided_slice %58 {offsets = [0, 48], sizes = [8, 16], strides = [1, 1]} : vector<8x256xf32> to vector<8x16xf32>
      %89 = arith.truncf %88 : vector<8x16xf32> to vector<8x16xbf16>
      %cst_88 = arith.constant dense<0.000000e+00> : vector<8x256xf32>
      %90 = tpu.matmul %89, %66, %cst_88 {dimension_numbers = #tpu.dot_dimension_numbers<[1], [0], [0], [1], [0, 0, 1, 1], [], []>} : vector<8x16xbf16>, vector<16x256xbf16>, vector<8x256xf32> -> vector<8x256xf32>
      %91 = arith.truncf %90 : vector<8x256xf32> to vector<8x256xbf16>
      %c0_89 = arith.constant 0 : index
      %c3_90 = arith.constant 3 : index
      %c0_91 = arith.constant 0 : index
      %92 = vector.load %arg12[%c0_89, %c3_90, %c0_91] : memref<8x24x256xbf16, #tpu.memory_space<vmem>>, vector<8x1x256xbf16>
      %93 = vector.shape_cast %92 : vector<8x1x256xbf16> to vector<8x256xbf16>
      %94 = vector.shape_cast %91 : vector<8x256xbf16> to vector<8x1x256xbf16>
      tpu.vector_store %arg12[%c0_89, %c3_90, %c0_91], %94 {strides = array<i32>} : memref<8x24x256xbf16, #tpu.memory_space<vmem>>, vector<8x1x256xbf16>,
      %95 = vector.extract_strided_slice %58 {offsets = [0, 64], sizes = [8, 16], strides = [1, 1]} : vector<8x256xf32> to vector<8x16xf32>
      %96 = arith.truncf %95 : vector<8x16xf32> to vector<8x16xbf16>
      %cst_92 = arith.constant dense<0.000000e+00> : vector<8x256xf32>
      %97 = tpu.matmul %96, %66, %cst_92 {dimension_numbers = #tpu.dot_dimension_numbers<[1], [0], [0], [1], [0, 0, 1, 1], [], []>} : vector<8x16xbf16>, vector<16x256xbf16>, vector<8x256xf32> -> vector<8x256xf32>
      %98 = arith.truncf %97 : vector<8x256xf32> to vector<8x256xbf16>
      %c0_93 = arith.constant 0 : index
      %c4_94 = arith.constant 4 : index
      %c0_95 = arith.constant 0 : index
      %99 = vector.load %arg12[%c0_93, %c4_94, %c0_95] : memref<8x24x256xbf16, #tpu.memory_space<vmem>>, vector<8x1x256xbf16>
      %100 = vector.shape_cast %99 : vector<8x1x256xbf16> to vector<8x256xbf16>
      %101 = vector.shape_cast %98 : vector<8x256xbf16> to vector<8x1x256xbf16>
      tpu.vector_store %arg12[%c0_93, %c4_94, %c0_95], %101 {strides = array<i32>} : memref<8x24x256xbf16, #tpu.memory_space<vmem>>, vector<8x1x256xbf16>,
      %102 = vector.extract_strided_slice %58 {offsets = [0, 80], sizes = [8, 16], strides = [1, 1]} : vector<8x256xf32> to vector<8x16xf32>
      %103 = arith.truncf %102 : vector<8x16xf32> to vector<8x16xbf16>
      %cst_96 = arith.constant dense<0.000000e+00> : vector<8x256xf32>
      %104 = tpu.matmul %103, %66, %cst_96 {dimension_numbers = #tpu.dot_dimension_numbers<[1], [0], [0], [1], [0, 0, 1, 1], [], []>} : vector<8x16xbf16>, vector<16x256xbf16>, vector<8x256xf32> -> vector<8x256xf32>
      %105 = arith.truncf %104 : vector<8x256xf32> to vector<8x256xbf16>
      %c0_97 = arith.constant 0 : index
      %c5_98 = arith.constant 5 : index
      %c0_99 = arith.constant 0 : index
      %106 = vector.load %arg12[%c0_97, %c5_98, %c0_99] : memref<8x24x256xbf16, #tpu.memory_space<vmem>>, vector<8x1x256xbf16>
      %107 = vector.shape_cast %106 : vector<8x1x256xbf16> to vector<8x256xbf16>
      %108 = vector.shape_cast %105 : vector<8x256xbf16> to vector<8x1x256xbf16>
      tpu.vector_store %arg12[%c0_97, %c5_98, %c0_99], %108 {strides = array<i32>} : memref<8x24x256xbf16, #tpu.memory_space<vmem>>, vector<8x1x256xbf16>,
      %109 = vector.extract_strided_slice %58 {offsets = [0, 96], sizes = [8, 16], strides = [1, 1]} : vector<8x256xf32> to vector<8x16xf32>
      %110 = arith.truncf %109 : vector<8x16xf32> to vector<8x16xbf16>
      %cst_100 = arith.constant dense<0.000000e+00> : vector<8x256xf32>
      %111 = tpu.matmul %110, %66, %cst_100 {dimension_numbers = #tpu.dot_dimension_numbers<[1], [0], [0], [1], [0, 0, 1, 1], [], []>} : vector<8x16xbf16>, vector<16x256xbf16>, vector<8x256xf32> -> vector<8x256xf32>
      %112 = arith.truncf %111 : vector<8x256xf32> to vector<8x256xbf16>
      %c0_101 = arith.constant 0 : index
      %c6_102 = arith.constant 6 : index
      %c0_103 = arith.constant 0 : index
      %113 = vector.load %arg12[%c0_101, %c6_102, %c0_103] : memref<8x24x256xbf16, #tpu.memory_space<vmem>>, vector<8x1x256xbf16>
      %114 = vector.shape_cast %113 : vector<8x1x256xbf16> to vector<8x256xbf16>
      %115 = vector.shape_cast %112 : vector<8x256xbf16> to vector<8x1x256xbf16>
      tpu.vector_store %arg12[%c0_101, %c6_102, %c0_103], %115 {strides = array<i32>} : memref<8x24x256xbf16, #tpu.memory_space<vmem>>, vector<8x1x256xbf16>,
      %116 = vector.extract_strided_slice %58 {offsets = [0, 112], sizes = [8, 16], strides = [1, 1]} : vector<8x256xf32> to vector<8x16xf32>
      %117 = arith.truncf %116 : vector<8x16xf32> to vector<8x16xbf16>
      %cst_104 = arith.constant dense<0.000000e+00> : vector<8x256xf32>
      %118 = tpu.matmul %117, %66, %cst_104 {dimension_numbers = #tpu.dot_dimension_numbers<[1], [0], [0], [1], [0, 0, 1, 1], [], []>} : vector<8x16xbf16>, vector<16x256xbf16>, vector<8x256xf32> -> vector<8x256xf32>
      %119 = arith.truncf %118 : vector<8x256xf32> to vector<8x256xbf16>
      %c0_105 = arith.constant 0 : index
      %c7_106 = arith.constant 7 : index
      %c0_107 = arith.constant 0 : index
      %120 = vector.load %arg12[%c0_105, %c7_106, %c0_107] : memref<8x24x256xbf16, #tpu.memory_space<vmem>>, vector<8x1x256xbf16>
      %121 = vector.shape_cast %120 : vector<8x1x256xbf16> to vector<8x256xbf16>
      %122 = vector.shape_cast %119 : vector<8x256xbf16> to vector<8x1x256xbf16>
      tpu.vector_store %arg12[%c0_105, %c7_106, %c0_107], %122 {strides = array<i32>} : memref<8x24x256xbf16, #tpu.memory_space<vmem>>, vector<8x1x256xbf16>,
      %123 = vector.extract_strided_slice %58 {offsets = [0, 128], sizes = [8, 16], strides = [1, 1]} : vector<8x256xf32> to vector<8x16xf32>
      %124 = arith.truncf %123 : vector<8x16xf32> to vector<8x16xbf16>
      %cst_108 = arith.constant dense<0.000000e+00> : vector<8x256xf32>
      %125 = tpu.matmul %124, %66, %cst_108 {dimension_numbers = #tpu.dot_dimension_numbers<[1], [0], [0], [1], [0, 0, 1, 1], [], []>} : vector<8x16xbf16>, vector<16x256xbf16>, vector<8x256xf32> -> vector<8x256xf32>
      %126 = arith.truncf %125 : vector<8x256xf32> to vector<8x256xbf16>
      %c0_109 = arith.constant 0 : index
      %c8 = arith.constant 8 : index
      %c0_110 = arith.constant 0 : index
      %127 = vector.load %arg12[%c0_109, %c8, %c0_110] : memref<8x24x256xbf16, #tpu.memory_space<vmem>>, vector<8x1x256xbf16>
      %128 = vector.shape_cast %127 : vector<8x1x256xbf16> to vector<8x256xbf16>
      %129 = vector.shape_cast %126 : vector<8x256xbf16> to vector<8x1x256xbf16>
      tpu.vector_store %arg12[%c0_109, %c8, %c0_110], %129 {strides = array<i32>} : memref<8x24x256xbf16, #tpu.memory_space<vmem>>, vector<8x1x256xbf16>,
      %130 = vector.extract_strided_slice %58 {offsets = [0, 144], sizes = [8, 16], strides = [1, 1]} : vector<8x256xf32> to vector<8x16xf32>
      %131 = arith.truncf %130 : vector<8x16xf32> to vector<8x16xbf16>
      %cst_111 = arith.constant dense<0.000000e+00> : vector<8x256xf32>
      %132 = tpu.matmul %131, %66, %cst_111 {dimension_numbers = #tpu.dot_dimension_numbers<[1], [0], [0], [1], [0, 0, 1, 1], [], []>} : vector<8x16xbf16>, vector<16x256xbf16>, vector<8x256xf32> -> vector<8x256xf32>
      %133 = arith.truncf %132 : vector<8x256xf32> to vector<8x256xbf16>
      %c0_112 = arith.constant 0 : index
      %c9 = arith.constant 9 : index
      %c0_113 = arith.constant 0 : index
      %134 = vector.load %arg12[%c0_112, %c9, %c0_113] : memref<8x24x256xbf16, #tpu.memory_space<vmem>>, vector<8x1x256xbf16>
      %135 = vector.shape_cast %134 : vector<8x1x256xbf16> to vector<8x256xbf16>
      %136 = vector.shape_cast %133 : vector<8x256xbf16> to vector<8x1x256xbf16>
      tpu.vector_store %arg12[%c0_112, %c9, %c0_113], %136 {strides = array<i32>} : memref<8x24x256xbf16, #tpu.memory_space<vmem>>, vector<8x1x256xbf16>,
      %137 = vector.extract_strided_slice %58 {offsets = [0, 160], sizes = [8, 16], strides = [1, 1]} : vector<8x256xf32> to vector<8x16xf32>
      %138 = arith.truncf %137 : vector<8x16xf32> to vector<8x16xbf16>
      %cst_114 = arith.constant dense<0.000000e+00> : vector<8x256xf32>
      %139 = tpu.matmul %138, %66, %cst_114 {dimension_numbers = #tpu.dot_dimension_numbers<[1], [0], [0], [1], [0, 0, 1, 1], [], []>} : vector<8x16xbf16>, vector<16x256xbf16>, vector<8x256xf32> -> vector<8x256xf32>
      %140 = arith.truncf %139 : vector<8x256xf32> to vector<8x256xbf16>
      %c0_115 = arith.constant 0 : index
      %c10 = arith.constant 10 : index
      %c0_116 = arith.constant 0 : index
      %141 = vector.load %arg12[%c0_115, %c10, %c0_116] : memref<8x24x256xbf16, #tpu.memory_space<vmem>>, vector<8x1x256xbf16>
      %142 = vector.shape_cast %141 : vector<8x1x256xbf16> to vector<8x256xbf16>
      %143 = vector.shape_cast %140 : vector<8x256xbf16> to vector<8x1x256xbf16>
      tpu.vector_store %arg12[%c0_115, %c10, %c0_116], %143 {strides = array<i32>} : memref<8x24x256xbf16, #tpu.memory_space<vmem>>, vector<8x1x256xbf16>,
      %144 = vector.extract_strided_slice %58 {offsets = [0, 176], sizes = [8, 16], strides = [1, 1]} : vector<8x256xf32> to vector<8x16xf32>
      %145 = arith.truncf %144 : vector<8x16xf32> to vector<8x16xbf16>
      %cst_117 = arith.constant dense<0.000000e+00> : vector<8x256xf32>
      %146 = tpu.matmul %145, %66, %cst_117 {dimension_numbers = #tpu.dot_dimension_numbers<[1], [0], [0], [1], [0, 0, 1, 1], [], []>} : vector<8x16xbf16>, vector<16x256xbf16>, vector<8x256xf32> -> vector<8x256xf32>
      %147 = arith.truncf %146 : vector<8x256xf32> to vector<8x256xbf16>
      %c0_118 = arith.constant 0 : index
      %c11 = arith.constant 11 : index
      %c0_119 = arith.constant 0 : index
      %148 = vector.load %arg12[%c0_118, %c11, %c0_119] : memref<8x24x256xbf16, #tpu.memory_space<vmem>>, vector<8x1x256xbf16>
      %149 = vector.shape_cast %148 : vector<8x1x256xbf16> to vector<8x256xbf16>
      %150 = vector.shape_cast %147 : vector<8x256xbf16> to vector<8x1x256xbf16>
      tpu.vector_store %arg12[%c0_118, %c11, %c0_119], %150 {strides = array<i32>} : memref<8x24x256xbf16, #tpu.memory_space<vmem>>, vector<8x1x256xbf16>,
      %151 = vector.extract_strided_slice %58 {offsets = [0, 192], sizes = [8, 16], strides = [1, 1]} : vector<8x256xf32> to vector<8x16xf32>
      %152 = arith.truncf %151 : vector<8x16xf32> to vector<8x16xbf16>
      %cst_120 = arith.constant dense<0.000000e+00> : vector<8x256xf32>
      %153 = tpu.matmul %152, %66, %cst_120 {dimension_numbers = #tpu.dot_dimension_numbers<[1], [0], [0], [1], [0, 0, 1, 1], [], []>} : vector<8x16xbf16>, vector<16x256xbf16>, vector<8x256xf32> -> vector<8x256xf32>
      %154 = arith.truncf %153 : vector<8x256xf32> to vector<8x256xbf16>
      %c0_121 = arith.constant 0 : index
      %c12 = arith.constant 12 : index
      %c0_122 = arith.constant 0 : index
      %155 = vector.load %arg12[%c0_121, %c12, %c0_122] : memref<8x24x256xbf16, #tpu.memory_space<vmem>>, vector<8x1x256xbf16>
      %156 = vector.shape_cast %155 : vector<8x1x256xbf16> to vector<8x256xbf16>
      %157 = vector.shape_cast %154 : vector<8x256xbf16> to vector<8x1x256xbf16>
      tpu.vector_store %arg12[%c0_121, %c12, %c0_122], %157 {strides = array<i32>} : memref<8x24x256xbf16, #tpu.memory_space<vmem>>, vector<8x1x256xbf16>,
      %158 = vector.extract_strided_slice %58 {offsets = [0, 208], sizes = [8, 16], strides = [1, 1]} : vector<8x256xf32> to vector<8x16xf32>
      %159 = arith.truncf %158 : vector<8x16xf32> to vector<8x16xbf16>
      %cst_123 = arith.constant dense<0.000000e+00> : vector<8x256xf32>
      %160 = tpu.matmul %159, %66, %cst_123 {dimension_numbers = #tpu.dot_dimension_numbers<[1], [0], [0], [1], [0, 0, 1, 1], [], []>} : vector<8x16xbf16>, vector<16x256xbf16>, vector<8x256xf32> -> vector<8x256xf32>
      %161 = arith.truncf %160 : vector<8x256xf32> to vector<8x256xbf16>
      %c0_124 = arith.constant 0 : index
      %c13 = arith.constant 13 : index
      %c0_125 = arith.constant 0 : index
      %162 = vector.load %arg12[%c0_124, %c13, %c0_125] : memref<8x24x256xbf16, #tpu.memory_space<vmem>>, vector<8x1x256xbf16>
      %163 = vector.shape_cast %162 : vector<8x1x256xbf16> to vector<8x256xbf16>
      %164 = vector.shape_cast %161 : vector<8x256xbf16> to vector<8x1x256xbf16>
      tpu.vector_store %arg12[%c0_124, %c13, %c0_125], %164 {strides = array<i32>} : memref<8x24x256xbf16, #tpu.memory_space<vmem>>, vector<8x1x256xbf16>,
      %165 = vector.extract_strided_slice %58 {offsets = [0, 224], sizes = [8, 16], strides = [1, 1]} : vector<8x256xf32> to vector<8x16xf32>
      %166 = arith.truncf %165 : vector<8x16xf32> to vector<8x16xbf16>
      %cst_126 = arith.constant dense<0.000000e+00> : vector<8x256xf32>
      %167 = tpu.matmul %166, %66, %cst_126 {dimension_numbers = #tpu.dot_dimension_numbers<[1], [0], [0], [1], [0, 0, 1, 1], [], []>} : vector<8x16xbf16>, vector<16x256xbf16>, vector<8x256xf32> -> vector<8x256xf32>
      %168 = arith.truncf %167 : vector<8x256xf32> to vector<8x256xbf16>
      %c0_127 = arith.constant 0 : index
      %c14 = arith.constant 14 : index
      %c0_128 = arith.constant 0 : index
      %169 = vector.load %arg12[%c0_127, %c14, %c0_128] : memref<8x24x256xbf16, #tpu.memory_space<vmem>>, vector<8x1x256xbf16>
      %170 = vector.shape_cast %169 : vector<8x1x256xbf16> to vector<8x256xbf16>
      %171 = vector.shape_cast %168 : vector<8x256xbf16> to vector<8x1x256xbf16>
      tpu.vector_store %arg12[%c0_127, %c14, %c0_128], %171 {strides = array<i32>} : memref<8x24x256xbf16, #tpu.memory_space<vmem>>, vector<8x1x256xbf16>,
      %172 = vector.extract_strided_slice %58 {offsets = [0, 240], sizes = [8, 16], strides = [1, 1]} : vector<8x256xf32> to vector<8x16xf32>
      %173 = arith.truncf %172 : vector<8x16xf32> to vector<8x16xbf16>
      %cst_129 = arith.constant dense<0.000000e+00> : vector<8x256xf32>
      %174 = tpu.matmul %173, %66, %cst_129 {dimension_numbers = #tpu.dot_dimension_numbers<[1], [0], [0], [1], [0, 0, 1, 1], [], []>} : vector<8x16xbf16>, vector<16x256xbf16>, vector<8x256xf32> -> vector<8x256xf32>
      %175 = arith.truncf %174 : vector<8x256xf32> to vector<8x256xbf16>
      %c0_130 = arith.constant 0 : index
      %c15 = arith.constant 15 : index
      %c0_131 = arith.constant 0 : index
      %176 = vector.load %arg12[%c0_130, %c15, %c0_131] : memref<8x24x256xbf16, #tpu.memory_space<vmem>>, vector<8x1x256xbf16>
      %177 = vector.shape_cast %176 : vector<8x1x256xbf16> to vector<8x256xbf16>
      %178 = vector.shape_cast %175 : vector<8x256xbf16> to vector<8x1x256xbf16>
      tpu.vector_store %arg12[%c0_130, %c15, %c0_131], %178 {strides = array<i32>} : memref<8x24x256xbf16, #tpu.memory_space<vmem>>, vector<8x1x256xbf16>,
      %c0_132 = arith.constant 0 : index
      %c0_133 = arith.constant 0 : index
      %179 = vector.load %arg9[%c0_132, %c0_133] : memref<8x256xbf16, #tpu.memory_space<vmem>>, vector<8x256xbf16>
      %180 = vector.extract_strided_slice %65 {offsets = [0, 0], sizes = [8, 8], strides = [1, 1]} : vector<8x64xf32> to vector<8x8xf32>
      %181 = arith.truncf %180 : vector<8x8xf32> to vector<8x8xbf16>
      %cst_134 = arith.constant dense<0.000000e+00> : vector<8x256xf32>
      %182 = tpu.matmul %181, %179, %cst_134 {dimension_numbers = #tpu.dot_dimension_numbers<[1], [0], [0], [1], [0, 0, 1, 1], [], []>} : vector<8x8xbf16>, vector<8x256xbf16>, vector<8x256xf32> -> vector<8x256xf32>
      %183 = arith.truncf %182 : vector<8x256xf32> to vector<8x256xbf16>
      %c0_135 = arith.constant 0 : index
      %c16 = arith.constant 16 : index
      %c0_136 = arith.constant 0 : index
      %184 = vector.load %arg12[%c0_135, %c16, %c0_136] : memref<8x24x256xbf16, #tpu.memory_space<vmem>>, vector<8x1x256xbf16>
      %185 = vector.shape_cast %184 : vector<8x1x256xbf16> to vector<8x256xbf16>
      %186 = vector.shape_cast %183 : vector<8x256xbf16> to vector<8x1x256xbf16>
      tpu.vector_store %arg12[%c0_135, %c16, %c0_136], %186 {strides = array<i32>} : memref<8x24x256xbf16, #tpu.memory_space<vmem>>, vector<8x1x256xbf16>,
      %187 = vector.extract_strided_slice %65 {offsets = [0, 8], sizes = [8, 8], strides = [1, 1]} : vector<8x64xf32> to vector<8x8xf32>
      %188 = arith.truncf %187 : vector<8x8xf32> to vector<8x8xbf16>
      %cst_137 = arith.constant dense<0.000000e+00> : vector<8x256xf32>
      %189 = tpu.matmul %188, %179, %cst_137 {dimension_numbers = #tpu.dot_dimension_numbers<[1], [0], [0], [1], [0, 0, 1, 1], [], []>} : vector<8x8xbf16>, vector<8x256xbf16>, vector<8x256xf32> -> vector<8x256xf32>
      %190 = arith.truncf %189 : vector<8x256xf32> to vector<8x256xbf16>
      %c0_138 = arith.constant 0 : index
      %c17 = arith.constant 17 : index
      %c0_139 = arith.constant 0 : index
      %191 = vector.load %arg12[%c0_138, %c17, %c0_139] : memref<8x24x256xbf16, #tpu.memory_space<vmem>>, vector<8x1x256xbf16>
      %192 = vector.shape_cast %191 : vector<8x1x256xbf16> to vector<8x256xbf16>
      %193 = vector.shape_cast %190 : vector<8x256xbf16> to vector<8x1x256xbf16>
      tpu.vector_store %arg12[%c0_138, %c17, %c0_139], %193 {strides = array<i32>} : memref<8x24x256xbf16, #tpu.memory_space<vmem>>, vector<8x1x256xbf16>,
      %194 = vector.extract_strided_slice %65 {offsets = [0, 16], sizes = [8, 8], strides = [1, 1]} : vector<8x64xf32> to vector<8x8xf32>
      %195 = arith.truncf %194 : vector<8x8xf32> to vector<8x8xbf16>
      %cst_140 = arith.constant dense<0.000000e+00> : vector<8x256xf32>
      %196 = tpu.matmul %195, %179, %cst_140 {dimension_numbers = #tpu.dot_dimension_numbers<[1], [0], [0], [1], [0, 0, 1, 1], [], []>} : vector<8x8xbf16>, vector<8x256xbf16>, vector<8x256xf32> -> vector<8x256xf32>
      %197 = arith.truncf %196 : vector<8x256xf32> to vector<8x256xbf16>
      %c0_141 = arith.constant 0 : index
      %c18 = arith.constant 18 : index
      %c0_142 = arith.constant 0 : index
      %198 = vector.load %arg12[%c0_141, %c18, %c0_142] : memref<8x24x256xbf16, #tpu.memory_space<vmem>>, vector<8x1x256xbf16>
      %199 = vector.shape_cast %198 : vector<8x1x256xbf16> to vector<8x256xbf16>
      %200 = vector.shape_cast %197 : vector<8x256xbf16> to vector<8x1x256xbf16>
      tpu.vector_store %arg12[%c0_141, %c18, %c0_142], %200 {strides = array<i32>} : memref<8x24x256xbf16, #tpu.memory_space<vmem>>, vector<8x1x256xbf16>,
      %201 = vector.extract_strided_slice %65 {offsets = [0, 24], sizes = [8, 8], strides = [1, 1]} : vector<8x64xf32> to vector<8x8xf32>
      %202 = arith.truncf %201 : vector<8x8xf32> to vector<8x8xbf16>
      %cst_143 = arith.constant dense<0.000000e+00> : vector<8x256xf32>
      %203 = tpu.matmul %202, %179, %cst_143 {dimension_numbers = #tpu.dot_dimension_numbers<[1], [0], [0], [1], [0, 0, 1, 1], [], []>} : vector<8x8xbf16>, vector<8x256xbf16>, vector<8x256xf32> -> vector<8x256xf32>
      %204 = arith.truncf %203 : vector<8x256xf32> to vector<8x256xbf16>
      %c0_144 = arith.constant 0 : index
      %c19 = arith.constant 19 : index
      %c0_145 = arith.constant 0 : index
      %205 = vector.load %arg12[%c0_144, %c19, %c0_145] : memref<8x24x256xbf16, #tpu.memory_space<vmem>>, vector<8x1x256xbf16>
      %206 = vector.shape_cast %205 : vector<8x1x256xbf16> to vector<8x256xbf16>
      %207 = vector.shape_cast %204 : vector<8x256xbf16> to vector<8x1x256xbf16>
      tpu.vector_store %arg12[%c0_144, %c19, %c0_145], %207 {strides = array<i32>} : memref<8x24x256xbf16, #tpu.memory_space<vmem>>, vector<8x1x256xbf16>,
      %208 = vector.extract_strided_slice %65 {offsets = [0, 32], sizes = [8, 8], strides = [1, 1]} : vector<8x64xf32> to vector<8x8xf32>
      %209 = arith.truncf %208 : vector<8x8xf32> to vector<8x8xbf16>
      %cst_146 = arith.constant dense<0.000000e+00> : vector<8x256xf32>
      %210 = tpu.matmul %209, %179, %cst_146 {dimension_numbers = #tpu.dot_dimension_numbers<[1], [0], [0], [1], [0, 0, 1, 1], [], []>} : vector<8x8xbf16>, vector<8x256xbf16>, vector<8x256xf32> -> vector<8x256xf32>
      %211 = arith.truncf %210 : vector<8x256xf32> to vector<8x256xbf16>
      %c0_147 = arith.constant 0 : index
      %c20 = arith.constant 20 : index
      %c0_148 = arith.constant 0 : index
      %212 = vector.load %arg12[%c0_147, %c20, %c0_148] : memref<8x24x256xbf16, #tpu.memory_space<vmem>>, vector<8x1x256xbf16>
      %213 = vector.shape_cast %212 : vector<8x1x256xbf16> to vector<8x256xbf16>
      %214 = vector.shape_cast %211 : vector<8x256xbf16> to vector<8x1x256xbf16>
      tpu.vector_store %arg12[%c0_147, %c20, %c0_148], %214 {strides = array<i32>} : memref<8x24x256xbf16, #tpu.memory_space<vmem>>, vector<8x1x256xbf16>,
      %215 = vector.extract_strided_slice %65 {offsets = [0, 40], sizes = [8, 8], strides = [1, 1]} : vector<8x64xf32> to vector<8x8xf32>
      %216 = arith.truncf %215 : vector<8x8xf32> to vector<8x8xbf16>
      %cst_149 = arith.constant dense<0.000000e+00> : vector<8x256xf32>
      %217 = tpu.matmul %216, %179, %cst_149 {dimension_numbers = #tpu.dot_dimension_numbers<[1], [0], [0], [1], [0, 0, 1, 1], [], []>} : vector<8x8xbf16>, vector<8x256xbf16>, vector<8x256xf32> -> vector<8x256xf32>
      %218 = arith.truncf %217 : vector<8x256xf32> to vector<8x256xbf16>
      %c0_150 = arith.constant 0 : index
      %c21 = arith.constant 21 : index
      %c0_151 = arith.constant 0 : index
      %219 = vector.load %arg12[%c0_150, %c21, %c0_151] : memref<8x24x256xbf16, #tpu.memory_space<vmem>>, vector<8x1x256xbf16>
      %220 = vector.shape_cast %219 : vector<8x1x256xbf16> to vector<8x256xbf16>
      %221 = vector.shape_cast %218 : vector<8x256xbf16> to vector<8x1x256xbf16>
      tpu.vector_store %arg12[%c0_150, %c21, %c0_151], %221 {strides = array<i32>} : memref<8x24x256xbf16, #tpu.memory_space<vmem>>, vector<8x1x256xbf16>,
      %222 = vector.extract_strided_slice %65 {offsets = [0, 48], sizes = [8, 8], strides = [1, 1]} : vector<8x64xf32> to vector<8x8xf32>
      %223 = arith.truncf %222 : vector<8x8xf32> to vector<8x8xbf16>
      %cst_152 = arith.constant dense<0.000000e+00> : vector<8x256xf32>
      %224 = tpu.matmul %223, %179, %cst_152 {dimension_numbers = #tpu.dot_dimension_numbers<[1], [0], [0], [1], [0, 0, 1, 1], [], []>} : vector<8x8xbf16>, vector<8x256xbf16>, vector<8x256xf32> -> vector<8x256xf32>
      %225 = arith.truncf %224 : vector<8x256xf32> to vector<8x256xbf16>
      %c0_153 = arith.constant 0 : index
      %c22 = arith.constant 22 : index
      %c0_154 = arith.constant 0 : index
      %226 = vector.load %arg12[%c0_153, %c22, %c0_154] : memref<8x24x256xbf16, #tpu.memory_space<vmem>>, vector<8x1x256xbf16>
      %227 = vector.shape_cast %226 : vector<8x1x256xbf16> to vector<8x256xbf16>
      %228 = vector.shape_cast %225 : vector<8x256xbf16> to vector<8x1x256xbf16>
      tpu.vector_store %arg12[%c0_153, %c22, %c0_154], %228 {strides = array<i32>} : memref<8x24x256xbf16, #tpu.memory_space<vmem>>, vector<8x1x256xbf16>,
      %229 = vector.extract_strided_slice %65 {offsets = [0, 56], sizes = [8, 8], strides = [1, 1]} : vector<8x64xf32> to vector<8x8xf32>
      %230 = arith.truncf %229 : vector<8x8xf32> to vector<8x8xbf16>
      %cst_155 = arith.constant dense<0.000000e+00> : vector<8x256xf32>
      %231 = tpu.matmul %230, %179, %cst_155 {dimension_numbers = #tpu.dot_dimension_numbers<[1], [0], [0], [1], [0, 0, 1, 1], [], []>} : vector<8x8xbf16>, vector<8x256xbf16>, vector<8x256xf32> -> vector<8x256xf32>
      %232 = arith.truncf %231 : vector<8x256xf32> to vector<8x256xbf16>
      %c0_156 = arith.constant 0 : index
      %c23 = arith.constant 23 : index
      %c0_157 = arith.constant 0 : index
      %233 = vector.load %arg12[%c0_156, %c23, %c0_157] : memref<8x24x256xbf16, #tpu.memory_space<vmem>>, vector<8x1x256xbf16>
      %234 = vector.shape_cast %233 : vector<8x1x256xbf16> to vector<8x256xbf16>
      %235 = vector.shape_cast %232 : vector<8x256xbf16> to vector<8x1x256xbf16>
      tpu.vector_store %arg12[%c0_156, %c23, %c0_157], %235 {strides = array<i32>} : memref<8x24x256xbf16, #tpu.memory_space<vmem>>, vector<8x1x256xbf16>,
    } else {
    }
    %c0 = arith.constant 0 : index
    %c0_1 = arith.constant 0 : index
    %3 = vector.load %arg10[%c0, %c0_1] : memref<128x24xbf16, #tpu.memory_space<vmem>>, vector<128x24xbf16>
    %c0_2 = arith.constant 0 : index
    %c0_3 = arith.constant 0 : index
    %c0_4 = arith.constant 0 : index
    %4 = vector.load %arg12[%c0_2, %c0_3, %c0_4] : memref<8x24x256xbf16, #tpu.memory_space<vmem>>, vector<1x24x256xbf16>
    %5 = vector.shape_cast %4 : vector<1x24x256xbf16> to vector<24x256xbf16>
    %cst = arith.constant dense<0.000000e+00> : vector<128x256xf32>
    %6 = tpu.matmul %3, %5, %cst {dimension_numbers = #tpu.dot_dimension_numbers<[1], [0], [0], [1], [0, 0, 1, 1], [], []>} : vector<128x24xbf16>, vector<24x256xbf16>, vector<128x256xf32> -> vector<128x256xf32>
    %c0_5 = arith.constant 0 : index
    %c0_6 = arith.constant 0 : index
    %c0_7 = arith.constant 0 : index
    %c0_8 = arith.constant 0 : index
    %7 = vector.load %arg11[%c0_5, %c0_6, %c0_7, %c0_8] : memref<1x8x128x256xf32, #tpu.memory_space<vmem>>, vector<1x1x128x256xf32>
    %8 = vector.shape_cast %7 : vector<1x1x128x256xf32> to vector<128x256xf32>
    %9 = vector.shape_cast %6 : vector<128x256xf32> to vector<1x1x128x256xf32>
    tpu.vector_store %arg11[%c0_5, %c0_6, %c0_7, %c0_8], %9 {strides = array<i32>} : memref<1x8x128x256xf32, #tpu.memory_space<vmem>>, vector<1x1x128x256xf32>,
    %c1 = arith.constant 1 : index
    %c0_9 = arith.constant 0 : index
    %c0_10 = arith.constant 0 : index
    %10 = vector.load %arg12[%c1, %c0_9, %c0_10] : memref<8x24x256xbf16, #tpu.memory_space<vmem>>, vector<1x24x256xbf16>
    %11 = vector.shape_cast %10 : vector<1x24x256xbf16> to vector<24x256xbf16>
    %cst_11 = arith.constant dense<0.000000e+00> : vector<128x256xf32>
    %12 = tpu.matmul %3, %11, %cst_11 {dimension_numbers = #tpu.dot_dimension_numbers<[1], [0], [0], [1], [0, 0, 1, 1], [], []>} : vector<128x24xbf16>, vector<24x256xbf16>, vector<128x256xf32> -> vector<128x256xf32>
    %c0_12 = arith.constant 0 : index
    %c1_13 = arith.constant 1 : index
    %c0_14 = arith.constant 0 : index
    %c0_15 = arith.constant 0 : index
    %13 = vector.load %arg11[%c0_12, %c1_13, %c0_14, %c0_15] : memref<1x8x128x256xf32, #tpu.memory_space<vmem>>, vector<1x1x128x256xf32>
    %14 = vector.shape_cast %13 : vector<1x1x128x256xf32> to vector<128x256xf32>
    %15 = vector.shape_cast %12 : vector<128x256xf32> to vector<1x1x128x256xf32>
    tpu.vector_store %arg11[%c0_12, %c1_13, %c0_14, %c0_15], %15 {strides = array<i32>} : memref<1x8x128x256xf32, #tpu.memory_space<vmem>>, vector<1x1x128x256xf32>,
    %c2 = arith.constant 2 : index
    %c0_16 = arith.constant 0 : index
    %c0_17 = arith.constant 0 : index
    %16 = vector.load %arg12[%c2, %c0_16, %c0_17] : memref<8x24x256xbf16, #tpu.memory_space<vmem>>, vector<1x24x256xbf16>
    %17 = vector.shape_cast %16 : vector<1x24x256xbf16> to vector<24x256xbf16>
    %cst_18 = arith.constant dense<0.000000e+00> : vector<128x256xf32>
    %18 = tpu.matmul %3, %17, %cst_18 {dimension_numbers = #tpu.dot_dimension_numbers<[1], [0], [0], [1], [0, 0, 1, 1], [], []>} : vector<128x24xbf16>, vector<24x256xbf16>, vector<128x256xf32> -> vector<128x256xf32>
    %c0_19 = arith.constant 0 : index
    %c2_20 = arith.constant 2 : index
    %c0_21 = arith.constant 0 : index
    %c0_22 = arith.constant 0 : index
    %19 = vector.load %arg11[%c0_19, %c2_20, %c0_21, %c0_22] : memref<1x8x128x256xf32, #tpu.memory_space<vmem>>, vector<1x1x128x256xf32>
    %20 = vector.shape_cast %19 : vector<1x1x128x256xf32> to vector<128x256xf32>
    %21 = vector.shape_cast %18 : vector<128x256xf32> to vector<1x1x128x256xf32>
    tpu.vector_store %arg11[%c0_19, %c2_20, %c0_21, %c0_22], %21 {strides = array<i32>} : memref<1x8x128x256xf32, #tpu.memory_space<vmem>>, vector<1x1x128x256xf32>,
    %c3 = arith.constant 3 : index
    %c0_23 = arith.constant 0 : index
    %c0_24 = arith.constant 0 : index
    %22 = vector.load %arg12[%c3, %c0_23, %c0_24] : memref<8x24x256xbf16, #tpu.memory_space<vmem>>, vector<1x24x256xbf16>
    %23 = vector.shape_cast %22 : vector<1x24x256xbf16> to vector<24x256xbf16>
    %cst_25 = arith.constant dense<0.000000e+00> : vector<128x256xf32>
    %24 = tpu.matmul %3, %23, %cst_25 {dimension_numbers = #tpu.dot_dimension_numbers<[1], [0], [0], [1], [0, 0, 1, 1], [], []>} : vector<128x24xbf16>, vector<24x256xbf16>, vector<128x256xf32> -> vector<128x256xf32>
    %c0_26 = arith.constant 0 : index
    %c3_27 = arith.constant 3 : index
    %c0_28 = arith.constant 0 : index
    %c0_29 = arith.constant 0 : index
    %25 = vector.load %arg11[%c0_26, %c3_27, %c0_28, %c0_29] : memref<1x8x128x256xf32, #tpu.memory_space<vmem>>, vector<1x1x128x256xf32>
    %26 = vector.shape_cast %25 : vector<1x1x128x256xf32> to vector<128x256xf32>
    %27 = vector.shape_cast %24 : vector<128x256xf32> to vector<1x1x128x256xf32>
    tpu.vector_store %arg11[%c0_26, %c3_27, %c0_28, %c0_29], %27 {strides = array<i32>} : memref<1x8x128x256xf32, #tpu.memory_space<vmem>>, vector<1x1x128x256xf32>,
    %c4 = arith.constant 4 : index
    %c0_30 = arith.constant 0 : index
    %c0_31 = arith.constant 0 : index
    %28 = vector.load %arg12[%c4, %c0_30, %c0_31] : memref<8x24x256xbf16, #tpu.memory_space<vmem>>, vector<1x24x256xbf16>
    %29 = vector.shape_cast %28 : vector<1x24x256xbf16> to vector<24x256xbf16>
    %cst_32 = arith.constant dense<0.000000e+00> : vector<128x256xf32>
    %30 = tpu.matmul %3, %29, %cst_32 {dimension_numbers = #tpu.dot_dimension_numbers<[1], [0], [0], [1], [0, 0, 1, 1], [], []>} : vector<128x24xbf16>, vector<24x256xbf16>, vector<128x256xf32> -> vector<128x256xf32>
    %c0_33 = arith.constant 0 : index
    %c4_34 = arith.constant 4 : index
    %c0_35 = arith.constant 0 : index
    %c0_36 = arith.constant 0 : index
    %31 = vector.load %arg11[%c0_33, %c4_34, %c0_35, %c0_36] : memref<1x8x128x256xf32, #tpu.memory_space<vmem>>, vector<1x1x128x256xf32>
    %32 = vector.shape_cast %31 : vector<1x1x128x256xf32> to vector<128x256xf32>
    %33 = vector.shape_cast %30 : vector<128x256xf32> to vector<1x1x128x256xf32>
    tpu.vector_store %arg11[%c0_33, %c4_34, %c0_35, %c0_36], %33 {strides = array<i32>} : memref<1x8x128x256xf32, #tpu.memory_space<vmem>>, vector<1x1x128x256xf32>,
    %c5 = arith.constant 5 : index
    %c0_37 = arith.constant 0 : index
    %c0_38 = arith.constant 0 : index
    %34 = vector.load %arg12[%c5, %c0_37, %c0_38] : memref<8x24x256xbf16, #tpu.memory_space<vmem>>, vector<1x24x256xbf16>
    %35 = vector.shape_cast %34 : vector<1x24x256xbf16> to vector<24x256xbf16>
    %cst_39 = arith.constant dense<0.000000e+00> : vector<128x256xf32>
    %36 = tpu.matmul %3, %35, %cst_39 {dimension_numbers = #tpu.dot_dimension_numbers<[1], [0], [0], [1], [0, 0, 1, 1], [], []>} : vector<128x24xbf16>, vector<24x256xbf16>, vector<128x256xf32> -> vector<128x256xf32>
    %c0_40 = arith.constant 0 : index
    %c5_41 = arith.constant 5 : index
    %c0_42 = arith.constant 0 : index
    %c0_43 = arith.constant 0 : index
    %37 = vector.load %arg11[%c0_40, %c5_41, %c0_42, %c0_43] : memref<1x8x128x256xf32, #tpu.memory_space<vmem>>, vector<1x1x128x256xf32>
    %38 = vector.shape_cast %37 : vector<1x1x128x256xf32> to vector<128x256xf32>
    %39 = vector.shape_cast %36 : vector<128x256xf32> to vector<1x1x128x256xf32>
    tpu.vector_store %arg11[%c0_40, %c5_41, %c0_42, %c0_43], %39 {strides = array<i32>} : memref<1x8x128x256xf32, #tpu.memory_space<vmem>>, vector<1x1x128x256xf32>,
    %c6 = arith.constant 6 : index
    %c0_44 = arith.constant 0 : index
    %c0_45 = arith.constant 0 : index
    %40 = vector.load %arg12[%c6, %c0_44, %c0_45] : memref<8x24x256xbf16, #tpu.memory_space<vmem>>, vector<1x24x256xbf16>
    %41 = vector.shape_cast %40 : vector<1x24x256xbf16> to vector<24x256xbf16>
    %cst_46 = arith.constant dense<0.000000e+00> : vector<128x256xf32>
    %42 = tpu.matmul %3, %41, %cst_46 {dimension_numbers = #tpu.dot_dimension_numbers<[1], [0], [0], [1], [0, 0, 1, 1], [], []>} : vector<128x24xbf16>, vector<24x256xbf16>, vector<128x256xf32> -> vector<128x256xf32>
    %c0_47 = arith.constant 0 : index
    %c6_48 = arith.constant 6 : index
    %c0_49 = arith.constant 0 : index
    %c0_50 = arith.constant 0 : index
    %43 = vector.load %arg11[%c0_47, %c6_48, %c0_49, %c0_50] : memref<1x8x128x256xf32, #tpu.memory_space<vmem>>, vector<1x1x128x256xf32>
    %44 = vector.shape_cast %43 : vector<1x1x128x256xf32> to vector<128x256xf32>
    %45 = vector.shape_cast %42 : vector<128x256xf32> to vector<1x1x128x256xf32>
    tpu.vector_store %arg11[%c0_47, %c6_48, %c0_49, %c0_50], %45 {strides = array<i32>} : memref<1x8x128x256xf32, #tpu.memory_space<vmem>>, vector<1x1x128x256xf32>,
    %c7 = arith.constant 7 : index
    %c0_51 = arith.constant 0 : index
    %c0_52 = arith.constant 0 : index
    %46 = vector.load %arg12[%c7, %c0_51, %c0_52] : memref<8x24x256xbf16, #tpu.memory_space<vmem>>, vector<1x24x256xbf16>
    %47 = vector.shape_cast %46 : vector<1x24x256xbf16> to vector<24x256xbf16>
    %cst_53 = arith.constant dense<0.000000e+00> : vector<128x256xf32>
    %48 = tpu.matmul %3, %47, %cst_53 {dimension_numbers = #tpu.dot_dimension_numbers<[1], [0], [0], [1], [0, 0, 1, 1], [], []>} : vector<128x24xbf16>, vector<24x256xbf16>, vector<128x256xf32> -> vector<128x256xf32>
    %c0_54 = arith.constant 0 : index
    %c7_55 = arith.constant 7 : index
    %c0_56 = arith.constant 0 : index
    %c0_57 = arith.constant 0 : index
    %49 = vector.load %arg11[%c0_54, %c7_55, %c0_56, %c0_57] : memref<1x8x128x256xf32, #tpu.memory_space<vmem>>, vector<1x1x128x256xf32>
    %50 = vector.shape_cast %49 : vector<1x1x128x256xf32> to vector<128x256xf32>
    %51 = vector.shape_cast %48 : vector<128x256xf32> to vector<1x1x128x256xf32>
    tpu.vector_store %arg11[%c0_54, %c7_55, %c0_56, %c0_57], %51 {strides = array<i32>} : memref<1x8x128x256xf32, #tpu.memory_space<vmem>>, vector<1x1x128x256xf32>,
    return
  }
  func.func @transform_0(%arg0: i32, %arg1: i32) -> (i32, i32, i32) {
    %c0_i32 = arith.constant 0 : i32
    %c0_i32_0 = arith.constant 0 : i32
    %c0_i32_1 = arith.constant 0 : i32
    return %arg0, %c0_i32, %c0_i32_0 : i32, i32, i32
  }
  func.func @transform_1(%arg0: i32, %arg1: i32) -> (i32, i32, i32) {
    %c0_i32 = arith.constant 0 : i32
    %c0_i32_0 = arith.constant 0 : i32
    %c0_i32_1 = arith.constant 0 : i32
    return %arg0, %c0_i32, %c0_i32_0 : i32, i32, i32
  }
  func.func @transform_2(%arg0: i32, %arg1: i32) -> (i32, i32) {
    %c0_i32 = arith.constant 0 : i32
    %c0_i32_0 = arith.constant 0 : i32
    %c0_i32_1 = arith.constant 0 : i32
    return %c0_i32, %c0_i32_0 : i32, i32
  }
  func.func @transform_3(%arg0: i32, %arg1: i32) -> (i32, i32) {
    %c0_i32 = arith.constant 0 : i32
    %c0_i32_0 = arith.constant 0 : i32
    %c0_i32_1 = arith.constant 0 : i32
    return %c0_i32, %c0_i32_0 : i32, i32
  }
  func.func @transform_4(%arg0: i32, %arg1: i32) -> (i32, i32) {
    %c0_i32 = arith.constant 0 : i32
    %c0_i32_0 = arith.constant 0 : i32
    %c0_i32_1 = arith.constant 0 : i32
    return %c0_i32, %c0_i32_0 : i32, i32
  }
  func.func @transform_5(%arg0: i32, %arg1: i32) -> (i32, i32) {
    %c0_i32 = arith.constant 0 : i32
    %c0_i32_0 = arith.constant 0 : i32
    %c0_i32_1 = arith.constant 0 : i32
    return %c0_i32, %c0_i32_0 : i32, i32
  }
  func.func @transform_6(%arg0: i32, %arg1: i32) -> (i32, i32) {
    %c0_i32 = arith.constant 0 : i32
    %c0_i32_0 = arith.constant 0 : i32
    %c0_i32_1 = arith.constant 0 : i32
    return %c0_i32, %c0_i32_0 : i32, i32
  }
  func.func @transform_7(%arg0: i32, %arg1: i32) -> (i32, i32) {
    %c0_i32 = arith.constant 0 : i32
    %c0_i32_0 = arith.constant 0 : i32
    %c0_i32_1 = arith.constant 0 : i32
    return %c0_i32, %c0_i32_0 : i32, i32
  }
  func.func @transform_8(%arg0: i32, %arg1: i32) -> (i32, i32) {
    %c0_i32 = arith.constant 0 : i32
    %c0_i32_0 = arith.constant 0 : i32
    return %arg1, %c0_i32 : i32, i32
  }
  func.func @transform_9(%arg0: i32, %arg1: i32) -> (i32, i32, i32, i32) {
    %c0_i32 = arith.constant 0 : i32
    %c0_i32_0 = arith.constant 0 : i32
    %c0_i32_1 = arith.constant 0 : i32
    return %arg0, %c0_i32, %arg1, %c0_i32_0 : i32, i32, i32, i32
  }
}

</mosaic_0001>

<llo_original>
// kernel: tpu_custom_call.1
$region0: #{tpu_custom_call.1}
  #allocation0 [shape = 'u32[]', space=smem, size = 0x4, offset = 0x4, fixed_abs, tag = 'smem constant byte address 0x4 - core index']
  #allocation1 [shape = 'u32[72,128]{1,0:T(1,128)}', space=vmem, size = 0x9000, scoped, tag = 'internal scratch']
  #allocation2 [shape = 'bf16[8,24,256]{2,1,0:T(8,128)(2,1)}', space=vmem, size = 0x18000, scoped, tag = 'scratch operand']
  #allocation13 [shape = 's32[]', space=sflag, size = 0x4, offset = 0, fixed_abs, tag = 'sflag constant byte address 0x0 - dummy sync flag']
  %s0 = inlined_call_operand.hbm [shape: bf16[2,256,256], index: 0, kind: input, shape index: {}]
  %s1 = inlined_call_operand.vmem [shape: bf16[2,512,64], index: 1, kind: input, shape index: {}]
  %s2 = inlined_call_operand.hbm [shape: bf16[8,256], index: 2, kind: input, shape index: {}]
  %s3 = inlined_call_operand.vmem [shape: f32[8,1], index: 3, kind: input, shape index: {}]
  %s4 = inlined_call_operand.hbm [shape: bf16[8,512], index: 4, kind: input, shape index: {}]
  %s5 = inlined_call_operand.vmem [shape: f32[8,1], index: 5, kind: input, shape index: {}]
  %s6 = inlined_call_operand.hbm [shape: bf16[16,256], index: 6, kind: input, shape index: {}]
  %s7 = inlined_call_operand.hbm [shape: bf16[8,256], index: 7, kind: input, shape index: {}]
  %s8 = inlined_call_operand.vmem [shape: bf16[256,24], index: 8, kind: input, shape index: {}]
  %s9 = inlined_call_operand.hbm [shape: f32[2,8,256,256], index: 9, kind: output, shape index: {}]
  %s10 = sld [smem:[#allocation0]]
  $region93: #{tpu_custom_call.1} parent=0
    _
  %s12 = ssub.s32 1, %s10
  %s13 = scalar_select 0, %s12, %s10
  $region1: #{tpu_custom_call.1} parent=0
    #allocation3 [shape = 'u8[262144]{0}', space=vmem, size = 0x40000, scoped, tag = 'input window, operand 0']
    #allocation4 [shape = 's32[2]{0}', space=sflag, size = 0x8, scoped, tag = 'scoped memory for tpu_custom_call.1']
    #allocation5 [shape = 's32[2]{0}', space=sflag, size = 0x8, scoped, tag = 'scoped memory for tpu_custom_call.1']
    #allocation6 [shape = 'u8[4096]{0}', space=vmem, size = 0x1000, scoped, tag = 'input window, operand 2, single buffered']
    #allocation7 [shape = 's32[1]{0}', space=sflag, size = 0x4, scoped, tag = 'scoped memory for tpu_custom_call.1']
    #allocation8 [shape = 'u8[8192]{0}', space=vmem, size = 0x2000, scoped, tag = 'input window, operand 4, single buffered']
    #allocation9 [shape = 'u8[8192]{0}', space=vmem, size = 0x2000, scoped, tag = 'input window, operand 6, single buffered']
    #allocation10 [shape = 's32[1]{0}', space=sflag, size = 0x4, scoped, tag = 'scoped memory for tpu_custom_call.1']
    #allocation11 [shape = 'u8[4096]{0}', space=vmem, size = 0x1000, scoped, tag = 'input window, operand 7, single buffered']
    #allocation12 [shape = 'u8[2097152]{0}', space=vmem, size = 0x200000, scoped, tag = 'output window, operand 0']
    %14 = vsyncpa [#allocation4], 0
    %s15 = scalar_lea.sflag [#allocation4], 1
    %16 = vsyncpa %s15, 0
    %17 = vsyncpa [#allocation7], 0
    %18 = vsyncpa [#allocation10], 0
    %19 = vsyncpa [#allocation5], 0
    %s20 = scalar_lea.sflag [#allocation5], 1
    %21 = vsyncpa %s20, 0
    loop: start=0, step=1, limit=6
    $region2: #{tpu_custom_call.1} parent=1 // loop_pre_header
      _
    $region3: #{tpu_custom_call.1} parent=1 // loop_header
      %s23 = sphi 0, %s27
      %p24 = scmp.ge.s32.totalorder %s23, 6
      %s30 = sphi 0, %s42
      %s31 = sphi 0, %s38
      %s32 = sphi 0, %s30
      %s33 = sphi 0, %s31
      %s34 = sphi 0, %s32
      %s35 = sphi 0, %s33
      %s45 = sphi 0, %s47
      %s48 = sphi 0, %s45
      %s49 = sphi 0, %s48
      %s65 = sphi 0, %s49
      %s71 = sphi 0, %s73
      %s74 = sphi 0, %s71
      %s75 = sphi 0, %s74
      %s91 = sphi 0, %s75
      %s95 = sphi 0, %s95
      %s97 = sphi 0, %s95
      %s98 = sphi 0, %s97
      %s112 = sphi 0, %s98
      %s116 = sphi 0, %s116
      %s118 = sphi 0, %s116
      %s119 = sphi 0, %s118
      %s133 = sphi 0, %s119
      %s137 = sphi 0, %s137
      %s139 = sphi 0, %s137
      %s140 = sphi 0, %s139
      %s154 = sphi 0, %s140
      %s158 = sphi 0, %s158
      %s160 = sphi 0, %s158
      %s161 = sphi 0, %s160
      %s175 = sphi 0, %s161
      %s179 = sphi 0, %s179
      %s181 = sphi 0, %s179
      %s182 = sphi 0, %s181
      %s196 = sphi 0, %s182
      %s200 = sphi 0, %s200
      %s202 = sphi 0, %s200
      %s203 = sphi 0, %s202
      %s217 = sphi 0, %s203
      %s223 = sphi 0, %s225
      %s226 = sphi 0, %s223
      %s227 = sphi 0, %s226
      %s243 = sphi 0, %s227
      %s251 = sphi 0, %s253
      %s254 = sphi 0, %s251
      %s255 = sphi 0, %s254
      %s271 = sphi 0, %s255
    $region4: #{tpu_custom_call.1} parent=1 // loop_header_branch
      %26 = sbr.rel (%p24) target = $region8
    $region5: #{tpu_custom_call.1} parent=1 // loop_body
      %s28 = ssub.s32 %s23, 1
      %s29 = ssub.s32 %s23, 2
      %s36 = sadd.s32 1, %s31
      %p37 = scmp.ge.s32.totalorder %s36, 2
      %s38 = scalar_select %p37, 0, %s36
      %s39 = sadd.s32 1, %s30
      %s40 = scalar_select %p37, %s39, %s30
      %p41 = scmp.ge.s32.totalorder %s40, 2
      %s42 = scalar_select %p41, 0, %s40
      %s43 = ssub.s32 %s30, %s42
      %p44 = scmp.eq.s32.totalorder %s43, 0
      %s46 = sadd.s32 %s45, 1
      %s47 = scalar_select %p44, %s45, %s46
      %p50 = pneg %p44
      %p51 = scmp.eq.s32.totalorder %s23, 3
      %p52 = por %p50, %p51
      %p53 = scmp.ne.s32.totalorder %s45, %s48
      %p54 = scmp.eq.s32.totalorder %s23, 0
      %p55 = por %p53, %p54
      %p56 = scmp.ne.s32.totalorder %s45, %s48
      %p57 = scmp.eq.s32.totalorder %s28, 3
      %p58 = por %p56, %p57
      %p59 = scmp.ne.s32.totalorder %s48, %s49
      %p60 = scmp.eq.s32.totalorder %s28, 0
      %p61 = por %p59, %p60
      %p62 = scmp.ne.s32.totalorder %s48, %s49
      %p63 = scmp.eq.s32.totalorder %s29, 3
      %p64 = por %p62, %p63
      %p66 = scmp.ne.s32.totalorder %s49, %s65
      %p67 = scmp.eq.s32.totalorder %s29, 0
      %p68 = por %p66, %p67
      %s69 = ssub.s32 %s30, %s42
      %p70 = scmp.eq.s32.totalorder %s69, 0
      %s72 = sadd.s32 %s71, 1
      %s73 = scalar_select %p70, %s71, %s72
      %p76 = pneg %p70
      %p77 = scmp.eq.s32.totalorder %s23, 3
      %p78 = por %p76, %p77
      %p79 = scmp.ne.s32.totalorder %s71, %s74
      %p80 = scmp.eq.s32.totalorder %s23, 0
      %p81 = por %p79, %p80
      %p82 = scmp.ne.s32.totalorder %s71, %s74
      %p83 = scmp.eq.s32.totalorder %s28, 3
      %p84 = por %p82, %p83
      %p85 = scmp.ne.s32.totalorder %s74, %s75
      %p86 = scmp.eq.s32.totalorder %s28, 0
      %p87 = por %p85, %p86
      %p88 = scmp.ne.s32.totalorder %s74, %s75
      %p89 = scmp.eq.s32.totalorder %s29, 3
      %p90 = por %p88, %p89
      %p92 = scmp.ne.s32.totalorder %s75, %s91
      %p93 = scmp.eq.s32.totalorder %s29, 0
      %p94 = por %p92, %p93
      %s96 = sadd.s32 %s95, 1
      %p99 = scmp.eq.s32.totalorder %s23, 3
      %p100 = scmp.ne.s32.totalorder %s95, %s97
      %p101 = scmp.eq.s32.totalorder %s23, 0
      %p102 = por %p100, %p101
      %p103 = scmp.ne.s32.totalorder %s95, %s97
      %p104 = scmp.eq.s32.totalorder %s28, 3
      %p105 = por %p103, %p104
      %p106 = scmp.ne.s32.totalorder %s97, %s98
      %p107 = scmp.eq.s32.totalorder %s28, 0
      %p108 = por %p106, %p107
      %p109 = scmp.ne.s32.totalorder %s97, %s98
      %p110 = scmp.eq.s32.totalorder %s29, 3
      %p111 = por %p109, %p110
      %p113 = scmp.ne.s32.totalorder %s98, %s112
      %p114 = scmp.eq.s32.totalorder %s29, 0
      %p115 = por %p113, %p114
      %s117 = sadd.s32 %s116, 1
      %p120 = scmp.eq.s32.totalorder %s23, 3
      %p121 = scmp.ne.s32.totalorder %s116, %s118
      %p122 = scmp.eq.s32.totalorder %s23, 0
      %p123 = por %p121, %p122
      %p124 = scmp.ne.s32.totalorder %s116, %s118
      %p125 = scmp.eq.s32.totalorder %s28, 3
      %p126 = por %p124, %p125
      %p127 = scmp.ne.s32.totalorder %s118, %s119
      %p128 = scmp.eq.s32.totalorder %s28, 0
      %p129 = por %p127, %p128
      %p130 = scmp.ne.s32.totalorder %s118, %s119
      %p131 = scmp.eq.s32.totalorder %s29, 3
      %p132 = por %p130, %p131
      %p134 = scmp.ne.s32.totalorder %s119, %s133
      %p135 = scmp.eq.s32.totalorder %s29, 0
      %p136 = por %p134, %p135
      %s138 = sadd.s32 %s137, 1
      %p141 = scmp.eq.s32.totalorder %s23, 3
      %p142 = scmp.ne.s32.totalorder %s137, %s139
      %p143 = scmp.eq.s32.totalorder %s23, 0
      %p144 = por %p142, %p143
      %p145 = scmp.ne.s32.totalorder %s137, %s139
      %p146 = scmp.eq.s32.totalorder %s28, 3
      %p147 = por %p145, %p146
      %p148 = scmp.ne.s32.totalorder %s139, %s140
      %p149 = scmp.eq.s32.totalorder %s28, 0
      %p150 = por %p148, %p149
      %p151 = scmp.ne.s32.totalorder %s139, %s140
      %p152 = scmp.eq.s32.totalorder %s29, 3
      %p153 = por %p151, %p152
      %p155 = scmp.ne.s32.totalorder %s140, %s154
      %p156 = scmp.eq.s32.totalorder %s29, 0
      %p157 = por %p155, %p156
      %s159 = sadd.s32 %s158, 1
      %p162 = scmp.eq.s32.totalorder %s23, 3
      %p163 = scmp.ne.s32.totalorder %s158, %s160
      %p164 = scmp.eq.s32.totalorder %s23, 0
      %p165 = por %p163, %p164
      %p166 = scmp.ne.s32.totalorder %s158, %s160
      %p167 = scmp.eq.s32.totalorder %s28, 3
      %p168 = por %p166, %p167
      %p169 = scmp.ne.s32.totalorder %s160, %s161
      %p170 = scmp.eq.s32.totalorder %s28, 0
      %p171 = por %p169, %p170
      %p172 = scmp.ne.s32.totalorder %s160, %s161
      %p173 = scmp.eq.s32.totalorder %s29, 3
      %p174 = por %p172, %p173
      %p176 = scmp.ne.s32.totalorder %s161, %s175
      %p177 = scmp.eq.s32.totalorder %s29, 0
      %p178 = por %p176, %p177
      %s180 = sadd.s32 %s179, 1
      %p183 = scmp.eq.s32.totalorder %s23, 3
      %p184 = scmp.ne.s32.totalorder %s179, %s181
      %p185 = scmp.eq.s32.totalorder %s23, 0
      %p186 = por %p184, %p185
      %p187 = scmp.ne.s32.totalorder %s179, %s181
      %p188 = scmp.eq.s32.totalorder %s28, 3
      %p189 = por %p187, %p188
      %p190 = scmp.ne.s32.totalorder %s181, %s182
      %p191 = scmp.eq.s32.totalorder %s28, 0
      %p192 = por %p190, %p191
      %p193 = scmp.ne.s32.totalorder %s181, %s182
      %p194 = scmp.eq.s32.totalorder %s29, 3
      %p195 = por %p193, %p194
      %p197 = scmp.ne.s32.totalorder %s182, %s196
      %p198 = scmp.eq.s32.totalorder %s29, 0
      %p199 = por %p197, %p198
      %s201 = sadd.s32 %s200, 1
      %p204 = scmp.eq.s32.totalorder %s23, 3
      %p205 = scmp.ne.s32.totalorder %s200, %s202
      %p206 = scmp.eq.s32.totalorder %s23, 0
      %p207 = por %p205, %p206
      %p208 = scmp.ne.s32.totalorder %s200, %s202
      %p209 = scmp.eq.s32.totalorder %s28, 3
      %p210 = por %p208, %p209
      %p211 = scmp.ne.s32.totalorder %s202, %s203
      %p212 = scmp.eq.s32.totalorder %s28, 0
      %p213 = por %p211, %p212
      %p214 = scmp.ne.s32.totalorder %s202, %s203
      %p215 = scmp.eq.s32.totalorder %s29, 3
      %p216 = por %p214, %p215
      %p218 = scmp.ne.s32.totalorder %s203, %s217
      %p219 = scmp.eq.s32.totalorder %s29, 0
      %p220 = por %p218, %p219
      %s221 = ssub.s32 %s31, %s38
      %p222 = scmp.eq.s32.totalorder %s221, 0
      %s224 = sadd.s32 %s223, 1
      %s225 = scalar_select %p222, %s223, %s224
      %p228 = pneg %p222
      %p229 = scmp.eq.s32.totalorder %s23, 3
      %p230 = por %p228, %p229
      %p231 = scmp.ne.s32.totalorder %s223, %s226
      %p232 = scmp.eq.s32.totalorder %s23, 0
      %p233 = por %p231, %p232
      %p234 = scmp.ne.s32.totalorder %s223, %s226
      %p235 = scmp.eq.s32.totalorder %s28, 3
      %p236 = por %p234, %p235
      %p237 = scmp.ne.s32.totalorder %s226, %s227
      %p238 = scmp.eq.s32.totalorder %s28, 0
      %p239 = por %p237, %p238
      %p240 = scmp.ne.s32.totalorder %s226, %s227
      %p241 = scmp.eq.s32.totalorder %s29, 3
      %p242 = por %p240, %p241
      %p244 = scmp.ne.s32.totalorder %s227, %s243
      %p245 = scmp.eq.s32.totalorder %s29, 0
      %p246 = por %p244, %p245
      %s247 = ssub.s32 %s30, %s42
      %s248 = ssub.s32 %s31, %s38
      %s249 = sor.u32 %s247, %s248
      %p250 = scmp.eq.s32.totalorder %s249, 0
      %s252 = sadd.s32 %s251, 1
      %s253 = scalar_select %p250, %s251, %s252
      %p256 = pneg %p250
      %p257 = scmp.eq.s32.totalorder %s23, 3
      %p258 = por %p256, %p257
      %p259 = scmp.ne.s32.totalorder %s251, %s254
      %p260 = scmp.eq.s32.totalorder %s23, 0
      %p261 = por %p259, %p260
      %p262 = scmp.ne.s32.totalorder %s251, %s254
      %p263 = scmp.eq.s32.totalorder %s28, 3
      %p264 = por %p262, %p263
      %p265 = scmp.ne.s32.totalorder %s254, %s255
      %p266 = scmp.eq.s32.totalorder %s28, 0
      %p267 = por %p265, %p266
      %p268 = scmp.ne.s32.totalorder %s254, %s255
      %p269 = scmp.eq.s32.totalorder %s29, 3
      %p270 = por %p268, %p269
      %p272 = scmp.ne.s32.totalorder %s255, %s271
      %p273 = scmp.eq.s32.totalorder %s29, 0
      %p274 = por %p272, %p273
      %p275 = scmp.le.s32.totalorder 1, %s23
      %p276 = scmp.lt.s32.totalorder %s23, 5
      %p277 = pnand %p275, %p276
      %p278 = pneg %p277
      // Predicated region
      $region9: #{tpu_custom_call.1} parent=5 // pred_check
        _
      $region10: #{tpu_custom_call.1} parent=5 // pred_check_branch
        %280 = sbr.rel (%p277) target = $region12
      $region11: #{tpu_custom_call.1} parent=5 // pred_region
        %s281 = ssub.s32 %s23, 1
        // Predicated region
        $region13: #{tpu_custom_call.1} parent=11 // pred_check
          %p282 = pneg %p108
        $region14: #{tpu_custom_call.1} parent=11 // pred_check_branch
          %284 = sbr.rel (%p282) target = $region16
        $region15: #{tpu_custom_call.1} parent=11 // pred_region
          %286 = vsyncadd [#allocation7], 0
          %s288 = sshll.u32 %s2, 4
          %s289 = int_to_ptr.hbm [resolvable:$true] %s288
          %s290 = sshll.u32 [#allocation6], 4
          %s291 = int_to_ptr.vmem [resolvable:$true] %s290
          %293 = dma.hbm_to_vmem [thread:$0]  %s289, 128, %s291, [#allocation7]
        $region16: #{tpu_custom_call.1} parent=11 // pred_fallthru
          _
        // Predicated region
        $region17: #{tpu_custom_call.1} parent=11 // pred_check
          %p294 = pneg %p129
        $region18: #{tpu_custom_call.1} parent=11 // pred_check_branch
          %296 = sbr.rel (%p294) target = $region20
        $region19: #{tpu_custom_call.1} parent=11 // pred_region
          _
        $region20: #{tpu_custom_call.1} parent=11 // pred_fallthru
          _
        // Predicated region
        $region21: #{tpu_custom_call.1} parent=11 // pred_check
          %p297 = pneg %p150
        $region22: #{tpu_custom_call.1} parent=11 // pred_check_branch
          %299 = sbr.rel (%p297) target = $region24
        $region23: #{tpu_custom_call.1} parent=11 // pred_region
          %301 = vsyncadd [#allocation7], 0
          %s303 = sshll.u32 %s4, 4
          %s304 = int_to_ptr.hbm [resolvable:$true] %s303
          %s305 = sshll.u32 [#allocation8], 4
          %s306 = int_to_ptr.vmem [resolvable:$true] %s305
          %308 = dma.hbm_to_vmem [thread:$0]  %s304, 256, %s306, [#allocation7]
        $region24: #{tpu_custom_call.1} parent=11 // pred_fallthru
          _
        // Predicated region
        $region25: #{tpu_custom_call.1} parent=11 // pred_check
          %p309 = pneg %p171
        $region26: #{tpu_custom_call.1} parent=11 // pred_check_branch
          %311 = sbr.rel (%p309) target = $region28
        $region27: #{tpu_custom_call.1} parent=11 // pred_region
          _
        $region28: #{tpu_custom_call.1} parent=11 // pred_fallthru
          _
        // Predicated region
        $region29: #{tpu_custom_call.1} parent=11 // pred_check
          %p312 = pneg %p192
        $region30: #{tpu_custom_call.1} parent=11 // pred_check_branch
          %314 = sbr.rel (%p312) target = $region32
        $region31: #{tpu_custom_call.1} parent=11 // pred_region
          %316 = vsyncadd [#allocation10], 0
          %s317 = sshll.u32 %s6, 4
          %s318 = int_to_ptr.hbm [resolvable:$true] %s317
          %s319 = sshll.u32 [#allocation9], 4
          %s320 = int_to_ptr.vmem [resolvable:$true] %s319
          %325 = dma.hbm_to_vmem [thread:$0]  %s318, 256, %s320, [#allocation10], 128, 128, 8
        $region32: #{tpu_custom_call.1} parent=11 // pred_fallthru
          _
        // Predicated region
        $region33: #{tpu_custom_call.1} parent=11 // pred_check
          %p326 = pneg %p213
        $region34: #{tpu_custom_call.1} parent=11 // pred_check_branch
          %328 = sbr.rel (%p326) target = $region36
        $region35: #{tpu_custom_call.1} parent=11 // pred_region
          %330 = vsyncadd [#allocation10], 0
          %s332 = sshll.u32 %s7, 4
          %s333 = int_to_ptr.hbm [resolvable:$true] %s332
          %s334 = sshll.u32 [#allocation11], 4
          %s335 = int_to_ptr.vmem [resolvable:$true] %s334
          %337 = dma.hbm_to_vmem [thread:$0]  %s333, 128, %s335, [#allocation10]
        $region36: #{tpu_custom_call.1} parent=11 // pred_fallthru
          _
      $region12: #{tpu_custom_call.1} parent=5 // pred_fallthru
        _
      %p338 = scmp.lt.s32.totalorder %s23, 4
      // Predicated region
      $region37: #{tpu_custom_call.1} parent=5 // pred_check
        %p339 = pneg %p338
      $region38: #{tpu_custom_call.1} parent=5 // pred_check_branch
        %341 = sbr.rel (%p339) target = $region40
      $region39: #{tpu_custom_call.1} parent=5 // pred_region
        // Predicated region
        $region41: #{tpu_custom_call.1} parent=39 // pred_check
          %p342 = pneg %p55
        $region42: #{tpu_custom_call.1} parent=39 // pred_check_branch
          %344 = sbr.rel (%p342) target = $region44
        $region43: #{tpu_custom_call.1} parent=39 // pred_region
          %s345 = sand.u32 %s45, 1
          %s346 = scalar_lea.sflag [#allocation4], %s345
          %s347 = sand.u32 %s45, 1
          %s348 = smul.addr %s347, 256
          %s349 = scalar_lea.vmem [#allocation3], %s348
          %351 = vsyncadd %s346, 0
          %s352 = smul.addr %s30, 64
          %s353 = smul.addr %s352, 4
          %s354 = scalar_lea.hbm %s0, %s353
          %s355 = sshll.u32 %s354, 4
          %s356 = int_to_ptr.hbm [resolvable:$true] %s355
          %s357 = sshll.u32 %s349, 4
          %s358 = int_to_ptr.vmem [resolvable:$true] %s357
          %363 = dma.hbm_to_vmem [thread:$0]  %s356, 4096, %s358, %s346, 128, 128, 8
        $region44: #{tpu_custom_call.1} parent=39 // pred_fallthru
          _
        // Predicated region
        $region45: #{tpu_custom_call.1} parent=39 // pred_check
          %p364 = pneg %p81
        $region46: #{tpu_custom_call.1} parent=39 // pred_check_branch
          %366 = sbr.rel (%p364) target = $region48
        $region47: #{tpu_custom_call.1} parent=39 // pred_region
          %p367 = scmp.lt.s32.totalorder %s30, 1
          %s368 = scalar_select %p367, %s30, 1
          %s369 = smul.addr %s368, 64
          %s370 = smul.addr %s369, 4
          %s371 = scalar_lea.vmem %s1, %s370
        $region48: #{tpu_custom_call.1} parent=39 // pred_fallthru
          _
        // Predicated region
        $region49: #{tpu_custom_call.1} parent=39 // pred_check
          %p372 = pneg %p233
        $region50: #{tpu_custom_call.1} parent=39 // pred_check_branch
          %374 = sbr.rel (%p372) target = $region52
        $region51: #{tpu_custom_call.1} parent=39 // pred_region
          %s375 = smul.u32 16, %s31
          %p376 = scmp.lt.s32.totalorder %s375, 31
          %s377 = scalar_select %p376, %s375, 31
          %s378 = smul.addr %s377, 4
          %s379 = scalar_lea.vmem %s8, %s378
          %s380 = smul.u32 16, %s31
        $region52: #{tpu_custom_call.1} parent=39 // pred_fallthru
          _
      $region40: #{tpu_custom_call.1} parent=5 // pred_fallthru
        _
      %p381 = scmp.le.s32.totalorder 1, %s23
      %p382 = scmp.lt.s32.totalorder %s23, 5
      %p383 = pnand %p381, %p382
      %p384 = pneg %p383
      // Predicated region
      $region53: #{tpu_custom_call.1} parent=5 // pred_check
        _
      $region54: #{tpu_custom_call.1} parent=5 // pred_check_branch
        %386 = sbr.rel (%p383) target = $region56
      $region55: #{tpu_custom_call.1} parent=5 // pred_region
        %s387 = ssub.s32 %s23, 1
        %s388 = sand.u32 %s48, 1
        %s389 = scalar_lea.sflag [#allocation4], %s388
        %s390 = sand.u32 %s48, 1
        %s391 = smul.addr %s390, 256
        %s392 = scalar_lea.vmem [#allocation3], %s391
        // Predicated region
        $region57: #{tpu_custom_call.1} parent=55 // pred_check
          %p393 = pneg %p61
        $region58: #{tpu_custom_call.1} parent=55 // pred_check_branch
          %395 = sbr.rel (%p393) target = $region60
        $region59: #{tpu_custom_call.1} parent=55 // pred_region
          %397 = dma.done %s389, 4096
        $region60: #{tpu_custom_call.1} parent=55 // pred_fallthru
          _
        // Predicated region
        $region61: #{tpu_custom_call.1} parent=55 // pred_check
          %p398 = pneg %p108
        $region62: #{tpu_custom_call.1} parent=55 // pred_check_branch
          %400 = sbr.rel (%p398) target = $region64
        $region63: #{tpu_custom_call.1} parent=55 // pred_region
          %402 = dma.done [#allocation7], 128
        $region64: #{tpu_custom_call.1} parent=55 // pred_fallthru
          _
        // Predicated region
        $region65: #{tpu_custom_call.1} parent=55 // pred_check
          %p403 = pneg %p150
        $region66: #{tpu_custom_call.1} parent=55 // pred_check_branch
          %405 = sbr.rel (%p403) target = $region68
        $region67: #{tpu_custom_call.1} parent=55 // pred_region
          %407 = dma.done [#allocation7], 256
        $region68: #{tpu_custom_call.1} parent=55 // pred_fallthru
          _
        // Predicated region
        $region69: #{tpu_custom_call.1} parent=55 // pred_check
          %p408 = pneg %p192
        $region70: #{tpu_custom_call.1} parent=55 // pred_check_branch
          %410 = sbr.rel (%p408) target = $region72
        $region71: #{tpu_custom_call.1} parent=55 // pred_region
          %412 = dma.done [#allocation10], 256
        $region72: #{tpu_custom_call.1} parent=55 // pred_fallthru
          _
        // Predicated region
        $region73: #{tpu_custom_call.1} parent=55 // pred_check
          %p413 = pneg %p213
        $region74: #{tpu_custom_call.1} parent=55 // pred_check_branch
          %415 = sbr.rel (%p413) target = $region76
        $region75: #{tpu_custom_call.1} parent=55 // pred_region
          %417 = dma.done [#allocation10], 128
        $region76: #{tpu_custom_call.1} parent=55 // pred_fallthru
          _
        %s418 = sand.u32 %s48, 1
        %s419 = scalar_lea.sflag [#allocation4], %s418
        %s420 = sand.u32 %s48, 1
        %s421 = smul.addr %s420, 256
        %s422 = scalar_lea.vmem [#allocation3], %s421
        %p423 = pneg %p61
        %p424 = pneg %p58
        %p425 = scmp.lt.s32.totalorder %s32, 1
        %s426 = scalar_select %p425, %s32, 1
        %s427 = smul.addr %s426, 64
        %s428 = smul.addr %s427, 4
        %s429 = scalar_lea.vmem %s1, %s428
        %p430 = pneg %p87
        %p431 = pneg %p84
        %p432 = pneg %p108
        %p433 = pneg %p105
        %p434 = pneg %p129
        %p435 = pneg %p126
        %p436 = pneg %p150
        %p437 = pneg %p147
        %p438 = pneg %p171
        %p439 = pneg %p168
        %p440 = pneg %p192
        %p441 = pneg %p189
        %p442 = pneg %p213
        %p443 = pneg %p210
        %s444 = smul.u32 16, %s33
        %p445 = scmp.lt.s32.totalorder %s444, 31
        %s446 = scalar_select %p445, %s444, 31
        %s447 = smul.addr %s446, 4
        %s448 = scalar_lea.vmem %s8, %s447
        %p449 = pneg %p239
        %p450 = pneg %p236
        %p451 = pneg %p267
        %p452 = pneg %p264
        %s453 = sand.u32 %s254, 1
        %s454 = scalar_lea.sflag [#allocation5], %s453
        %s455 = sand.u32 %s254, 1
        %s456 = smul.addr %s455, 2048
        %s457 = scalar_lea.vmem [#allocation12], %s456
        %p458 = scmp.lt.s32.totalorder %s32, 1
        %s459 = scalar_select %p458, %s32, 1
        %s460 = smul.addr %s459, 64
        %s461 = smul.addr %s460, 4
        %s462 = scalar_lea.vmem %s1, %s461
        %s463 = smul.u32 16, %s33
        %p464 = scmp.lt.s32.totalorder %s463, 31
        %s465 = scalar_select %p464, %s463, 31
        %s466 = smul.addr %s465, 4
        %s467 = scalar_lea.vmem %s8, %s466
        %s468 = smul.u32 16, %s33
        %s469 = smul.u32 16, %s33
        %p471 = scmp.eq.s32.totalorder %s33, 0
        // Predicated region
        $region77: #{tpu_custom_call.1} parent=55 // pred_check
          %p472 = pneg %p471
        $region78: #{tpu_custom_call.1} parent=55 // pred_check_branch
          %474 = sbr.rel (%p472) target = $region80
        $region79: #{tpu_custom_call.1} parent=55 // pred_region
          %v475 = vld [vmem:[#allocation6] sm:$0xff]
          %v476 = vld [vmem:[%s392] sm:$0xff]
          %v477 = vld [vmem:[%s392 + $0x8] sm:$0xff]
          %v478 = vld [vmem:[%s392 + $0x10] sm:$0xff]
          %v479 = vld [vmem:[%s392 + $0x18] sm:$0xff]
          %v480 = vld [vmem:[%s392 + $0x20] sm:$0xff]
          %v481 = vld [vmem:[%s392 + $0x28] sm:$0xff]
          %v482 = vld [vmem:[%s392 + $0x30] sm:$0xff]
          %v483 = vld [vmem:[%s392 + $0x38] sm:$0xff]
          %v484 = vld [vmem:[%s392 + $0x40] sm:$0xff]
          %v485 = vld [vmem:[%s392 + $0x48] sm:$0xff]
          %v486 = vld [vmem:[%s392 + $0x50] sm:$0xff]
          %v487 = vld [vmem:[%s392 + $0x58] sm:$0xff]
          %v488 = vld [vmem:[%s392 + $0x60] sm:$0xff]
          %v489 = vld [vmem:[%s392 + $0x68] sm:$0xff]
          %v490 = vld [vmem:[%s392 + $0x70] sm:$0xff]
          %v491 = vld [vmem:[%s392 + $0x78] sm:$0xff]
          %v492 = vld [vmem:[%s392 + $0x80] sm:$0xff]
          %v493 = vld [vmem:[%s392 + $0x88] sm:$0xff]
          %v494 = vld [vmem:[%s392 + $0x90] sm:$0xff]
          %v495 = vld [vmem:[%s392 + $0x98] sm:$0xff]
          %v496 = vld [vmem:[%s392 + $0xa0] sm:$0xff]
          %v497 = vld [vmem:[%s392 + $0xa8] sm:$0xff]
          %v498 = vld [vmem:[%s392 + $0xb0] sm:$0xff]
          %v499 = vld [vmem:[%s392 + $0xb8] sm:$0xff]
          %v500 = vld [vmem:[%s392 + $0xc0] sm:$0xff]
          %v501 = vld [vmem:[%s392 + $0xc8] sm:$0xff]
          %v502 = vld [vmem:[%s392 + $0xd0] sm:$0xff]
          %v503 = vld [vmem:[%s392 + $0xd8] sm:$0xff]
          %v504 = vld [vmem:[%s392 + $0xe0] sm:$0xff]
          %v505 = vld [vmem:[%s392 + $0xe8] sm:$0xff]
          %v506 = vld [vmem:[%s392 + $0xf0] sm:$0xff]
          %v507 = vld [vmem:[%s392 + $0xf8] sm:$0xff]
          %v508 = vld [vmem:[%s3] sm:$0xff]
          %510 = vset.pattern.permute.xlu0 0
          %511 = vperm.xlu0 %510, %v508
          %v512 = vpop.permute.xlu0 %511
          %v515 = vunpack.c.l.b16 %v475
          %v516 = vunpack.c.h.b16 %v475
          %v517 = vpack.c.b16 %v515, %v515
          %v518 = vpack.c.b16 %v516, %v516
          %v553 = vunpack.c.l.b16 %v476
          %v554 = vunpack.c.h.b16 %v476
          %v555 = vunpack.c.l.b16 %v477
          %v556 = vunpack.c.h.b16 %v477
          %v557 = vunpack.c.l.b16 %v478
          %v558 = vunpack.c.h.b16 %v478
          %v559 = vunpack.c.l.b16 %v479
          %v560 = vunpack.c.h.b16 %v479
          %v561 = vunpack.c.l.b16 %v480
          %v562 = vunpack.c.h.b16 %v480
          %v563 = vunpack.c.l.b16 %v481
          %v564 = vunpack.c.h.b16 %v481
          %v565 = vunpack.c.l.b16 %v482
          %v566 = vunpack.c.h.b16 %v482
          %v567 = vunpack.c.l.b16 %v483
          %v568 = vunpack.c.h.b16 %v483
          %v569 = vunpack.c.l.b16 %v484
          %v570 = vunpack.c.h.b16 %v484
          %v571 = vunpack.c.l.b16 %v485
          %v572 = vunpack.c.h.b16 %v485
          %v573 = vunpack.c.l.b16 %v486
          %v574 = vunpack.c.h.b16 %v486
          %v575 = vunpack.c.l.b16 %v487
          %v576 = vunpack.c.h.b16 %v487
          %v577 = vunpack.c.l.b16 %v488
          %v578 = vunpack.c.h.b16 %v488
          %v579 = vunpack.c.l.b16 %v489
          %v580 = vunpack.c.h.b16 %v489
          %v581 = vunpack.c.l.b16 %v490
          %v582 = vunpack.c.h.b16 %v490
          %v583 = vunpack.c.l.b16 %v491
          %v584 = vunpack.c.h.b16 %v491
          %v585 = vunpack.c.l.b16 %v492
          %v586 = vunpack.c.h.b16 %v492
          %v587 = vunpack.c.l.b16 %v493
          %v588 = vunpack.c.h.b16 %v493
          %v589 = vunpack.c.l.b16 %v494
          %v590 = vunpack.c.h.b16 %v494
          %v591 = vunpack.c.l.b16 %v495
          %v592 = vunpack.c.h.b16 %v495
          %v593 = vunpack.c.l.b16 %v496
          %v594 = vunpack.c.h.b16 %v496
          %v595 = vunpack.c.l.b16 %v497
          %v596 = vunpack.c.h.b16 %v497
          %v597 = vunpack.c.l.b16 %v498
          %v598 = vunpack.c.h.b16 %v498
          %v599 = vunpack.c.l.b16 %v499
          %v600 = vunpack.c.h.b16 %v499
          %v601 = vunpack.c.l.b16 %v500
          %v602 = vunpack.c.h.b16 %v500
          %v603 = vunpack.c.l.b16 %v501
          %v604 = vunpack.c.h.b16 %v501
          %v605 = vunpack.c.l.b16 %v502
          %v606 = vunpack.c.h.b16 %v502
          %v607 = vunpack.c.l.b16 %v503
          %v608 = vunpack.c.h.b16 %v503
          %v609 = vunpack.c.l.b16 %v504
          %v610 = vunpack.c.h.b16 %v504
          %v611 = vunpack.c.l.b16 %v505
          %v612 = vunpack.c.h.b16 %v505
          %v613 = vunpack.c.l.b16 %v506
          %v614 = vunpack.c.h.b16 %v506
          %v615 = vunpack.c.l.b16 %v507
          %v616 = vunpack.c.h.b16 %v507
          %v617 = vpack.c.b16 %v555, %v553
          %v618 = vpack.c.b16 %v556, %v554
          %v619 = vpack.c.b16 %v559, %v557
          %v620 = vpack.c.b16 %v560, %v558
          %v621 = vpack.c.b16 %v563, %v561
          %v622 = vpack.c.b16 %v564, %v562
          %v623 = vpack.c.b16 %v567, %v565
          %v624 = vpack.c.b16 %v568, %v566
          %v625 = vpack.c.b16 %v571, %v569
          %v626 = vpack.c.b16 %v572, %v570
          %v627 = vpack.c.b16 %v575, %v573
          %v628 = vpack.c.b16 %v576, %v574
          %v629 = vpack.c.b16 %v579, %v577
          %v630 = vpack.c.b16 %v580, %v578
          %v631 = vpack.c.b16 %v583, %v581
          %v632 = vpack.c.b16 %v584, %v582
          %v633 = vpack.c.b16 %v587, %v585
          %v634 = vpack.c.b16 %v588, %v586
          %v635 = vpack.c.b16 %v591, %v589
          %v636 = vpack.c.b16 %v592, %v590
          %v637 = vpack.c.b16 %v595, %v593
          %v638 = vpack.c.b16 %v596, %v594
          %v639 = vpack.c.b16 %v599, %v597
          %v640 = vpack.c.b16 %v600, %v598
          %v641 = vpack.c.b16 %v603, %v601
          %v642 = vpack.c.b16 %v604, %v602
          %v643 = vpack.c.b16 %v607, %v605
          %v644 = vpack.c.b16 %v608, %v606
          %v645 = vpack.c.b16 %v611, %v609
          %v646 = vpack.c.b16 %v612, %v610
          %v647 = vpack.c.b16 %v615, %v613
          %v648 = vpack.c.b16 %v616, %v614
          %681 = vmatpush.bf16.msra.mxu0 %v631
          %682 = vmatpush.bf16.msra.mxu0 %v629
          %683 = vmatpush.bf16.msra.mxu0 %v627
          %684 = vmatpush.bf16.msra.mxu0 %v625
          %685 = vmatpush.bf16.msra.mxu0 %v623
          %686 = vmatpush.bf16.msra.mxu0 %v621
          %687 = vmatpush.bf16.msra.mxu0 %v619
          %688 = vmatpush.bf16.msra.mxu0 %v617
          %689 = vmatmul.bf16.gmra.mxu0 %v517
          %v690 = vpop.f32.mrf.mxu0
          %v691 = vadd.f32 %v512, %v690
          %v692 = vpop.f32.mrf.mxu0
          %693 = vdwg.mxu0
          %694 = vmatpush.bf16.msra.mxu0 %v647
          %695 = vmatpush.bf16.msra.mxu0 %v645
          %696 = vmatpush.bf16.msra.mxu0 %v643
          %697 = vmatpush.bf16.msra.mxu0 %v641
          %698 = vmatpush.bf16.msra.mxu0 %v639
          %699 = vmatpush.bf16.msra.mxu0 %v637
          %700 = vmatpush.bf16.msra.mxu0 %v635
          %701 = vmatpush.bf16.msra.mxu0 %v633
          %702 = vmatmul.bf16.gmra.mxu0 %v518
          %v703 = vpop.f32.mrf.mxu0
          %v704 = vadd.f32 %v691, %v703
          %v705 = vpop.f32.mrf.mxu0
          %706 = vdwg.mxu0
          %707 = vmatpush.bf16.msra.mxu0 %v632
          %708 = vmatpush.bf16.msra.mxu0 %v630
          %709 = vmatpush.bf16.msra.mxu0 %v628
          %710 = vmatpush.bf16.msra.mxu0 %v626
          %711 = vmatpush.bf16.msra.mxu0 %v624
          %712 = vmatpush.bf16.msra.mxu0 %v622
          %713 = vmatpush.bf16.msra.mxu0 %v620
          %714 = vmatpush.bf16.msra.mxu0 %v618
          %715 = vmatmul.bf16.gmra.mxu0 %v517
          %v716 = vpop.f32.mrf.mxu0
          %v717 = vadd.f32 %v512, %v716
          %v718 = vpop.f32.mrf.mxu0
          %719 = vdwg.mxu0
          %720 = vmatpush.bf16.msra.mxu0 %v648
          %721 = vmatpush.bf16.msra.mxu0 %v646
          %722 = vmatpush.bf16.msra.mxu0 %v644
          %723 = vmatpush.bf16.msra.mxu0 %v642
          %724 = vmatpush.bf16.msra.mxu0 %v640
          %725 = vmatpush.bf16.msra.mxu0 %v638
          %726 = vmatpush.bf16.msra.mxu0 %v636
          %727 = vmatpush.bf16.msra.mxu0 %v634
          %728 = vmatmul.bf16.gmra.mxu0 %v518
          %v729 = vpop.f32.mrf.mxu0
          %v730 = vadd.f32 %v717, %v729
          %v731 = vpop.f32.mrf.mxu0
          %732 = vdwg.mxu0
          %v733 = vld [vmem:[#allocation8] sm:$0xff]
          %v734 = vld [vmem:[#allocation8 + $0x8] sm:$0xff]
          %v735 = vld [vmem:[%s462] sm:$0xf]
          %v736 = vld [vmem:[%s462 + $0x4] sm:$0xf]
          %v737 = vld [vmem:[%s462 + $0x8] sm:$0xf]
          %v738 = vld [vmem:[%s462 + $0xc] sm:$0xf]
          %v739 = vld [vmem:[%s462 + $0x10] sm:$0xf]
          %v740 = vld [vmem:[%s462 + $0x14] sm:$0xf]
          %v741 = vld [vmem:[%s462 + $0x18] sm:$0xf]
          %v742 = vld [vmem:[%s462 + $0x1c] sm:$0xf]
          %v743 = vld [vmem:[%s462 + $0x20] sm:$0xf]
          %v744 = vld [vmem:[%s462 + $0x24] sm:$0xf]
          %v745 = vld [vmem:[%s462 + $0x28] sm:$0xf]
          %v746 = vld [vmem:[%s462 + $0x2c] sm:$0xf]
          %v747 = vld [vmem:[%s462 + $0x30] sm:$0xf]
          %v748 = vld [vmem:[%s462 + $0x34] sm:$0xf]
          %v749 = vld [vmem:[%s462 + $0x38] sm:$0xf]
          %v750 = vld [vmem:[%s462 + $0x3c] sm:$0xf]
          %v751 = vld [vmem:[%s462 + $0x40] sm:$0xf]
          %v752 = vld [vmem:[%s462 + $0x44] sm:$0xf]
          %v753 = vld [vmem:[%s462 + $0x48] sm:$0xf]
          %v754 = vld [vmem:[%s462 + $0x4c] sm:$0xf]
          %v755 = vld [vmem:[%s462 + $0x50] sm:$0xf]
          %v756 = vld [vmem:[%s462 + $0x54] sm:$0xf]
          %v757 = vld [vmem:[%s462 + $0x58] sm:$0xf]
          %v758 = vld [vmem:[%s462 + $0x5c] sm:$0xf]
          %v759 = vld [vmem:[%s462 + $0x60] sm:$0xf]
          %v760 = vld [vmem:[%s462 + $0x64] sm:$0xf]
          %v761 = vld [vmem:[%s462 + $0x68] sm:$0xf]
          %v762 = vld [vmem:[%s462 + $0x6c] sm:$0xf]
          %v763 = vld [vmem:[%s462 + $0x70] sm:$0xf]
          %v764 = vld [vmem:[%s462 + $0x74] sm:$0xf]
          %v765 = vld [vmem:[%s462 + $0x78] sm:$0xf]
          %v766 = vld [vmem:[%s462 + $0x7c] sm:$0xf]
          %v767 = vld [vmem:[%s462 + $0x80] sm:$0xf]
          %v768 = vld [vmem:[%s462 + $0x84] sm:$0xf]
          %v769 = vld [vmem:[%s462 + $0x88] sm:$0xf]
          %v770 = vld [vmem:[%s462 + $0x8c] sm:$0xf]
          %v771 = vld [vmem:[%s462 + $0x90] sm:$0xf]
          %v772 = vld [vmem:[%s462 + $0x94] sm:$0xf]
          %v773 = vld [vmem:[%s462 + $0x98] sm:$0xf]
          %v774 = vld [vmem:[%s462 + $0x9c] sm:$0xf]
          %v775 = vld [vmem:[%s462 + $0xa0] sm:$0xf]
          %v776 = vld [vmem:[%s462 + $0xa4] sm:$0xf]
          %v777 = vld [vmem:[%s462 + $0xa8] sm:$0xf]
          %v778 = vld [vmem:[%s462 + $0xac] sm:$0xf]
          %v779 = vld [vmem:[%s462 + $0xb0] sm:$0xf]
          %v780 = vld [vmem:[%s462 + $0xb4] sm:$0xf]
          %v781 = vld [vmem:[%s462 + $0xb8] sm:$0xf]
          %v782 = vld [vmem:[%s462 + $0xbc] sm:$0xf]
          %v783 = vld [vmem:[%s462 + $0xc0] sm:$0xf]
          %v784 = vld [vmem:[%s462 + $0xc4] sm:$0xf]
          %v785 = vld [vmem:[%s462 + $0xc8] sm:$0xf]
          %v786 = vld [vmem:[%s462 + $0xcc] sm:$0xf]
          %v787 = vld [vmem:[%s462 + $0xd0] sm:$0xf]
          %v788 = vld [vmem:[%s462 + $0xd4] sm:$0xf]
          %v789 = vld [vmem:[%s462 + $0xd8] sm:$0xf]
          %v790 = vld [vmem:[%s462 + $0xdc] sm:$0xf]
          %v791 = vld [vmem:[%s462 + $0xe0] sm:$0xf]
          %v792 = vld [vmem:[%s462 + $0xe4] sm:$0xf]
          %v793 = vld [vmem:[%s462 + $0xe8] sm:$0xf]
          %v794 = vld [vmem:[%s462 + $0xec] sm:$0xf]
          %v795 = vld [vmem:[%s462 + $0xf0] sm:$0xf]
          %v796 = vld [vmem:[%s462 + $0xf4] sm:$0xf]
          %v797 = vld [vmem:[%s462 + $0xf8] sm:$0xf]
          %v798 = vld [vmem:[%s462 + $0xfc] sm:$0xf]
          %v799 = vld [vmem:[%s5] sm:$0xff]
          %801 = vset.pattern.permute.xlu0 0
          %802 = vperm.xlu0 %801, %v799
          %v803 = vpop.permute.xlu0 %802
          %v807 = vunpack.c.l.b16 %v733
          %v808 = vunpack.c.h.b16 %v733
          %v809 = vunpack.c.l.b16 %v734
          %v810 = vunpack.c.h.b16 %v734
          %v811 = vpack.c.b16 %v807, %v807
          %v812 = vpack.c.b16 %v808, %v808
          %v813 = vpack.c.b16 %v809, %v809
          %v814 = vpack.c.b16 %v810, %v810
          %v883 = vunpack.c.l.b16 %v735
          %v884 = vunpack.c.l.b16 %v736
          %v885 = vunpack.c.l.b16 %v737
          %v886 = vunpack.c.l.b16 %v738
          %v887 = vunpack.c.l.b16 %v739
          %v888 = vunpack.c.l.b16 %v740
          %v889 = vunpack.c.l.b16 %v741
          %v890 = vunpack.c.l.b16 %v742
          %v891 = vunpack.c.l.b16 %v743
          %v892 = vunpack.c.l.b16 %v744
          %v893 = vunpack.c.l.b16 %v745
          %v894 = vunpack.c.l.b16 %v746
          %v895 = vunpack.c.l.b16 %v747
          %v896 = vunpack.c.l.b16 %v748
          %v897 = vunpack.c.l.b16 %v749
          %v898 = vunpack.c.l.b16 %v750
          %v899 = vunpack.c.l.b16 %v751
          %v900 = vunpack.c.l.b16 %v752
          %v901 = vunpack.c.l.b16 %v753
          %v902 = vunpack.c.l.b16 %v754
          %v903 = vunpack.c.l.b16 %v755
          %v904 = vunpack.c.l.b16 %v756
          %v905 = vunpack.c.l.b16 %v757
          %v906 = vunpack.c.l.b16 %v758
          %v907 = vunpack.c.l.b16 %v759
          %v908 = vunpack.c.l.b16 %v760
          %v909 = vunpack.c.l.b16 %v761
          %v910 = vunpack.c.l.b16 %v762
          %v911 = vunpack.c.l.b16 %v763
          %v912 = vunpack.c.l.b16 %v764
          %v913 = vunpack.c.l.b16 %v765
          %v914 = vunpack.c.l.b16 %v766
          %v915 = vunpack.c.l.b16 %v767
          %v916 = vunpack.c.l.b16 %v768
          %v917 = vunpack.c.l.b16 %v769
          %v918 = vunpack.c.l.b16 %v770
          %v919 = vunpack.c.l.b16 %v771
          %v920 = vunpack.c.l.b16 %v772
          %v921 = vunpack.c.l.b16 %v773
          %v922 = vunpack.c.l.b16 %v774
          %v923 = vunpack.c.l.b16 %v775
          %v924 = vunpack.c.l.b16 %v776
          %v925 = vunpack.c.l.b16 %v777
          %v926 = vunpack.c.l.b16 %v778
          %v927 = vunpack.c.l.b16 %v779
          %v928 = vunpack.c.l.b16 %v780
          %v929 = vunpack.c.l.b16 %v781
          %v930 = vunpack.c.l.b16 %v782
          %v931 = vunpack.c.l.b16 %v783
          %v932 = vunpack.c.l.b16 %v784
          %v933 = vunpack.c.l.b16 %v785
          %v934 = vunpack.c.l.b16 %v786
          %v935 = vunpack.c.l.b16 %v787
          %v936 = vunpack.c.l.b16 %v788
          %v937 = vunpack.c.l.b16 %v789
          %v938 = vunpack.c.l.b16 %v790
          %v939 = vunpack.c.l.b16 %v791
          %v940 = vunpack.c.l.b16 %v792
          %v941 = vunpack.c.l.b16 %v793
          %v942 = vunpack.c.l.b16 %v794
          %v943 = vunpack.c.l.b16 %v795
          %v944 = vunpack.c.l.b16 %v796
          %v945 = vunpack.c.l.b16 %v797
          %v946 = vunpack.c.l.b16 %v798
          %v947 = vpack.c.b16 %v884, %v883
          %v948 = vpack.c.b16 %v886, %v885
          %v949 = vpack.c.b16 %v888, %v887
          %v950 = vpack.c.b16 %v890, %v889
          %v951 = vpack.c.b16 %v892, %v891
          %v952 = vpack.c.b16 %v894, %v893
          %v953 = vpack.c.b16 %v896, %v895
          %v954 = vpack.c.b16 %v898, %v897
          %v955 = vpack.c.b16 %v900, %v899
          %v956 = vpack.c.b16 %v902, %v901
          %v957 = vpack.c.b16 %v904, %v903
          %v958 = vpack.c.b16 %v906, %v905
          %v959 = vpack.c.b16 %v908, %v907
          %v960 = vpack.c.b16 %v910, %v909
          %v961 = vpack.c.b16 %v912, %v911
          %v962 = vpack.c.b16 %v914, %v913
          %v963 = vpack.c.b16 %v916, %v915
          %v964 = vpack.c.b16 %v918, %v917
          %v965 = vpack.c.b16 %v920, %v919
          %v966 = vpack.c.b16 %v922, %v921
          %v967 = vpack.c.b16 %v924, %v923
          %v968 = vpack.c.b16 %v926, %v925
          %v969 = vpack.c.b16 %v928, %v927
          %v970 = vpack.c.b16 %v930, %v929
          %v971 = vpack.c.b16 %v932, %v931
          %v972 = vpack.c.b16 %v934, %v933
          %v973 = vpack.c.b16 %v936, %v935
          %v974 = vpack.c.b16 %v938, %v937
          %v975 = vpack.c.b16 %v940, %v939
          %v976 = vpack.c.b16 %v942, %v941
          %v977 = vpack.c.b16 %v944, %v943
          %v978 = vpack.c.b16 %v946, %v945
          %1011 = vmatpush.bf16.msra.mxu0 %v954
          %1012 = vmatpush.bf16.msra.mxu0 %v953
          %1013 = vmatpush.bf16.msra.mxu0 %v952
          %1014 = vmatpush.bf16.msra.mxu0 %v951
          %1015 = vmatpush.bf16.msra.mxu0 %v950
          %1016 = vmatpush.bf16.msra.mxu0 %v949
          %1017 = vmatpush.bf16.msra.mxu0 %v948
          %1018 = vmatpush.bf16.msra.mxu0 %v947
          %1019 = vmatmul.bf16.gmra.mxu0 %v811
          %v1020 = vpop.f32.mrf.mxu0
          %v1021 = vadd.f32 %v803, %v1020
          %v1022 = vpop.f32.mrf.mxu0
          %1023 = vdwg.mxu0
          %1024 = vmatpush.bf16.msra.mxu0 %v962
          %1025 = vmatpush.bf16.msra.mxu0 %v961
          %1026 = vmatpush.bf16.msra.mxu0 %v960
          %1027 = vmatpush.bf16.msra.mxu0 %v959
          %1028 = vmatpush.bf16.msra.mxu0 %v958
          %1029 = vmatpush.bf16.msra.mxu0 %v957
          %1030 = vmatpush.bf16.msra.mxu0 %v956
          %1031 = vmatpush.bf16.msra.mxu0 %v955
          %1032 = vmatmul.bf16.gmra.mxu0 %v812
          %v1033 = vpop.f32.mrf.mxu0
          %v1034 = vadd.f32 %v1021, %v1033
          %v1035 = vpop.f32.mrf.mxu0
          %1036 = vdwg.mxu0
          %1037 = vmatpush.bf16.msra.mxu0 %v970
          %1038 = vmatpush.bf16.msra.mxu0 %v969
          %1039 = vmatpush.bf16.msra.mxu0 %v968
          %1040 = vmatpush.bf16.msra.mxu0 %v967
          %1041 = vmatpush.bf16.msra.mxu0 %v966
          %1042 = vmatpush.bf16.msra.mxu0 %v965
          %1043 = vmatpush.bf16.msra.mxu0 %v964
          %1044 = vmatpush.bf16.msra.mxu0 %v963
          %1045 = vmatmul.bf16.gmra.mxu0 %v813
          %v1046 = vpop.f32.mrf.mxu0
          %v1047 = vadd.f32 %v1034, %v1046
          %v1048 = vpop.f32.mrf.mxu0
          %1049 = vdwg.mxu0
          %1050 = vmatpush.bf16.msra.mxu0 %v978
          %1051 = vmatpush.bf16.msra.mxu0 %v977
          %1052 = vmatpush.bf16.msra.mxu0 %v976
          %1053 = vmatpush.bf16.msra.mxu0 %v975
          %1054 = vmatpush.bf16.msra.mxu0 %v974
          %1055 = vmatpush.bf16.msra.mxu0 %v973
          %1056 = vmatpush.bf16.msra.mxu0 %v972
          %1057 = vmatpush.bf16.msra.mxu0 %v971
          %1058 = vmatmul.bf16.gmra.mxu0 %v814
          %v1059 = vpop.f32.mrf.mxu0
          %v1060 = vadd.f32 %v1047, %v1059
          %v1061 = vpop.f32.mrf.mxu0
          %1062 = vdwg.mxu0
          %v1063 = vld [vmem:[#allocation9] sm:$0xff]
          %v1064 = vld [vmem:[#allocation9 + $0x8] sm:$0xff]
          %v1065 = vpack.c.bf16 %v704, %v704
          %v1068 = vunpack.c.l.b16 %v1063
          %v1069 = vunpack.c.h.b16 %v1063
          %v1070 = vunpack.c.l.b16 %v1064
          %v1071 = vunpack.c.h.b16 %v1064
          %v1072 = vpack.c.b16 %v1070, %v1068
          %v1073 = vpack.c.b16 %v1071, %v1069
          %vm1076 = vcmask 130048
          %v1078 = vsel %vm1076, %v1065, 0
          %1080 = vmatpush.bf16.msra.mxu0 0
          %1081 = vmatpush.bf16.msra.mxu0 0
          %1082 = vmatpush.bf16.msra.mxu0 0
          %1083 = vmatpush.bf16.msra.mxu0 0
          %1084 = vmatpush.bf16.msra.mxu0 0
          %1085 = vmatpush.bf16.msra.mxu0 0
          %1086 = vmatpush.bf16.msra.mxu0 0
          %1087 = vmatpush.bf16.msra.mxu0 %v1072
          %1088 = vmatmul.bf16.gmra.mxu0 %v1078
          %v1089 = vpop.f32.mrf.mxu0
          %v1090 = vadd.f32 0.0, %v1089
          %v1091 = vpop.f32.mrf.mxu0
          %1092 = vdwg.mxu0
          %1093 = vmatpush.bf16.msra.mxu0 0
          %1094 = vmatpush.bf16.msra.mxu0 0
          %1095 = vmatpush.bf16.msra.mxu0 0
          %1096 = vmatpush.bf16.msra.mxu0 0
          %1097 = vmatpush.bf16.msra.mxu0 0
          %1098 = vmatpush.bf16.msra.mxu0 0
          %1099 = vmatpush.bf16.msra.mxu0 0
          %1100 = vmatpush.bf16.msra.mxu0 %v1073
          %1101 = vmatmul.bf16.gmra.mxu0 %v1078
          %v1102 = vpop.f32.mrf.mxu0
          %v1103 = vadd.f32 0.0, %v1102
          %v1104 = vpop.f32.mrf.mxu0
          %1105 = vdwg.mxu0
          %v1106 = vpack.c.bf16 %v1103, %v1090
          %v1108 = vrot.slane %v1106, 3
          %vm1109 = vcmask 1040384
          %v1112 = vsel %vm1109, %v1106, %v1108
          %vm1114 = vcmask 1041409
          %v1115 = vsel %vm1114, %v1106, %v1108
          %v1117 = vrot.slane %v1115, 1
          %vm1118 = vcmask 1042434
          %v1119 = vsel %vm1118, %v1106, %v1108
          %v1121 = vrot.slane %v1119, 2
          %vm1122 = vcmask 1043459
          %v1123 = vsel %vm1122, %v1106, %v1108
          %v1125 = vrot.slane %v1123, 3
          %v1126 = vunpack.i.l.s16 %v1112
          %v1127 = vunpack.i.h.s16 %v1112
          %v1128 = vunpack.i.l.s16 %v1117
          %v1129 = vunpack.i.h.s16 %v1117
          %v1130 = vunpack.i.l.s16 %v1121
          %v1131 = vunpack.i.h.s16 %v1121
          %v1132 = vunpack.i.l.s16 %v1125
          %v1133 = vunpack.i.h.s16 %v1125
          %v1134 = vpack.i.b16 %v1126, %v1126
          %v1135 = vpack.i.b16 %v1127, %v1127
          %v1136 = vpack.i.b16 %v1128, %v1128
          %v1137 = vpack.i.b16 %v1129, %v1129
          %v1138 = vpack.i.b16 %v1130, %v1130
          %v1139 = vpack.i.b16 %v1131, %v1131
          %v1140 = vpack.i.b16 %v1132, %v1132
          %v1141 = vpack.i.b16 %v1133, %v1133
          %v1143 = vunpack.c.l.s4 286326784
          %v1144 = vunpack.c.0.s8 %v1143
          %v1145 = vperm.slane %v1134, %v1144
          %v1147 = vunpack.c.l.s4 286326784
          %v1148 = vunpack.c.0.s8 %v1147
          %v1149 = vperm.slane %v1135, %v1148
          %v1151 = vunpack.c.l.s4 286326784
          %v1152 = vunpack.c.0.s8 %v1151
          %v1153 = vperm.slane %v1136, %v1152
          %v1155 = vunpack.c.l.s4 286326784
          %v1156 = vunpack.c.0.s8 %v1155
          %v1157 = vperm.slane %v1137, %v1156
          %v1159 = vunpack.c.l.s4 286326784
          %v1160 = vunpack.c.0.s8 %v1159
          %v1161 = vperm.slane %v1138, %v1160
          %v1163 = vunpack.c.l.s4 286326784
          %v1164 = vunpack.c.0.s8 %v1163
          %v1165 = vperm.slane %v1139, %v1164
          %v1167 = vunpack.c.l.s4 286326784
          %v1168 = vunpack.c.0.s8 %v1167
          %v1169 = vperm.slane %v1140, %v1168
          %v1171 = vunpack.c.l.s4 286326784
          %v1172 = vunpack.c.0.s8 %v1171
          %v1173 = vperm.slane %v1141, %v1172
          %vm1182 = vcmask 1040384
          %vm1183 = vsmask.f32 256
          %vm1184 = vmand %vm1182, %vm1183
          %vm1185 = vcmask 1044484
          %vm1186 = vsmask.f32 4352
          %vm1187 = vmand %vm1185, %vm1186
          %vm1188 = vmor %vm1187, %vm1184
          %v1189 = vld [vmem:[#allocation2] sm:$0x11]
          %v1190 = vsel %vm1188, %v1145, %v1189
          %1191 = vst [vmem:[#allocation2] sm:$0x11] %v1190
          %v1192 = vld [vmem:[#allocation2 + $0x18] sm:$0x11]
          %v1193 = vsel %vm1188, %v1149, %v1192
          %1194 = vst [vmem:[#allocation2 + $0x18] sm:$0x11] %v1193
          %v1195 = vld [vmem:[#allocation2 + $0x30] sm:$0x11]
          %v1196 = vsel %vm1188, %v1153, %v1195
          %1197 = vst [vmem:[#allocation2 + $0x30] sm:$0x11] %v1196
          %v1198 = vld [vmem:[#allocation2 + $0x48] sm:$0x11]
          %v1199 = vsel %vm1188, %v1157, %v1198
          %1200 = vst [vmem:[#allocation2 + $0x48] sm:$0x11] %v1199
          %v1201 = vld [vmem:[#allocation2 + $0x60] sm:$0x11]
          %v1202 = vsel %vm1188, %v1161, %v1201
          %1203 = vst [vmem:[#allocation2 + $0x60] sm:$0x11] %v1202
          %v1204 = vld [vmem:[#allocation2 + $0x78] sm:$0x11]
          %v1205 = vsel %vm1188, %v1165, %v1204
          %1206 = vst [vmem:[#allocation2 + $0x78] sm:$0x11] %v1205
          %v1207 = vld [vmem:[#allocation2 + $0x90] sm:$0x11]
          %v1208 = vsel %vm1188, %v1169, %v1207
          %1209 = vst [vmem:[#allocation2 + $0x90] sm:$0x11] %v1208
          %v1210 = vld [vmem:[#allocation2 + $0xa8] sm:$0x11]
          %v1211 = vsel %vm1188, %v1173, %v1210
          %1212 = vst [vmem:[#allocation2 + $0xa8] sm:$0x11] %v1211
          %1214 = vrot.lane.b32.xlu0 %v1065, 112
          %v1215 = vpop.permute.xlu0 %1214
          %v1217 = vsel %vm1076, %v1215, 0
          %1219 = vmatpush.bf16.msra.mxu0 0
          %1220 = vmatpush.bf16.msra.mxu0 0
          %1221 = vmatpush.bf16.msra.mxu0 0
          %1222 = vmatpush.bf16.msra.mxu0 0
          %1223 = vmatpush.bf16.msra.mxu0 0
          %1224 = vmatpush.bf16.msra.mxu0 0
          %1225 = vmatpush.bf16.msra.mxu0 0
          %1226 = vmatpush.bf16.msra.mxu0 %v1072
          %1227 = vmatmul.bf16.gmra.mxu0 %v1217
          %v1228 = vpop.f32.mrf.mxu0
          %v1229 = vadd.f32 0.0, %v1228
          %v1230 = vpop.f32.mrf.mxu0
          %1231 = vdwg.mxu0
          %1232 = vmatpush.bf16.msra.mxu0 0
          %1233 = vmatpush.bf16.msra.mxu0 0
          %1234 = vmatpush.bf16.msra.mxu0 0
          %1235 = vmatpush.bf16.msra.mxu0 0
          %1236 = vmatpush.bf16.msra.mxu0 0
          %1237 = vmatpush.bf16.msra.mxu0 0
          %1238 = vmatpush.bf16.msra.mxu0 0
          %1239 = vmatpush.bf16.msra.mxu0 %v1073
          %1240 = vmatmul.bf16.gmra.mxu0 %v1217
          %v1241 = vpop.f32.mrf.mxu0
          %v1242 = vadd.f32 0.0, %v1241
          %v1243 = vpop.f32.mrf.mxu0
          %1244 = vdwg.mxu0
          %v1245 = vpack.c.bf16 %v1242, %v1229
          %v1247 = vrot.slane %v1245, 3
          %v1250 = vsel %vm1109, %v1245, %v1247
          %v1252 = vsel %vm1114, %v1245, %v1247
          %v1254 = vrot.slane %v1252, 1
          %v1255 = vsel %vm1118, %v1245, %v1247
          %v1257 = vrot.slane %v1255, 2
          %v1258 = vsel %vm1122, %v1245, %v1247
          %v1260 = vrot.slane %v1258, 3
          %v1261 = vunpack.i.l.s16 %v1250
          %v1262 = vunpack.i.h.s16 %v1250
          %v1263 = vunpack.i.l.s16 %v1254
          %v1264 = vunpack.i.h.s16 %v1254
          %v1265 = vunpack.i.l.s16 %v1257
          %v1266 = vunpack.i.h.s16 %v1257
          %v1267 = vunpack.i.l.s16 %v1260
          %v1268 = vunpack.i.h.s16 %v1260
          %v1269 = vpack.i.b16 %v1261, %v1261
          %v1270 = vpack.i.b16 %v1262, %v1262
          %v1271 = vpack.i.b16 %v1263, %v1263
          %v1272 = vpack.i.b16 %v1264, %v1264
          %v1273 = vpack.i.b16 %v1265, %v1265
          %v1274 = vpack.i.b16 %v1266, %v1266
          %v1275 = vpack.i.b16 %v1267, %v1267
          %v1276 = vpack.i.b16 %v1268, %v1268
          %v1278 = vunpack.c.l.s4 286326784
          %v1279 = vunpack.c.0.s8 %v1278
          %v1280 = vperm.slane %v1269, %v1279
          %v1282 = vunpack.c.l.s4 286326784
          %v1283 = vunpack.c.0.s8 %v1282
          %v1284 = vperm.slane %v1270, %v1283
          %v1286 = vunpack.c.l.s4 286326784
          %v1287 = vunpack.c.0.s8 %v1286
          %v1288 = vperm.slane %v1271, %v1287
          %v1290 = vunpack.c.l.s4 286326784
          %v1291 = vunpack.c.0.s8 %v1290
          %v1292 = vperm.slane %v1272, %v1291
          %v1294 = vunpack.c.l.s4 286326784
          %v1295 = vunpack.c.0.s8 %v1294
          %v1296 = vperm.slane %v1273, %v1295
          %v1298 = vunpack.c.l.s4 286326784
          %v1299 = vunpack.c.0.s8 %v1298
          %v1300 = vperm.slane %v1274, %v1299
          %v1302 = vunpack.c.l.s4 286326784
          %v1303 = vunpack.c.0.s8 %v1302
          %v1304 = vperm.slane %v1275, %v1303
          %v1306 = vunpack.c.l.s4 286326784
          %v1307 = vunpack.c.0.s8 %v1306
          %v1308 = vperm.slane %v1276, %v1307
          %vm1317 = vsmask.f32 7938
          %vm1318 = vmand %vm1182, %vm1317
          %vm1319 = vsmask.f32 7954
          %vm1320 = vmand %vm1185, %vm1319
          %vm1321 = vmor %vm1320, %vm1318
          %v1322 = vld [vmem:[#allocation2] sm:$0x11]
          %v1323 = vsel %vm1321, %v1280, %v1322
          %1324 = vst [vmem:[#allocation2] sm:$0x11] %v1323
          %v1325 = vld [vmem:[#allocation2 + $0x18] sm:$0x11]
          %v1326 = vsel %vm1321, %v1284, %v1325
          %1327 = vst [vmem:[#allocation2 + $0x18] sm:$0x11] %v1326
          %v1328 = vld [vmem:[#allocation2 + $0x30] sm:$0x11]
          %v1329 = vsel %vm1321, %v1288, %v1328
          %1330 = vst [vmem:[#allocation2 + $0x30] sm:$0x11] %v1329
          %v1331 = vld [vmem:[#allocation2 + $0x48] sm:$0x11]
          %v1332 = vsel %vm1321, %v1292, %v1331
          %1333 = vst [vmem:[#allocation2 + $0x48] sm:$0x11] %v1332
          %v1334 = vld [vmem:[#allocation2 + $0x60] sm:$0x11]
          %v1335 = vsel %vm1321, %v1296, %v1334
          %1336 = vst [vmem:[#allocation2 + $0x60] sm:$0x11] %v1335
          %v1337 = vld [vmem:[#allocation2 + $0x78] sm:$0x11]
          %v1338 = vsel %vm1321, %v1300, %v1337
          %1339 = vst [vmem:[#allocation2 + $0x78] sm:$0x11] %v1338
          %v1340 = vld [vmem:[#allocation2 + $0x90] sm:$0x11]
          %v1341 = vsel %vm1321, %v1304, %v1340
          %1342 = vst [vmem:[#allocation2 + $0x90] sm:$0x11] %v1341
          %v1343 = vld [vmem:[#allocation2 + $0xa8] sm:$0x11]
          %v1344 = vsel %vm1321, %v1308, %v1343
          %1345 = vst [vmem:[#allocation2 + $0xa8] sm:$0x11] %v1344
          %1346 = vrot.lane.b32.xlu0 %v1065, 96
          %v1347 = vpop.permute.xlu0 %1346
          %v1349 = vsel %vm1076, %v1347, 0
          %1351 = vmatpush.bf16.msra.mxu0 0
          %1352 = vmatpush.bf16.msra.mxu0 0
          %1353 = vmatpush.bf16.msra.mxu0 0
          %1354 = vmatpush.bf16.msra.mxu0 0
          %1355 = vmatpush.bf16.msra.mxu0 0
          %1356 = vmatpush.bf16.msra.mxu0 0
          %1357 = vmatpush.bf16.msra.mxu0 0
          %1358 = vmatpush.bf16.msra.mxu0 %v1072
          %1359 = vmatmul.bf16.gmra.mxu0 %v1349
          %v1360 = vpop.f32.mrf.mxu0
          %v1361 = vadd.f32 0.0, %v1360
          %v1362 = vpop.f32.mrf.mxu0
          %1363 = vdwg.mxu0
          %1364 = vmatpush.bf16.msra.mxu0 0
          %1365 = vmatpush.bf16.msra.mxu0 0
          %1366 = vmatpush.bf16.msra.mxu0 0
          %1367 = vmatpush.bf16.msra.mxu0 0
          %1368 = vmatpush.bf16.msra.mxu0 0
          %1369 = vmatpush.bf16.msra.mxu0 0
          %1370 = vmatpush.bf16.msra.mxu0 0
          %1371 = vmatpush.bf16.msra.mxu0 %v1073
          %1372 = vmatmul.bf16.gmra.mxu0 %v1349
          %v1373 = vpop.f32.mrf.mxu0
          %v1374 = vadd.f32 0.0, %v1373
          %v1375 = vpop.f32.mrf.mxu0
          %1376 = vdwg.mxu0
          %v1377 = vpack.c.bf16 %v1374, %v1361
          %v1379 = vrot.slane %v1377, 3
          %v1382 = vsel %vm1109, %v1377, %v1379
          %v1384 = vsel %vm1114, %v1377, %v1379
          %v1386 = vrot.slane %v1384, 1
          %v1387 = vsel %vm1118, %v1377, %v1379
          %v1389 = vrot.slane %v1387, 2
          %v1390 = vsel %vm1122, %v1377, %v1379
          %v1392 = vrot.slane %v1390, 3
          %v1393 = vunpack.i.l.s16 %v1382
          %v1394 = vunpack.i.h.s16 %v1382
          %v1395 = vunpack.i.l.s16 %v1386
          %v1396 = vunpack.i.h.s16 %v1386
          %v1397 = vunpack.i.l.s16 %v1389
          %v1398 = vunpack.i.h.s16 %v1389
          %v1399 = vunpack.i.l.s16 %v1392
          %v1400 = vunpack.i.h.s16 %v1392
          %v1401 = vpack.i.b16 %v1393, %v1393
          %v1402 = vpack.i.b16 %v1394, %v1394
          %v1403 = vpack.i.b16 %v1395, %v1395
          %v1404 = vpack.i.b16 %v1396, %v1396
          %v1405 = vpack.i.b16 %v1397, %v1397
          %v1406 = vpack.i.b16 %v1398, %v1398
          %v1407 = vpack.i.b16 %v1399, %v1399
          %v1408 = vpack.i.b16 %v1400, %v1400
          %v1410 = vunpack.c.l.s4 286326784
          %v1411 = vunpack.c.0.s8 %v1410
          %v1412 = vperm.slane %v1401, %v1411
          %v1414 = vunpack.c.l.s4 286326784
          %v1415 = vunpack.c.0.s8 %v1414
          %v1416 = vperm.slane %v1402, %v1415
          %v1418 = vunpack.c.l.s4 286326784
          %v1419 = vunpack.c.0.s8 %v1418
          %v1420 = vperm.slane %v1403, %v1419
          %v1422 = vunpack.c.l.s4 286326784
          %v1423 = vunpack.c.0.s8 %v1422
          %v1424 = vperm.slane %v1404, %v1423
          %v1426 = vunpack.c.l.s4 286326784
          %v1427 = vunpack.c.0.s8 %v1426
          %v1428 = vperm.slane %v1405, %v1427
          %v1430 = vunpack.c.l.s4 286326784
          %v1431 = vunpack.c.0.s8 %v1430
          %v1432 = vperm.slane %v1406, %v1431
          %v1434 = vunpack.c.l.s4 286326784
          %v1435 = vunpack.c.0.s8 %v1434
          %v1436 = vperm.slane %v1407, %v1435
          %v1438 = vunpack.c.l.s4 286326784
          %v1439 = vunpack.c.0.s8 %v1438
          %v1440 = vperm.slane %v1408, %v1439
          %vm1449 = vcmask 1041409
          %vm1450 = vsmask.f32 1280
          %vm1451 = vmand %vm1449, %vm1450
          %vm1452 = vcmask 1045509
          %vm1453 = vsmask.f32 5376
          %vm1454 = vmand %vm1452, %vm1453
          %vm1455 = vmor %vm1454, %vm1451
          %v1456 = vld [vmem:[#allocation2] sm:$0x22]
          %v1457 = vsel %vm1455, %v1412, %v1456
          %1458 = vst [vmem:[#allocation2] sm:$0x22] %v1457
          %v1459 = vld [vmem:[#allocation2 + $0x18] sm:$0x22]
          %v1460 = vsel %vm1455, %v1416, %v1459
          %1461 = vst [vmem:[#allocation2 + $0x18] sm:$0x22] %v1460
          %v1462 = vld [vmem:[#allocation2 + $0x30] sm:$0x22]
          %v1463 = vsel %vm1455, %v1420, %v1462
          %1464 = vst [vmem:[#allocation2 + $0x30] sm:$0x22] %v1463
          %v1465 = vld [vmem:[#allocation2 + $0x48] sm:$0x22]
          %v1466 = vsel %vm1455, %v1424, %v1465
          %1467 = vst [vmem:[#allocation2 + $0x48] sm:$0x22] %v1466
          %v1468 = vld [vmem:[#allocation2 + $0x60] sm:$0x22]
          %v1469 = vsel %vm1455, %v1428, %v1468
          %1470 = vst [vmem:[#allocation2 + $0x60] sm:$0x22] %v1469
          %v1471 = vld [vmem:[#allocation2 + $0x78] sm:$0x22]
          %v1472 = vsel %vm1455, %v1432, %v1471
          %1473 = vst [vmem:[#allocation2 + $0x78] sm:$0x22] %v1472
          %v1474 = vld [vmem:[#allocation2 + $0x90] sm:$0x22]
          %v1475 = vsel %vm1455, %v1436, %v1474
          %1476 = vst [vmem:[#allocation2 + $0x90] sm:$0x22] %v1475
          %v1477 = vld [vmem:[#allocation2 + $0xa8] sm:$0x22]
          %v1478 = vsel %vm1455, %v1440, %v1477
          %1479 = vst [vmem:[#allocation2 + $0xa8] sm:$0x22] %v1478
          %1480 = vrot.lane.b32.xlu0 %v1065, 80
          %v1481 = vpop.permute.xlu0 %1480
          %v1483 = vsel %vm1076, %v1481, 0
          %1485 = vmatpush.bf16.msra.mxu0 0
          %1486 = vmatpush.bf16.msra.mxu0 0
          %1487 = vmatpush.bf16.msra.mxu0 0
          %1488 = vmatpush.bf16.msra.mxu0 0
          %1489 = vmatpush.bf16.msra.mxu0 0
          %1490 = vmatpush.bf16.msra.mxu0 0
          %1491 = vmatpush.bf16.msra.mxu0 0
          %1492 = vmatpush.bf16.msra.mxu0 %v1072
          %1493 = vmatmul.bf16.gmra.mxu0 %v1483
          %v1494 = vpop.f32.mrf.mxu0
          %v1495 = vadd.f32 0.0, %v1494
          %v1496 = vpop.f32.mrf.mxu0
          %1497 = vdwg.mxu0
          %1498 = vmatpush.bf16.msra.mxu0 0
          %1499 = vmatpush.bf16.msra.mxu0 0
          %1500 = vmatpush.bf16.msra.mxu0 0
          %1501 = vmatpush.bf16.msra.mxu0 0
          %1502 = vmatpush.bf16.msra.mxu0 0
          %1503 = vmatpush.bf16.msra.mxu0 0
          %1504 = vmatpush.bf16.msra.mxu0 0
          %1505 = vmatpush.bf16.msra.mxu0 %v1073
          %1506 = vmatmul.bf16.gmra.mxu0 %v1483
          %v1507 = vpop.f32.mrf.mxu0
          %v1508 = vadd.f32 0.0, %v1507
          %v1509 = vpop.f32.mrf.mxu0
          %1510 = vdwg.mxu0
          %v1511 = vpack.c.bf16 %v1508, %v1495
          %v1513 = vrot.slane %v1511, 3
          %v1516 = vsel %vm1109, %v1511, %v1513
          %v1518 = vsel %vm1114, %v1511, %v1513
          %v1520 = vrot.slane %v1518, 1
          %v1521 = vsel %vm1118, %v1511, %v1513
          %v1523 = vrot.slane %v1521, 2
          %v1524 = vsel %vm1122, %v1511, %v1513
          %v1526 = vrot.slane %v1524, 3
          %v1527 = vunpack.i.l.s16 %v1516
          %v1528 = vunpack.i.h.s16 %v1516
          %v1529 = vunpack.i.l.s16 %v1520
          %v1530 = vunpack.i.h.s16 %v1520
          %v1531 = vunpack.i.l.s16 %v1523
          %v1532 = vunpack.i.h.s16 %v1523
          %v1533 = vunpack.i.l.s16 %v1526
          %v1534 = vunpack.i.h.s16 %v1526
          %v1535 = vpack.i.b16 %v1527, %v1527
          %v1536 = vpack.i.b16 %v1528, %v1528
          %v1537 = vpack.i.b16 %v1529, %v1529
          %v1538 = vpack.i.b16 %v1530, %v1530
          %v1539 = vpack.i.b16 %v1531, %v1531
          %v1540 = vpack.i.b16 %v1532, %v1532
          %v1541 = vpack.i.b16 %v1533, %v1533
          %v1542 = vpack.i.b16 %v1534, %v1534
          %v1544 = vunpack.c.l.s4 286326784
          %v1545 = vunpack.c.0.s8 %v1544
          %v1546 = vperm.slane %v1535, %v1545
          %v1548 = vunpack.c.l.s4 286326784
          %v1549 = vunpack.c.0.s8 %v1548
          %v1550 = vperm.slane %v1536, %v1549
          %v1552 = vunpack.c.l.s4 286326784
          %v1553 = vunpack.c.0.s8 %v1552
          %v1554 = vperm.slane %v1537, %v1553
          %v1556 = vunpack.c.l.s4 286326784
          %v1557 = vunpack.c.0.s8 %v1556
          %v1558 = vperm.slane %v1538, %v1557
          %v1560 = vunpack.c.l.s4 286326784
          %v1561 = vunpack.c.0.s8 %v1560
          %v1562 = vperm.slane %v1539, %v1561
          %v1564 = vunpack.c.l.s4 286326784
          %v1565 = vunpack.c.0.s8 %v1564
          %v1566 = vperm.slane %v1540, %v1565
          %v1568 = vunpack.c.l.s4 286326784
          %v1569 = vunpack.c.0.s8 %v1568
          %v1570 = vperm.slane %v1541, %v1569
          %v1572 = vunpack.c.l.s4 286326784
          %v1573 = vunpack.c.0.s8 %v1572
          %v1574 = vperm.slane %v1542, %v1573
          %vm1583 = vsmask.f32 7942
          %vm1584 = vmand %vm1449, %vm1583
          %vm1585 = vsmask.f32 7958
          %vm1586 = vmand %vm1452, %vm1585
          %vm1587 = vmor %vm1586, %vm1584
          %v1588 = vld [vmem:[#allocation2] sm:$0x22]
          %v1589 = vsel %vm1587, %v1546, %v1588
          %1590 = vst [vmem:[#allocation2] sm:$0x22] %v1589
          %v1591 = vld [vmem:[#allocation2 + $0x18] sm:$0x22]
          %v1592 = vsel %vm1587, %v1550, %v1591
          %1593 = vst [vmem:[#allocation2 + $0x18] sm:$0x22] %v1592
          %v1594 = vld [vmem:[#allocation2 + $0x30] sm:$0x22]
          %v1595 = vsel %vm1587, %v1554, %v1594
          %1596 = vst [vmem:[#allocation2 + $0x30] sm:$0x22] %v1595
          %v1597 = vld [vmem:[#allocation2 + $0x48] sm:$0x22]
          %v1598 = vsel %vm1587, %v1558, %v1597
          %1599 = vst [vmem:[#allocation2 + $0x48] sm:$0x22] %v1598
          %v1600 = vld [vmem:[#allocation2 + $0x60] sm:$0x22]
          %v1601 = vsel %vm1587, %v1562, %v1600
          %1602 = vst [vmem:[#allocation2 + $0x60] sm:$0x22] %v1601
          %v1603 = vld [vmem:[#allocation2 + $0x78] sm:$0x22]
          %v1604 = vsel %vm1587, %v1566, %v1603
          %1605 = vst [vmem:[#allocation2 + $0x78] sm:$0x22] %v1604
          %v1606 = vld [vmem:[#allocation2 + $0x90] sm:$0x22]
          %v1607 = vsel %vm1587, %v1570, %v1606
          %1608 = vst [vmem:[#allocation2 + $0x90] sm:$0x22] %v1607
          %v1609 = vld [vmem:[#allocation2 + $0xa8] sm:$0x22]
          %v1610 = vsel %vm1587, %v1574, %v1609
          %1611 = vst [vmem:[#allocation2 + $0xa8] sm:$0x22] %v1610
          %1612 = vrot.lane.b32.xlu0 %v1065, 64
          %v1613 = vpop.permute.xlu0 %1612
          %v1615 = vsel %vm1076, %v1613, 0
          %1617 = vmatpush.bf16.msra.mxu0 0
          %1618 = vmatpush.bf16.msra.mxu0 0
          %1619 = vmatpush.bf16.msra.mxu0 0
          %1620 = vmatpush.bf16.msra.mxu0 0
          %1621 = vmatpush.bf16.msra.mxu0 0
          %1622 = vmatpush.bf16.msra.mxu0 0
          %1623 = vmatpush.bf16.msra.mxu0 0
          %1624 = vmatpush.bf16.msra.mxu0 %v1072
          %1625 = vmatmul.bf16.gmra.mxu0 %v1615
          %v1626 = vpop.f32.mrf.mxu0
          %v1627 = vadd.f32 0.0, %v1626
          %v1628 = vpop.f32.mrf.mxu0
          %1629 = vdwg.mxu0
          %1630 = vmatpush.bf16.msra.mxu0 0
          %1631 = vmatpush.bf16.msra.mxu0 0
          %1632 = vmatpush.bf16.msra.mxu0 0
          %1633 = vmatpush.bf16.msra.mxu0 0
          %1634 = vmatpush.bf16.msra.mxu0 0
          %1635 = vmatpush.bf16.msra.mxu0 0
          %1636 = vmatpush.bf16.msra.mxu0 0
          %1637 = vmatpush.bf16.msra.mxu0 %v1073
          %1638 = vmatmul.bf16.gmra.mxu0 %v1615
          %v1639 = vpop.f32.mrf.mxu0
          %v1640 = vadd.f32 0.0, %v1639
          %v1641 = vpop.f32.mrf.mxu0
          %1642 = vdwg.mxu0
          %v1643 = vpack.c.bf16 %v1640, %v1627
          %v1645 = vrot.slane %v1643, 3
          %v1648 = vsel %vm1109, %v1643, %v1645
          %v1650 = vsel %vm1114, %v1643, %v1645
          %v1652 = vrot.slane %v1650, 1
          %v1653 = vsel %vm1118, %v1643, %v1645
          %v1655 = vrot.slane %v1653, 2
          %v1656 = vsel %vm1122, %v1643, %v1645
          %v1658 = vrot.slane %v1656, 3
          %v1659 = vunpack.i.l.s16 %v1648
          %v1660 = vunpack.i.h.s16 %v1648
          %v1661 = vunpack.i.l.s16 %v1652
          %v1662 = vunpack.i.h.s16 %v1652
          %v1663 = vunpack.i.l.s16 %v1655
          %v1664 = vunpack.i.h.s16 %v1655
          %v1665 = vunpack.i.l.s16 %v1658
          %v1666 = vunpack.i.h.s16 %v1658
          %v1667 = vpack.i.b16 %v1659, %v1659
          %v1668 = vpack.i.b16 %v1660, %v1660
          %v1669 = vpack.i.b16 %v1661, %v1661
          %v1670 = vpack.i.b16 %v1662, %v1662
          %v1671 = vpack.i.b16 %v1663, %v1663
          %v1672 = vpack.i.b16 %v1664, %v1664
          %v1673 = vpack.i.b16 %v1665, %v1665
          %v1674 = vpack.i.b16 %v1666, %v1666
          %v1676 = vunpack.c.l.s4 286326784
          %v1677 = vunpack.c.0.s8 %v1676
          %v1678 = vperm.slane %v1667, %v1677
          %v1680 = vunpack.c.l.s4 286326784
          %v1681 = vunpack.c.0.s8 %v1680
          %v1682 = vperm.slane %v1668, %v1681
          %v1684 = vunpack.c.l.s4 286326784
          %v1685 = vunpack.c.0.s8 %v1684
          %v1686 = vperm.slane %v1669, %v1685
          %v1688 = vunpack.c.l.s4 286326784
          %v1689 = vunpack.c.0.s8 %v1688
          %v1690 = vperm.slane %v1670, %v1689
          %v1692 = vunpack.c.l.s4 286326784
          %v1693 = vunpack.c.0.s8 %v1692
          %v1694 = vperm.slane %v1671, %v1693
          %v1696 = vunpack.c.l.s4 286326784
          %v1697 = vunpack.c.0.s8 %v1696
          %v1698 = vperm.slane %v1672, %v1697
          %v1700 = vunpack.c.l.s4 286326784
          %v1701 = vunpack.c.0.s8 %v1700
          %v1702 = vperm.slane %v1673, %v1701
          %v1704 = vunpack.c.l.s4 286326784
          %v1705 = vunpack.c.0.s8 %v1704
          %v1706 = vperm.slane %v1674, %v1705
          %vm1715 = vcmask 1042434
          %vm1716 = vsmask.f32 2304
          %vm1717 = vmand %vm1715, %vm1716
          %vm1718 = vcmask 1046534
          %vm1719 = vsmask.f32 6400
          %vm1720 = vmand %vm1718, %vm1719
          %vm1721 = vmor %vm1720, %vm1717
          %v1722 = vld [vmem:[#allocation2] sm:$0x44]
          %v1723 = vsel %vm1721, %v1678, %v1722
          %1724 = vst [vmem:[#allocation2] sm:$0x44] %v1723
          %v1725 = vld [vmem:[#allocation2 + $0x18] sm:$0x44]
          %v1726 = vsel %vm1721, %v1682, %v1725
          %1727 = vst [vmem:[#allocation2 + $0x18] sm:$0x44] %v1726
          %v1728 = vld [vmem:[#allocation2 + $0x30] sm:$0x44]
          %v1729 = vsel %vm1721, %v1686, %v1728
          %1730 = vst [vmem:[#allocation2 + $0x30] sm:$0x44] %v1729
          %v1731 = vld [vmem:[#allocation2 + $0x48] sm:$0x44]
          %v1732 = vsel %vm1721, %v1690, %v1731
          %1733 = vst [vmem:[#allocation2 + $0x48] sm:$0x44] %v1732
          %v1734 = vld [vmem:[#allocation2 + $0x60] sm:$0x44]
          %v1735 = vsel %vm1721, %v1694, %v1734
          %1736 = vst [vmem:[#allocation2 + $0x60] sm:$0x44] %v1735
          %v1737 = vld [vmem:[#allocation2 + $0x78] sm:$0x44]
          %v1738 = vsel %vm1721, %v1698, %v1737
          %1739 = vst [vmem:[#allocation2 + $0x78] sm:$0x44] %v1738
          %v1740 = vld [vmem:[#allocation2 + $0x90] sm:$0x44]
          %v1741 = vsel %vm1721, %v1702, %v1740
          %1742 = vst [vmem:[#allocation2 + $0x90] sm:$0x44] %v1741
          %v1743 = vld [vmem:[#allocation2 + $0xa8] sm:$0x44]
          %v1744 = vsel %vm1721, %v1706, %v1743
          %1745 = vst [vmem:[#allocation2 + $0xa8] sm:$0x44] %v1744
          %1746 = vrot.lane.b32.xlu0 %v1065, 48
          %v1747 = vpop.permute.xlu0 %1746
          %v1749 = vsel %vm1076, %v1747, 0
          %1751 = vmatpush.bf16.msra.mxu0 0
          %1752 = vmatpush.bf16.msra.mxu0 0
          %1753 = vmatpush.bf16.msra.mxu0 0
          %1754 = vmatpush.bf16.msra.mxu0 0
          %1755 = vmatpush.bf16.msra.mxu0 0
          %1756 = vmatpush.bf16.msra.mxu0 0
          %1757 = vmatpush.bf16.msra.mxu0 0
          %1758 = vmatpush.bf16.msra.mxu0 %v1072
          %1759 = vmatmul.bf16.gmra.mxu0 %v1749
          %v1760 = vpop.f32.mrf.mxu0
          %v1761 = vadd.f32 0.0, %v1760
          %v1762 = vpop.f32.mrf.mxu0
          %1763 = vdwg.mxu0
          %1764 = vmatpush.bf16.msra.mxu0 0
          %1765 = vmatpush.bf16.msra.mxu0 0
          %1766 = vmatpush.bf16.msra.mxu0 0
          %1767 = vmatpush.bf16.msra.mxu0 0
          %1768 = vmatpush.bf16.msra.mxu0 0
          %1769 = vmatpush.bf16.msra.mxu0 0
          %1770 = vmatpush.bf16.msra.mxu0 0
          %1771 = vmatpush.bf16.msra.mxu0 %v1073
          %1772 = vmatmul.bf16.gmra.mxu0 %v1749
          %v1773 = vpop.f32.mrf.mxu0
          %v1774 = vadd.f32 0.0, %v1773
          %v1775 = vpop.f32.mrf.mxu0
          %1776 = vdwg.mxu0
          %v1777 = vpack.c.bf16 %v1774, %v1761
          %v1779 = vrot.slane %v1777, 3
          %v1782 = vsel %vm1109, %v1777, %v1779
          %v1784 = vsel %vm1114, %v1777, %v1779
          %v1786 = vrot.slane %v1784, 1
          %v1787 = vsel %vm1118, %v1777, %v1779
          %v1789 = vrot.slane %v1787, 2
          %v1790 = vsel %vm1122, %v1777, %v1779
          %v1792 = vrot.slane %v1790, 3
          %v1793 = vunpack.i.l.s16 %v1782
          %v1794 = vunpack.i.h.s16 %v1782
          %v1795 = vunpack.i.l.s16 %v1786
          %v1796 = vunpack.i.h.s16 %v1786
          %v1797 = vunpack.i.l.s16 %v1789
          %v1798 = vunpack.i.h.s16 %v1789
          %v1799 = vunpack.i.l.s16 %v1792
          %v1800 = vunpack.i.h.s16 %v1792
          %v1801 = vpack.i.b16 %v1793, %v1793
          %v1802 = vpack.i.b16 %v1794, %v1794
          %v1803 = vpack.i.b16 %v1795, %v1795
          %v1804 = vpack.i.b16 %v1796, %v1796
          %v1805 = vpack.i.b16 %v1797, %v1797
          %v1806 = vpack.i.b16 %v1798, %v1798
          %v1807 = vpack.i.b16 %v1799, %v1799
          %v1808 = vpack.i.b16 %v1800, %v1800
          %v1810 = vunpack.c.l.s4 286326784
          %v1811 = vunpack.c.0.s8 %v1810
          %v1812 = vperm.slane %v1801, %v1811
          %v1814 = vunpack.c.l.s4 286326784
          %v1815 = vunpack.c.0.s8 %v1814
          %v1816 = vperm.slane %v1802, %v1815
          %v1818 = vunpack.c.l.s4 286326784
          %v1819 = vunpack.c.0.s8 %v1818
          %v1820 = vperm.slane %v1803, %v1819
          %v1822 = vunpack.c.l.s4 286326784
          %v1823 = vunpack.c.0.s8 %v1822
          %v1824 = vperm.slane %v1804, %v1823
          %v1826 = vunpack.c.l.s4 286326784
          %v1827 = vunpack.c.0.s8 %v1826
          %v1828 = vperm.slane %v1805, %v1827
          %v1830 = vunpack.c.l.s4 286326784
          %v1831 = vunpack.c.0.s8 %v1830
          %v1832 = vperm.slane %v1806, %v1831
          %v1834 = vunpack.c.l.s4 286326784
          %v1835 = vunpack.c.0.s8 %v1834
          %v1836 = vperm.slane %v1807, %v1835
          %v1838 = vunpack.c.l.s4 286326784
          %v1839 = vunpack.c.0.s8 %v1838
          %v1840 = vperm.slane %v1808, %v1839
          %vm1849 = vsmask.f32 7946
          %vm1850 = vmand %vm1715, %vm1849
          %vm1851 = vsmask.f32 7962
          %vm1852 = vmand %vm1718, %vm1851
          %vm1853 = vmor %vm1852, %vm1850
          %v1854 = vld [vmem:[#allocation2] sm:$0x44]
          %v1855 = vsel %vm1853, %v1812, %v1854
          %1856 = vst [vmem:[#allocation2] sm:$0x44] %v1855
          %v1857 = vld [vmem:[#allocation2 + $0x18] sm:$0x44]
          %v1858 = vsel %vm1853, %v1816, %v1857
          %1859 = vst [vmem:[#allocation2 + $0x18] sm:$0x44] %v1858
          %v1860 = vld [vmem:[#allocation2 + $0x30] sm:$0x44]
          %v1861 = vsel %vm1853, %v1820, %v1860
          %1862 = vst [vmem:[#allocation2 + $0x30] sm:$0x44] %v1861
          %v1863 = vld [vmem:[#allocation2 + $0x48] sm:$0x44]
          %v1864 = vsel %vm1853, %v1824, %v1863
          %1865 = vst [vmem:[#allocation2 + $0x48] sm:$0x44] %v1864
          %v1866 = vld [vmem:[#allocation2 + $0x60] sm:$0x44]
          %v1867 = vsel %vm1853, %v1828, %v1866
          %1868 = vst [vmem:[#allocation2 + $0x60] sm:$0x44] %v1867
          %v1869 = vld [vmem:[#allocation2 + $0x78] sm:$0x44]
          %v1870 = vsel %vm1853, %v1832, %v1869
          %1871 = vst [vmem:[#allocation2 + $0x78] sm:$0x44] %v1870
          %v1872 = vld [vmem:[#allocation2 + $0x90] sm:$0x44]
          %v1873 = vsel %vm1853, %v1836, %v1872
          %1874 = vst [vmem:[#allocation2 + $0x90] sm:$0x44] %v1873
          %v1875 = vld [vmem:[#allocation2 + $0xa8] sm:$0x44]
          %v1876 = vsel %vm1853, %v1840, %v1875
          %1877 = vst [vmem:[#allocation2 + $0xa8] sm:$0x44] %v1876
          %1878 = vrot.lane.b32.xlu0 %v1065, 32
          %v1879 = vpop.permute.xlu0 %1878
          %v1881 = vsel %vm1076, %v1879, 0
          %1883 = vmatpush.bf16.msra.mxu0 0
          %1884 = vmatpush.bf16.msra.mxu0 0
          %1885 = vmatpush.bf16.msra.mxu0 0
          %1886 = vmatpush.bf16.msra.mxu0 0
          %1887 = vmatpush.bf16.msra.mxu0 0
          %1888 = vmatpush.bf16.msra.mxu0 0
          %1889 = vmatpush.bf16.msra.mxu0 0
          %1890 = vmatpush.bf16.msra.mxu0 %v1072
          %1891 = vmatmul.bf16.gmra.mxu0 %v1881
          %v1892 = vpop.f32.mrf.mxu0
          %v1893 = vadd.f32 0.0, %v1892
          %v1894 = vpop.f32.mrf.mxu0
          %1895 = vdwg.mxu0
          %1896 = vmatpush.bf16.msra.mxu0 0
          %1897 = vmatpush.bf16.msra.mxu0 0
          %1898 = vmatpush.bf16.msra.mxu0 0
          %1899 = vmatpush.bf16.msra.mxu0 0
          %1900 = vmatpush.bf16.msra.mxu0 0
          %1901 = vmatpush.bf16.msra.mxu0 0
          %1902 = vmatpush.bf16.msra.mxu0 0
          %1903 = vmatpush.bf16.msra.mxu0 %v1073
          %1904 = vmatmul.bf16.gmra.mxu0 %v1881
          %v1905 = vpop.f32.mrf.mxu0
          %v1906 = vadd.f32 0.0, %v1905
          %v1907 = vpop.f32.mrf.mxu0
          %1908 = vdwg.mxu0
          %v1909 = vpack.c.bf16 %v1906, %v1893
          %v1911 = vrot.slane %v1909, 3
          %v1914 = vsel %vm1109, %v1909, %v1911
          %v1916 = vsel %vm1114, %v1909, %v1911
          %v1918 = vrot.slane %v1916, 1
          %v1919 = vsel %vm1118, %v1909, %v1911
          %v1921 = vrot.slane %v1919, 2
          %v1922 = vsel %vm1122, %v1909, %v1911
          %v1924 = vrot.slane %v1922, 3
          %v1925 = vunpack.i.l.s16 %v1914
          %v1926 = vunpack.i.h.s16 %v1914
          %v1927 = vunpack.i.l.s16 %v1918
          %v1928 = vunpack.i.h.s16 %v1918
          %v1929 = vunpack.i.l.s16 %v1921
          %v1930 = vunpack.i.h.s16 %v1921
          %v1931 = vunpack.i.l.s16 %v1924
          %v1932 = vunpack.i.h.s16 %v1924
          %v1933 = vpack.i.b16 %v1925, %v1925
          %v1934 = vpack.i.b16 %v1926, %v1926
          %v1935 = vpack.i.b16 %v1927, %v1927
          %v1936 = vpack.i.b16 %v1928, %v1928
          %v1937 = vpack.i.b16 %v1929, %v1929
          %v1938 = vpack.i.b16 %v1930, %v1930
          %v1939 = vpack.i.b16 %v1931, %v1931
          %v1940 = vpack.i.b16 %v1932, %v1932
          %v1942 = vunpack.c.l.s4 286326784
          %v1943 = vunpack.c.0.s8 %v1942
          %v1944 = vperm.slane %v1933, %v1943
          %v1946 = vunpack.c.l.s4 286326784
          %v1947 = vunpack.c.0.s8 %v1946
          %v1948 = vperm.slane %v1934, %v1947
          %v1950 = vunpack.c.l.s4 286326784
          %v1951 = vunpack.c.0.s8 %v1950
          %v1952 = vperm.slane %v1935, %v1951
          %v1954 = vunpack.c.l.s4 286326784
          %v1955 = vunpack.c.0.s8 %v1954
          %v1956 = vperm.slane %v1936, %v1955
          %v1958 = vunpack.c.l.s4 286326784
          %v1959 = vunpack.c.0.s8 %v1958
          %v1960 = vperm.slane %v1937, %v1959
          %v1962 = vunpack.c.l.s4 286326784
          %v1963 = vunpack.c.0.s8 %v1962
          %v1964 = vperm.slane %v1938, %v1963
          %v1966 = vunpack.c.l.s4 286326784
          %v1967 = vunpack.c.0.s8 %v1966
          %v1968 = vperm.slane %v1939, %v1967
          %v1970 = vunpack.c.l.s4 286326784
          %v1971 = vunpack.c.0.s8 %v1970
          %v1972 = vperm.slane %v1940, %v1971
          %vm1981 = vcmask 1043459
          %vm1982 = vsmask.f32 3328
          %vm1983 = vmand %vm1981, %vm1982
          %vm1984 = vcmask 1047559
          %vm1985 = vsmask.f32 7424
          %vm1986 = vmand %vm1984, %vm1985
          %vm1987 = vmor %vm1986, %vm1983
          %v1988 = vld [vmem:[#allocation2] sm:$0x88]
          %v1989 = vsel %vm1987, %v1944, %v1988
          %1990 = vst [vmem:[#allocation2] sm:$0x88] %v1989
          %v1991 = vld [vmem:[#allocation2 + $0x18] sm:$0x88]
          %v1992 = vsel %vm1987, %v1948, %v1991
          %1993 = vst [vmem:[#allocation2 + $0x18] sm:$0x88] %v1992
          %v1994 = vld [vmem:[#allocation2 + $0x30] sm:$0x88]
          %v1995 = vsel %vm1987, %v1952, %v1994
          %1996 = vst [vmem:[#allocation2 + $0x30] sm:$0x88] %v1995
          %v1997 = vld [vmem:[#allocation2 + $0x48] sm:$0x88]
          %v1998 = vsel %vm1987, %v1956, %v1997
          %1999 = vst [vmem:[#allocation2 + $0x48] sm:$0x88] %v1998
          %v2000 = vld [vmem:[#allocation2 + $0x60] sm:$0x88]
          %v2001 = vsel %vm1987, %v1960, %v2000
          %2002 = vst [vmem:[#allocation2 + $0x60] sm:$0x88] %v2001
          %v2003 = vld [vmem:[#allocation2 + $0x78] sm:$0x88]
          %v2004 = vsel %vm1987, %v1964, %v2003
          %2005 = vst [vmem:[#allocation2 + $0x78] sm:$0x88] %v2004
          %v2006 = vld [vmem:[#allocation2 + $0x90] sm:$0x88]
          %v2007 = vsel %vm1987, %v1968, %v2006
          %2008 = vst [vmem:[#allocation2 + $0x90] sm:$0x88] %v2007
          %v2009 = vld [vmem:[#allocation2 + $0xa8] sm:$0x88]
          %v2010 = vsel %vm1987, %v1972, %v2009
          %2011 = vst [vmem:[#allocation2 + $0xa8] sm:$0x88] %v2010
          %2012 = vrot.lane.b32.xlu0 %v1065, 16
          %v2013 = vpop.permute.xlu0 %2012
          %v2015 = vsel %vm1076, %v2013, 0
          %2017 = vmatpush.bf16.msra.mxu0 0
          %2018 = vmatpush.bf16.msra.mxu0 0
          %2019 = vmatpush.bf16.msra.mxu0 0
          %2020 = vmatpush.bf16.msra.mxu0 0
          %2021 = vmatpush.bf16.msra.mxu0 0
          %2022 = vmatpush.bf16.msra.mxu0 0
          %2023 = vmatpush.bf16.msra.mxu0 0
          %2024 = vmatpush.bf16.msra.mxu0 %v1072
          %2025 = vmatmul.bf16.gmra.mxu0 %v2015
          %v2026 = vpop.f32.mrf.mxu0
          %v2027 = vadd.f32 0.0, %v2026
          %v2028 = vpop.f32.mrf.mxu0
          %2029 = vdwg.mxu0
          %2030 = vmatpush.bf16.msra.mxu0 0
          %2031 = vmatpush.bf16.msra.mxu0 0
          %2032 = vmatpush.bf16.msra.mxu0 0
          %2033 = vmatpush.bf16.msra.mxu0 0
          %2034 = vmatpush.bf16.msra.mxu0 0
          %2035 = vmatpush.bf16.msra.mxu0 0
          %2036 = vmatpush.bf16.msra.mxu0 0
          %2037 = vmatpush.bf16.msra.mxu0 %v1073
          %2038 = vmatmul.bf16.gmra.mxu0 %v2015
          %v2039 = vpop.f32.mrf.mxu0
          %v2040 = vadd.f32 0.0, %v2039
          %v2041 = vpop.f32.mrf.mxu0
          %2042 = vdwg.mxu0
          %v2043 = vpack.c.bf16 %v2040, %v2027
          %v2045 = vrot.slane %v2043, 3
          %v2048 = vsel %vm1109, %v2043, %v2045
          %v2050 = vsel %vm1114, %v2043, %v2045
          %v2052 = vrot.slane %v2050, 1
          %v2053 = vsel %vm1118, %v2043, %v2045
          %v2055 = vrot.slane %v2053, 2
          %v2056 = vsel %vm1122, %v2043, %v2045
          %v2058 = vrot.slane %v2056, 3
          %v2059 = vunpack.i.l.s16 %v2048
          %v2060 = vunpack.i.h.s16 %v2048
          %v2061 = vunpack.i.l.s16 %v2052
          %v2062 = vunpack.i.h.s16 %v2052
          %v2063 = vunpack.i.l.s16 %v2055
          %v2064 = vunpack.i.h.s16 %v2055
          %v2065 = vunpack.i.l.s16 %v2058
          %v2066 = vunpack.i.h.s16 %v2058
          %v2067 = vpack.i.b16 %v2059, %v2059
          %v2068 = vpack.i.b16 %v2060, %v2060
          %v2069 = vpack.i.b16 %v2061, %v2061
          %v2070 = vpack.i.b16 %v2062, %v2062
          %v2071 = vpack.i.b16 %v2063, %v2063
          %v2072 = vpack.i.b16 %v2064, %v2064
          %v2073 = vpack.i.b16 %v2065, %v2065
          %v2074 = vpack.i.b16 %v2066, %v2066
          %v2076 = vunpack.c.l.s4 286326784
          %v2077 = vunpack.c.0.s8 %v2076
          %v2078 = vperm.slane %v2067, %v2077
          %v2080 = vunpack.c.l.s4 286326784
          %v2081 = vunpack.c.0.s8 %v2080
          %v2082 = vperm.slane %v2068, %v2081
          %v2084 = vunpack.c.l.s4 286326784
          %v2085 = vunpack.c.0.s8 %v2084
          %v2086 = vperm.slane %v2069, %v2085
          %v2088 = vunpack.c.l.s4 286326784
          %v2089 = vunpack.c.0.s8 %v2088
          %v2090 = vperm.slane %v2070, %v2089
          %v2092 = vunpack.c.l.s4 286326784
          %v2093 = vunpack.c.0.s8 %v2092
          %v2094 = vperm.slane %v2071, %v2093
          %v2096 = vunpack.c.l.s4 286326784
          %v2097 = vunpack.c.0.s8 %v2096
          %v2098 = vperm.slane %v2072, %v2097
          %v2100 = vunpack.c.l.s4 286326784
          %v2101 = vunpack.c.0.s8 %v2100
          %v2102 = vperm.slane %v2073, %v2101
          %v2104 = vunpack.c.l.s4 286326784
          %v2105 = vunpack.c.0.s8 %v2104
          %v2106 = vperm.slane %v2074, %v2105
          %vm2115 = vsmask.f32 7950
          %vm2116 = vmand %vm1981, %vm2115
          %vm2117 = vsmask.f32 7966
          %vm2118 = vmand %vm1984, %vm2117
          %vm2119 = vmor %vm2118, %vm2116
          %v2120 = vld [vmem:[#allocation2] sm:$0x88]
          %v2121 = vsel %vm2119, %v2078, %v2120
          %2122 = vst [vmem:[#allocation2] sm:$0x88] %v2121
          %v2123 = vld [vmem:[#allocation2 + $0x18] sm:$0x88]
          %v2124 = vsel %vm2119, %v2082, %v2123
          %2125 = vst [vmem:[#allocation2 + $0x18] sm:$0x88] %v2124
          %v2126 = vld [vmem:[#allocation2 + $0x30] sm:$0x88]
          %v2127 = vsel %vm2119, %v2086, %v2126
          %2128 = vst [vmem:[#allocation2 + $0x30] sm:$0x88] %v2127
          %v2129 = vld [vmem:[#allocation2 + $0x48] sm:$0x88]
          %v2130 = vsel %vm2119, %v2090, %v2129
          %2131 = vst [vmem:[#allocation2 + $0x48] sm:$0x88] %v2130
          %v2132 = vld [vmem:[#allocation2 + $0x60] sm:$0x88]
          %v2133 = vsel %vm2119, %v2094, %v2132
          %2134 = vst [vmem:[#allocation2 + $0x60] sm:$0x88] %v2133
          %v2135 = vld [vmem:[#allocation2 + $0x78] sm:$0x88]
          %v2136 = vsel %vm2119, %v2098, %v2135
          %2137 = vst [vmem:[#allocation2 + $0x78] sm:$0x88] %v2136
          %v2138 = vld [vmem:[#allocation2 + $0x90] sm:$0x88]
          %v2139 = vsel %vm2119, %v2102, %v2138
          %2140 = vst [vmem:[#allocation2 + $0x90] sm:$0x88] %v2139
          %v2141 = vld [vmem:[#allocation2 + $0xa8] sm:$0x88]
          %v2142 = vsel %vm2119, %v2106, %v2141
          %2143 = vst [vmem:[#allocation2 + $0xa8] sm:$0x88] %v2142
          %v2144 = vpack.c.bf16 %v730, %v730
          %v2146 = vsel %vm1076, %v2144, 0
          %2148 = vmatpush.bf16.msra.mxu0 0
          %2149 = vmatpush.bf16.msra.mxu0 0
          %2150 = vmatpush.bf16.msra.mxu0 0
          %2151 = vmatpush.bf16.msra.mxu0 0
          %2152 = vmatpush.bf16.msra.mxu0 0
          %2153 = vmatpush.bf16.msra.mxu0 0
          %2154 = vmatpush.bf16.msra.mxu0 0
          %2155 = vmatpush.bf16.msra.mxu0 %v1072
          %2156 = vmatmul.bf16.gmra.mxu0 %v2146
          %v2157 = vpop.f32.mrf.mxu0
          %v2158 = vadd.f32 0.0, %v2157
          %v2159 = vpop.f32.mrf.mxu0
          %2160 = vdwg.mxu0
          %2161 = vmatpush.bf16.msra.mxu0 0
          %2162 = vmatpush.bf16.msra.mxu0 0
          %2163 = vmatpush.bf16.msra.mxu0 0
          %2164 = vmatpush.bf16.msra.mxu0 0
          %2165 = vmatpush.bf16.msra.mxu0 0
          %2166 = vmatpush.bf16.msra.mxu0 0
          %2167 = vmatpush.bf16.msra.mxu0 0
          %2168 = vmatpush.bf16.msra.mxu0 %v1073
          %2169 = vmatmul.bf16.gmra.mxu0 %v2146
          %v2170 = vpop.f32.mrf.mxu0
          %v2171 = vadd.f32 0.0, %v2170
          %v2172 = vpop.f32.mrf.mxu0
          %2173 = vdwg.mxu0
          %v2174 = vpack.c.bf16 %v2171, %v2158
          %v2176 = vrot.slane %v2174, 3
          %v2179 = vsel %vm1109, %v2174, %v2176
          %v2181 = vsel %vm1114, %v2174, %v2176
          %v2183 = vrot.slane %v2181, 1
          %v2184 = vsel %vm1118, %v2174, %v2176
          %v2186 = vrot.slane %v2184, 2
          %v2187 = vsel %vm1122, %v2174, %v2176
          %v2189 = vrot.slane %v2187, 3
          %v2190 = vunpack.i.l.s16 %v2179
          %v2191 = vunpack.i.h.s16 %v2179
          %v2192 = vunpack.i.l.s16 %v2183
          %v2193 = vunpack.i.h.s16 %v2183
          %v2194 = vunpack.i.l.s16 %v2186
          %v2195 = vunpack.i.h.s16 %v2186
          %v2196 = vunpack.i.l.s16 %v2189
          %v2197 = vunpack.i.h.s16 %v2189
          %v2198 = vpack.i.b16 %v2190, %v2190
          %v2199 = vpack.i.b16 %v2191, %v2191
          %v2200 = vpack.i.b16 %v2192, %v2192
          %v2201 = vpack.i.b16 %v2193, %v2193
          %v2202 = vpack.i.b16 %v2194, %v2194
          %v2203 = vpack.i.b16 %v2195, %v2195
          %v2204 = vpack.i.b16 %v2196, %v2196
          %v2205 = vpack.i.b16 %v2197, %v2197
          %v2207 = vunpack.c.l.s4 286326784
          %v2208 = vunpack.c.0.s8 %v2207
          %v2209 = vperm.slane %v2198, %v2208
          %v2211 = vunpack.c.l.s4 286326784
          %v2212 = vunpack.c.0.s8 %v2211
          %v2213 = vperm.slane %v2199, %v2212
          %v2215 = vunpack.c.l.s4 286326784
          %v2216 = vunpack.c.0.s8 %v2215
          %v2217 = vperm.slane %v2200, %v2216
          %v2219 = vunpack.c.l.s4 286326784
          %v2220 = vunpack.c.0.s8 %v2219
          %v2221 = vperm.slane %v2201, %v2220
          %v2223 = vunpack.c.l.s4 286326784
          %v2224 = vunpack.c.0.s8 %v2223
          %v2225 = vperm.slane %v2202, %v2224
          %v2227 = vunpack.c.l.s4 286326784
          %v2228 = vunpack.c.0.s8 %v2227
          %v2229 = vperm.slane %v2203, %v2228
          %v2231 = vunpack.c.l.s4 286326784
          %v2232 = vunpack.c.0.s8 %v2231
          %v2233 = vperm.slane %v2204, %v2232
          %v2235 = vunpack.c.l.s4 286326784
          %v2236 = vunpack.c.0.s8 %v2235
          %v2237 = vperm.slane %v2205, %v2236
          %v2246 = vld [vmem:[#allocation2 + $0x8] sm:$0x11]
          %v2247 = vsel %vm1188, %v2209, %v2246
          %2248 = vst [vmem:[#allocation2 + $0x8] sm:$0x11] %v2247
          %v2249 = vld [vmem:[#allocation2 + $0x20] sm:$0x11]
          %v2250 = vsel %vm1188, %v2213, %v2249
          %2251 = vst [vmem:[#allocation2 + $0x20] sm:$0x11] %v2250
          %v2252 = vld [vmem:[#allocation2 + $0x38] sm:$0x11]
          %v2253 = vsel %vm1188, %v2217, %v2252
          %2254 = vst [vmem:[#allocation2 + $0x38] sm:$0x11] %v2253
          %v2255 = vld [vmem:[#allocation2 + $0x50] sm:$0x11]
          %v2256 = vsel %vm1188, %v2221, %v2255
          %2257 = vst [vmem:[#allocation2 + $0x50] sm:$0x11] %v2256
          %v2258 = vld [vmem:[#allocation2 + $0x68] sm:$0x11]
          %v2259 = vsel %vm1188, %v2225, %v2258
          %2260 = vst [vmem:[#allocation2 + $0x68] sm:$0x11] %v2259
          %v2261 = vld [vmem:[#allocation2 + $0x80] sm:$0x11]
          %v2262 = vsel %vm1188, %v2229, %v2261
          %2263 = vst [vmem:[#allocation2 + $0x80] sm:$0x11] %v2262
          %v2264 = vld [vmem:[#allocation2 + $0x98] sm:$0x11]
          %v2265 = vsel %vm1188, %v2233, %v2264
          %2266 = vst [vmem:[#allocation2 + $0x98] sm:$0x11] %v2265
          %v2267 = vld [vmem:[#allocation2 + $0xb0] sm:$0x11]
          %v2268 = vsel %vm1188, %v2237, %v2267
          %2269 = vst [vmem:[#allocation2 + $0xb0] sm:$0x11] %v2268
          %2271 = vrot.lane.b32.xlu0 %v2144, 112
          %v2272 = vpop.permute.xlu0 %2271
          %v2274 = vsel %vm1076, %v2272, 0
          %2276 = vmatpush.bf16.msra.mxu0 0
          %2277 = vmatpush.bf16.msra.mxu0 0
          %2278 = vmatpush.bf16.msra.mxu0 0
          %2279 = vmatpush.bf16.msra.mxu0 0
          %2280 = vmatpush.bf16.msra.mxu0 0
          %2281 = vmatpush.bf16.msra.mxu0 0
          %2282 = vmatpush.bf16.msra.mxu0 0
          %2283 = vmatpush.bf16.msra.mxu0 %v1072
          %2284 = vmatmul.bf16.gmra.mxu0 %v2274
          %v2285 = vpop.f32.mrf.mxu0
          %v2286 = vadd.f32 0.0, %v2285
          %v2287 = vpop.f32.mrf.mxu0
          %2288 = vdwg.mxu0
          %2289 = vmatpush.bf16.msra.mxu0 0
          %2290 = vmatpush.bf16.msra.mxu0 0
          %2291 = vmatpush.bf16.msra.mxu0 0
          %2292 = vmatpush.bf16.msra.mxu0 0
          %2293 = vmatpush.bf16.msra.mxu0 0
          %2294 = vmatpush.bf16.msra.mxu0 0
          %2295 = vmatpush.bf16.msra.mxu0 0
          %2296 = vmatpush.bf16.msra.mxu0 %v1073
          %2297 = vmatmul.bf16.gmra.mxu0 %v2274
          %v2298 = vpop.f32.mrf.mxu0
          %v2299 = vadd.f32 0.0, %v2298
          %v2300 = vpop.f32.mrf.mxu0
          %2301 = vdwg.mxu0
          %v2302 = vpack.c.bf16 %v2299, %v2286
          %v2304 = vrot.slane %v2302, 3
          %v2307 = vsel %vm1109, %v2302, %v2304
          %v2309 = vsel %vm1114, %v2302, %v2304
          %v2311 = vrot.slane %v2309, 1
          %v2312 = vsel %vm1118, %v2302, %v2304
          %v2314 = vrot.slane %v2312, 2
          %v2315 = vsel %vm1122, %v2302, %v2304
          %v2317 = vrot.slane %v2315, 3
          %v2318 = vunpack.i.l.s16 %v2307
          %v2319 = vunpack.i.h.s16 %v2307
          %v2320 = vunpack.i.l.s16 %v2311
          %v2321 = vunpack.i.h.s16 %v2311
          %v2322 = vunpack.i.l.s16 %v2314
          %v2323 = vunpack.i.h.s16 %v2314
          %v2324 = vunpack.i.l.s16 %v2317
          %v2325 = vunpack.i.h.s16 %v2317
          %v2326 = vpack.i.b16 %v2318, %v2318
          %v2327 = vpack.i.b16 %v2319, %v2319
          %v2328 = vpack.i.b16 %v2320, %v2320
          %v2329 = vpack.i.b16 %v2321, %v2321
          %v2330 = vpack.i.b16 %v2322, %v2322
          %v2331 = vpack.i.b16 %v2323, %v2323
          %v2332 = vpack.i.b16 %v2324, %v2324
          %v2333 = vpack.i.b16 %v2325, %v2325
          %v2335 = vunpack.c.l.s4 286326784
          %v2336 = vunpack.c.0.s8 %v2335
          %v2337 = vperm.slane %v2326, %v2336
          %v2339 = vunpack.c.l.s4 286326784
          %v2340 = vunpack.c.0.s8 %v2339
          %v2341 = vperm.slane %v2327, %v2340
          %v2343 = vunpack.c.l.s4 286326784
          %v2344 = vunpack.c.0.s8 %v2343
          %v2345 = vperm.slane %v2328, %v2344
          %v2347 = vunpack.c.l.s4 286326784
          %v2348 = vunpack.c.0.s8 %v2347
          %v2349 = vperm.slane %v2329, %v2348
          %v2351 = vunpack.c.l.s4 286326784
          %v2352 = vunpack.c.0.s8 %v2351
          %v2353 = vperm.slane %v2330, %v2352
          %v2355 = vunpack.c.l.s4 286326784
          %v2356 = vunpack.c.0.s8 %v2355
          %v2357 = vperm.slane %v2331, %v2356
          %v2359 = vunpack.c.l.s4 286326784
          %v2360 = vunpack.c.0.s8 %v2359
          %v2361 = vperm.slane %v2332, %v2360
          %v2363 = vunpack.c.l.s4 286326784
          %v2364 = vunpack.c.0.s8 %v2363
          %v2365 = vperm.slane %v2333, %v2364
          %v2374 = vld [vmem:[#allocation2 + $0x8] sm:$0x11]
          %v2375 = vsel %vm1321, %v2337, %v2374
          %2376 = vst [vmem:[#allocation2 + $0x8] sm:$0x11] %v2375
          %v2377 = vld [vmem:[#allocation2 + $0x20] sm:$0x11]
          %v2378 = vsel %vm1321, %v2341, %v2377
          %2379 = vst [vmem:[#allocation2 + $0x20] sm:$0x11] %v2378
          %v2380 = vld [vmem:[#allocation2 + $0x38] sm:$0x11]
          %v2381 = vsel %vm1321, %v2345, %v2380
          %2382 = vst [vmem:[#allocation2 + $0x38] sm:$0x11] %v2381
          %v2383 = vld [vmem:[#allocation2 + $0x50] sm:$0x11]
          %v2384 = vsel %vm1321, %v2349, %v2383
          %2385 = vst [vmem:[#allocation2 + $0x50] sm:$0x11] %v2384
          %v2386 = vld [vmem:[#allocation2 + $0x68] sm:$0x11]
          %v2387 = vsel %vm1321, %v2353, %v2386
          %2388 = vst [vmem:[#allocation2 + $0x68] sm:$0x11] %v2387
          %v2389 = vld [vmem:[#allocation2 + $0x80] sm:$0x11]
          %v2390 = vsel %vm1321, %v2357, %v2389
          %2391 = vst [vmem:[#allocation2 + $0x80] sm:$0x11] %v2390
          %v2392 = vld [vmem:[#allocation2 + $0x98] sm:$0x11]
          %v2393 = vsel %vm1321, %v2361, %v2392
          %2394 = vst [vmem:[#allocation2 + $0x98] sm:$0x11] %v2393
          %v2395 = vld [vmem:[#allocation2 + $0xb0] sm:$0x11]
          %v2396 = vsel %vm1321, %v2365, %v2395
          %2397 = vst [vmem:[#allocation2 + $0xb0] sm:$0x11] %v2396
          %2398 = vrot.lane.b32.xlu0 %v2144, 96
          %v2399 = vpop.permute.xlu0 %2398
          %v2401 = vsel %vm1076, %v2399, 0
          %2403 = vmatpush.bf16.msra.mxu0 0
          %2404 = vmatpush.bf16.msra.mxu0 0
          %2405 = vmatpush.bf16.msra.mxu0 0
          %2406 = vmatpush.bf16.msra.mxu0 0
          %2407 = vmatpush.bf16.msra.mxu0 0
          %2408 = vmatpush.bf16.msra.mxu0 0
          %2409 = vmatpush.bf16.msra.mxu0 0
          %2410 = vmatpush.bf16.msra.mxu0 %v1072
          %2411 = vmatmul.bf16.gmra.mxu0 %v2401
          %v2412 = vpop.f32.mrf.mxu0
          %v2413 = vadd.f32 0.0, %v2412
          %v2414 = vpop.f32.mrf.mxu0
          %2415 = vdwg.mxu0
          %2416 = vmatpush.bf16.msra.mxu0 0
          %2417 = vmatpush.bf16.msra.mxu0 0
          %2418 = vmatpush.bf16.msra.mxu0 0
          %2419 = vmatpush.bf16.msra.mxu0 0
          %2420 = vmatpush.bf16.msra.mxu0 0
          %2421 = vmatpush.bf16.msra.mxu0 0
          %2422 = vmatpush.bf16.msra.mxu0 0
          %2423 = vmatpush.bf16.msra.mxu0 %v1073
          %2424 = vmatmul.bf16.gmra.mxu0 %v2401
          %v2425 = vpop.f32.mrf.mxu0
          %v2426 = vadd.f32 0.0, %v2425
          %v2427 = vpop.f32.mrf.mxu0
          %2428 = vdwg.mxu0
          %v2429 = vpack.c.bf16 %v2426, %v2413
          %v2431 = vrot.slane %v2429, 3
          %v2434 = vsel %vm1109, %v2429, %v2431
          %v2436 = vsel %vm1114, %v2429, %v2431
          %v2438 = vrot.slane %v2436, 1
          %v2439 = vsel %vm1118, %v2429, %v2431
          %v2441 = vrot.slane %v2439, 2
          %v2442 = vsel %vm1122, %v2429, %v2431
          %v2444 = vrot.slane %v2442, 3
          %v2445 = vunpack.i.l.s16 %v2434
          %v2446 = vunpack.i.h.s16 %v2434
          %v2447 = vunpack.i.l.s16 %v2438
          %v2448 = vunpack.i.h.s16 %v2438
          %v2449 = vunpack.i.l.s16 %v2441
          %v2450 = vunpack.i.h.s16 %v2441
          %v2451 = vunpack.i.l.s16 %v2444
          %v2452 = vunpack.i.h.s16 %v2444
          %v2453 = vpack.i.b16 %v2445, %v2445
          %v2454 = vpack.i.b16 %v2446, %v2446
          %v2455 = vpack.i.b16 %v2447, %v2447
          %v2456 = vpack.i.b16 %v2448, %v2448
          %v2457 = vpack.i.b16 %v2449, %v2449
          %v2458 = vpack.i.b16 %v2450, %v2450
          %v2459 = vpack.i.b16 %v2451, %v2451
          %v2460 = vpack.i.b16 %v2452, %v2452
          %v2462 = vunpack.c.l.s4 286326784
          %v2463 = vunpack.c.0.s8 %v2462
          %v2464 = vperm.slane %v2453, %v2463
          %v2466 = vunpack.c.l.s4 286326784
          %v2467 = vunpack.c.0.s8 %v2466
          %v2468 = vperm.slane %v2454, %v2467
          %v2470 = vunpack.c.l.s4 286326784
          %v2471 = vunpack.c.0.s8 %v2470
          %v2472 = vperm.slane %v2455, %v2471
          %v2474 = vunpack.c.l.s4 286326784
          %v2475 = vunpack.c.0.s8 %v2474
          %v2476 = vperm.slane %v2456, %v2475
          %v2478 = vunpack.c.l.s4 286326784
          %v2479 = vunpack.c.0.s8 %v2478
          %v2480 = vperm.slane %v2457, %v2479
          %v2482 = vunpack.c.l.s4 286326784
          %v2483 = vunpack.c.0.s8 %v2482
          %v2484 = vperm.slane %v2458, %v2483
          %v2486 = vunpack.c.l.s4 286326784
          %v2487 = vunpack.c.0.s8 %v2486
          %v2488 = vperm.slane %v2459, %v2487
          %v2490 = vunpack.c.l.s4 286326784
          %v2491 = vunpack.c.0.s8 %v2490
          %v2492 = vperm.slane %v2460, %v2491
          %v2501 = vld [vmem:[#allocation2 + $0x8] sm:$0x22]
          %v2502 = vsel %vm1455, %v2464, %v2501
          %2503 = vst [vmem:[#allocation2 + $0x8] sm:$0x22] %v2502
          %v2504 = vld [vmem:[#allocation2 + $0x20] sm:$0x22]
          %v2505 = vsel %vm1455, %v2468, %v2504
          %2506 = vst [vmem:[#allocation2 + $0x20] sm:$0x22] %v2505
          %v2507 = vld [vmem:[#allocation2 + $0x38] sm:$0x22]
          %v2508 = vsel %vm1455, %v2472, %v2507
          %2509 = vst [vmem:[#allocation2 + $0x38] sm:$0x22] %v2508
          %v2510 = vld [vmem:[#allocation2 + $0x50] sm:$0x22]
          %v2511 = vsel %vm1455, %v2476, %v2510
          %2512 = vst [vmem:[#allocation2 + $0x50] sm:$0x22] %v2511
          %v2513 = vld [vmem:[#allocation2 + $0x68] sm:$0x22]
          %v2514 = vsel %vm1455, %v2480, %v2513
          %2515 = vst [vmem:[#allocation2 + $0x68] sm:$0x22] %v2514
          %v2516 = vld [vmem:[#allocation2 + $0x80] sm:$0x22]
          %v2517 = vsel %vm1455, %v2484, %v2516
          %2518 = vst [vmem:[#allocation2 + $0x80] sm:$0x22] %v2517
          %v2519 = vld [vmem:[#allocation2 + $0x98] sm:$0x22]
          %v2520 = vsel %vm1455, %v2488, %v2519
          %2521 = vst [vmem:[#allocation2 + $0x98] sm:$0x22] %v2520
          %v2522 = vld [vmem:[#allocation2 + $0xb0] sm:$0x22]
          %v2523 = vsel %vm1455, %v2492, %v2522
          %2524 = vst [vmem:[#allocation2 + $0xb0] sm:$0x22] %v2523
          %2525 = vrot.lane.b32.xlu0 %v2144, 80
          %v2526 = vpop.permute.xlu0 %2525
          %v2528 = vsel %vm1076, %v2526, 0
          %2530 = vmatpush.bf16.msra.mxu0 0
          %2531 = vmatpush.bf16.msra.mxu0 0
          %2532 = vmatpush.bf16.msra.mxu0 0
          %2533 = vmatpush.bf16.msra.mxu0 0
          %2534 = vmatpush.bf16.msra.mxu0 0
          %2535 = vmatpush.bf16.msra.mxu0 0
          %2536 = vmatpush.bf16.msra.mxu0 0
          %2537 = vmatpush.bf16.msra.mxu0 %v1072
          %2538 = vmatmul.bf16.gmra.mxu0 %v2528
          %v2539 = vpop.f32.mrf.mxu0
          %v2540 = vadd.f32 0.0, %v2539
          %v2541 = vpop.f32.mrf.mxu0
          %2542 = vdwg.mxu0
          %2543 = vmatpush.bf16.msra.mxu0 0
          %2544 = vmatpush.bf16.msra.mxu0 0
          %2545 = vmatpush.bf16.msra.mxu0 0
          %2546 = vmatpush.bf16.msra.mxu0 0
          %2547 = vmatpush.bf16.msra.mxu0 0
          %2548 = vmatpush.bf16.msra.mxu0 0
          %2549 = vmatpush.bf16.msra.mxu0 0
          %2550 = vmatpush.bf16.msra.mxu0 %v1073
          %2551 = vmatmul.bf16.gmra.mxu0 %v2528
          %v2552 = vpop.f32.mrf.mxu0
          %v2553 = vadd.f32 0.0, %v2552
          %v2554 = vpop.f32.mrf.mxu0
          %2555 = vdwg.mxu0
          %v2556 = vpack.c.bf16 %v2553, %v2540
          %v2558 = vrot.slane %v2556, 3
          %v2561 = vsel %vm1109, %v2556, %v2558
          %v2563 = vsel %vm1114, %v2556, %v2558
          %v2565 = vrot.slane %v2563, 1
          %v2566 = vsel %vm1118, %v2556, %v2558
          %v2568 = vrot.slane %v2566, 2
          %v2569 = vsel %vm1122, %v2556, %v2558
          %v2571 = vrot.slane %v2569, 3
          %v2572 = vunpack.i.l.s16 %v2561
          %v2573 = vunpack.i.h.s16 %v2561
          %v2574 = vunpack.i.l.s16 %v2565
          %v2575 = vunpack.i.h.s16 %v2565
          %v2576 = vunpack.i.l.s16 %v2568
          %v2577 = vunpack.i.h.s16 %v2568
          %v2578 = vunpack.i.l.s16 %v2571
          %v2579 = vunpack.i.h.s16 %v2571
          %v2580 = vpack.i.b16 %v2572, %v2572
          %v2581 = vpack.i.b16 %v2573, %v2573
          %v2582 = vpack.i.b16 %v2574, %v2574
          %v2583 = vpack.i.b16 %v2575, %v2575
          %v2584 = vpack.i.b16 %v2576, %v2576
          %v2585 = vpack.i.b16 %v2577, %v2577
          %v2586 = vpack.i.b16 %v2578, %v2578
          %v2587 = vpack.i.b16 %v2579, %v2579
          %v2589 = vunpack.c.l.s4 286326784
          %v2590 = vunpack.c.0.s8 %v2589
          %v2591 = vperm.slane %v2580, %v2590
          %v2593 = vunpack.c.l.s4 286326784
          %v2594 = vunpack.c.0.s8 %v2593
          %v2595 = vperm.slane %v2581, %v2594
          %v2597 = vunpack.c.l.s4 286326784
          %v2598 = vunpack.c.0.s8 %v2597
          %v2599 = vperm.slane %v2582, %v2598
          %v2601 = vunpack.c.l.s4 286326784
          %v2602 = vunpack.c.0.s8 %v2601
          %v2603 = vperm.slane %v2583, %v2602
          %v2605 = vunpack.c.l.s4 286326784
          %v2606 = vunpack.c.0.s8 %v2605
          %v2607 = vperm.slane %v2584, %v2606
          %v2609 = vunpack.c.l.s4 286326784
          %v2610 = vunpack.c.0.s8 %v2609
          %v2611 = vperm.slane %v2585, %v2610
          %v2613 = vunpack.c.l.s4 286326784
          %v2614 = vunpack.c.0.s8 %v2613
          %v2615 = vperm.slane %v2586, %v2614
          %v2617 = vunpack.c.l.s4 286326784
          %v2618 = vunpack.c.0.s8 %v2617
          %v2619 = vperm.slane %v2587, %v2618
          %v2628 = vld [vmem:[#allocation2 + $0x8] sm:$0x22]
          %v2629 = vsel %vm1587, %v2591, %v2628
          %2630 = vst [vmem:[#allocation2 + $0x8] sm:$0x22] %v2629
          %v2631 = vld [vmem:[#allocation2 + $0x20] sm:$0x22]
          %v2632 = vsel %vm1587, %v2595, %v2631
          %2633 = vst [vmem:[#allocation2 + $0x20] sm:$0x22] %v2632
          %v2634 = vld [vmem:[#allocation2 + $0x38] sm:$0x22]
          %v2635 = vsel %vm1587, %v2599, %v2634
          %2636 = vst [vmem:[#allocation2 + $0x38] sm:$0x22] %v2635
          %v2637 = vld [vmem:[#allocation2 + $0x50] sm:$0x22]
          %v2638 = vsel %vm1587, %v2603, %v2637
          %2639 = vst [vmem:[#allocation2 + $0x50] sm:$0x22] %v2638
          %v2640 = vld [vmem:[#allocation2 + $0x68] sm:$0x22]
          %v2641 = vsel %vm1587, %v2607, %v2640
          %2642 = vst [vmem:[#allocation2 + $0x68] sm:$0x22] %v2641
          %v2643 = vld [vmem:[#allocation2 + $0x80] sm:$0x22]
          %v2644 = vsel %vm1587, %v2611, %v2643
          %2645 = vst [vmem:[#allocation2 + $0x80] sm:$0x22] %v2644
          %v2646 = vld [vmem:[#allocation2 + $0x98] sm:$0x22]
          %v2647 = vsel %vm1587, %v2615, %v2646
          %2648 = vst [vmem:[#allocation2 + $0x98] sm:$0x22] %v2647
          %v2649 = vld [vmem:[#allocation2 + $0xb0] sm:$0x22]
          %v2650 = vsel %vm1587, %v2619, %v2649
          %2651 = vst [vmem:[#allocation2 + $0xb0] sm:$0x22] %v2650
          %2652 = vrot.lane.b32.xlu0 %v2144, 64
          %v2653 = vpop.permute.xlu0 %2652
          %v2655 = vsel %vm1076, %v2653, 0
          %2657 = vmatpush.bf16.msra.mxu0 0
          %2658 = vmatpush.bf16.msra.mxu0 0
          %2659 = vmatpush.bf16.msra.mxu0 0
          %2660 = vmatpush.bf16.msra.mxu0 0
          %2661 = vmatpush.bf16.msra.mxu0 0
          %2662 = vmatpush.bf16.msra.mxu0 0
          %2663 = vmatpush.bf16.msra.mxu0 0
          %2664 = vmatpush.bf16.msra.mxu0 %v1072
          %2665 = vmatmul.bf16.gmra.mxu0 %v2655
          %v2666 = vpop.f32.mrf.mxu0
          %v2667 = vadd.f32 0.0, %v2666
          %v2668 = vpop.f32.mrf.mxu0
          %2669 = vdwg.mxu0
          %2670 = vmatpush.bf16.msra.mxu0 0
          %2671 = vmatpush.bf16.msra.mxu0 0
          %2672 = vmatpush.bf16.msra.mxu0 0
          %2673 = vmatpush.bf16.msra.mxu0 0
          %2674 = vmatpush.bf16.msra.mxu0 0
          %2675 = vmatpush.bf16.msra.mxu0 0
          %2676 = vmatpush.bf16.msra.mxu0 0
          %2677 = vmatpush.bf16.msra.mxu0 %v1073
          %2678 = vmatmul.bf16.gmra.mxu0 %v2655
          %v2679 = vpop.f32.mrf.mxu0
          %v2680 = vadd.f32 0.0, %v2679
          %v2681 = vpop.f32.mrf.mxu0
          %2682 = vdwg.mxu0
          %v2683 = vpack.c.bf16 %v2680, %v2667
          %v2685 = vrot.slane %v2683, 3
          %v2688 = vsel %vm1109, %v2683, %v2685
          %v2690 = vsel %vm1114, %v2683, %v2685
          %v2692 = vrot.slane %v2690, 1
          %v2693 = vsel %vm1118, %v2683, %v2685
          %v2695 = vrot.slane %v2693, 2
          %v2696 = vsel %vm1122, %v2683, %v2685
          %v2698 = vrot.slane %v2696, 3
          %v2699 = vunpack.i.l.s16 %v2688
          %v2700 = vunpack.i.h.s16 %v2688
          %v2701 = vunpack.i.l.s16 %v2692
          %v2702 = vunpack.i.h.s16 %v2692
          %v2703 = vunpack.i.l.s16 %v2695
          %v2704 = vunpack.i.h.s16 %v2695
          %v2705 = vunpack.i.l.s16 %v2698
          %v2706 = vunpack.i.h.s16 %v2698
          %v2707 = vpack.i.b16 %v2699, %v2699
          %v2708 = vpack.i.b16 %v2700, %v2700
          %v2709 = vpack.i.b16 %v2701, %v2701
          %v2710 = vpack.i.b16 %v2702, %v2702
          %v2711 = vpack.i.b16 %v2703, %v2703
          %v2712 = vpack.i.b16 %v2704, %v2704
          %v2713 = vpack.i.b16 %v2705, %v2705
          %v2714 = vpack.i.b16 %v2706, %v2706
          %v2716 = vunpack.c.l.s4 286326784
          %v2717 = vunpack.c.0.s8 %v2716
          %v2718 = vperm.slane %v2707, %v2717
          %v2720 = vunpack.c.l.s4 286326784
          %v2721 = vunpack.c.0.s8 %v2720
          %v2722 = vperm.slane %v2708, %v2721
          %v2724 = vunpack.c.l.s4 286326784
          %v2725 = vunpack.c.0.s8 %v2724
          %v2726 = vperm.slane %v2709, %v2725
          %v2728 = vunpack.c.l.s4 286326784
          %v2729 = vunpack.c.0.s8 %v2728
          %v2730 = vperm.slane %v2710, %v2729
          %v2732 = vunpack.c.l.s4 286326784
          %v2733 = vunpack.c.0.s8 %v2732
          %v2734 = vperm.slane %v2711, %v2733
          %v2736 = vunpack.c.l.s4 286326784
          %v2737 = vunpack.c.0.s8 %v2736
          %v2738 = vperm.slane %v2712, %v2737
          %v2740 = vunpack.c.l.s4 286326784
          %v2741 = vunpack.c.0.s8 %v2740
          %v2742 = vperm.slane %v2713, %v2741
          %v2744 = vunpack.c.l.s4 286326784
          %v2745 = vunpack.c.0.s8 %v2744
          %v2746 = vperm.slane %v2714, %v2745
          %v2755 = vld [vmem:[#allocation2 + $0x8] sm:$0x44]
          %v2756 = vsel %vm1721, %v2718, %v2755
          %2757 = vst [vmem:[#allocation2 + $0x8] sm:$0x44] %v2756
          %v2758 = vld [vmem:[#allocation2 + $0x20] sm:$0x44]
          %v2759 = vsel %vm1721, %v2722, %v2758
          %2760 = vst [vmem:[#allocation2 + $0x20] sm:$0x44] %v2759
          %v2761 = vld [vmem:[#allocation2 + $0x38] sm:$0x44]
          %v2762 = vsel %vm1721, %v2726, %v2761
          %2763 = vst [vmem:[#allocation2 + $0x38] sm:$0x44] %v2762
          %v2764 = vld [vmem:[#allocation2 + $0x50] sm:$0x44]
          %v2765 = vsel %vm1721, %v2730, %v2764
          %2766 = vst [vmem:[#allocation2 + $0x50] sm:$0x44] %v2765
          %v2767 = vld [vmem:[#allocation2 + $0x68] sm:$0x44]
          %v2768 = vsel %vm1721, %v2734, %v2767
          %2769 = vst [vmem:[#allocation2 + $0x68] sm:$0x44] %v2768
          %v2770 = vld [vmem:[#allocation2 + $0x80] sm:$0x44]
          %v2771 = vsel %vm1721, %v2738, %v2770
          %2772 = vst [vmem:[#allocation2 + $0x80] sm:$0x44] %v2771
          %v2773 = vld [vmem:[#allocation2 + $0x98] sm:$0x44]
          %v2774 = vsel %vm1721, %v2742, %v2773
          %2775 = vst [vmem:[#allocation2 + $0x98] sm:$0x44] %v2774
          %v2776 = vld [vmem:[#allocation2 + $0xb0] sm:$0x44]
          %v2777 = vsel %vm1721, %v2746, %v2776
          %2778 = vst [vmem:[#allocation2 + $0xb0] sm:$0x44] %v2777
          %2779 = vrot.lane.b32.xlu0 %v2144, 48
          %v2780 = vpop.permute.xlu0 %2779
          %v2782 = vsel %vm1076, %v2780, 0
          %2784 = vmatpush.bf16.msra.mxu0 0
          %2785 = vmatpush.bf16.msra.mxu0 0
          %2786 = vmatpush.bf16.msra.mxu0 0
          %2787 = vmatpush.bf16.msra.mxu0 0
          %2788 = vmatpush.bf16.msra.mxu0 0
          %2789 = vmatpush.bf16.msra.mxu0 0
          %2790 = vmatpush.bf16.msra.mxu0 0
          %2791 = vmatpush.bf16.msra.mxu0 %v1072
          %2792 = vmatmul.bf16.gmra.mxu0 %v2782
          %v2793 = vpop.f32.mrf.mxu0
          %v2794 = vadd.f32 0.0, %v2793
          %v2795 = vpop.f32.mrf.mxu0
          %2796 = vdwg.mxu0
          %2797 = vmatpush.bf16.msra.mxu0 0
          %2798 = vmatpush.bf16.msra.mxu0 0
          %2799 = vmatpush.bf16.msra.mxu0 0
          %2800 = vmatpush.bf16.msra.mxu0 0
          %2801 = vmatpush.bf16.msra.mxu0 0
          %2802 = vmatpush.bf16.msra.mxu0 0
          %2803 = vmatpush.bf16.msra.mxu0 0
          %2804 = vmatpush.bf16.msra.mxu0 %v1073
          %2805 = vmatmul.bf16.gmra.mxu0 %v2782
          %v2806 = vpop.f32.mrf.mxu0
          %v2807 = vadd.f32 0.0, %v2806
          %v2808 = vpop.f32.mrf.mxu0
          %2809 = vdwg.mxu0
          %v2810 = vpack.c.bf16 %v2807, %v2794
          %v2812 = vrot.slane %v2810, 3
          %v2815 = vsel %vm1109, %v2810, %v2812
          %v2817 = vsel %vm1114, %v2810, %v2812
          %v2819 = vrot.slane %v2817, 1
          %v2820 = vsel %vm1118, %v2810, %v2812
          %v2822 = vrot.slane %v2820, 2
          %v2823 = vsel %vm1122, %v2810, %v2812
          %v2825 = vrot.slane %v2823, 3
          %v2826 = vunpack.i.l.s16 %v2815
          %v2827 = vunpack.i.h.s16 %v2815
          %v2828 = vunpack.i.l.s16 %v2819
          %v2829 = vunpack.i.h.s16 %v2819
          %v2830 = vunpack.i.l.s16 %v2822
          %v2831 = vunpack.i.h.s16 %v2822
          %v2832 = vunpack.i.l.s16 %v2825
          %v2833 = vunpack.i.h.s16 %v2825
          %v2834 = vpack.i.b16 %v2826, %v2826
          %v2835 = vpack.i.b16 %v2827, %v2827
          %v2836 = vpack.i.b16 %v2828, %v2828
          %v2837 = vpack.i.b16 %v2829, %v2829
          %v2838 = vpack.i.b16 %v2830, %v2830
          %v2839 = vpack.i.b16 %v2831, %v2831
          %v2840 = vpack.i.b16 %v2832, %v2832
          %v2841 = vpack.i.b16 %v2833, %v2833
          %v2843 = vunpack.c.l.s4 286326784
          %v2844 = vunpack.c.0.s8 %v2843
          %v2845 = vperm.slane %v2834, %v2844
          %v2847 = vunpack.c.l.s4 286326784
          %v2848 = vunpack.c.0.s8 %v2847
          %v2849 = vperm.slane %v2835, %v2848
          %v2851 = vunpack.c.l.s4 286326784
          %v2852 = vunpack.c.0.s8 %v2851
          %v2853 = vperm.slane %v2836, %v2852
          %v2855 = vunpack.c.l.s4 286326784
          %v2856 = vunpack.c.0.s8 %v2855
          %v2857 = vperm.slane %v2837, %v2856
          %v2859 = vunpack.c.l.s4 286326784
          %v2860 = vunpack.c.0.s8 %v2859
          %v2861 = vperm.slane %v2838, %v2860
          %v2863 = vunpack.c.l.s4 286326784
          %v2864 = vunpack.c.0.s8 %v2863
          %v2865 = vperm.slane %v2839, %v2864
          %v2867 = vunpack.c.l.s4 286326784
          %v2868 = vunpack.c.0.s8 %v2867
          %v2869 = vperm.slane %v2840, %v2868
          %v2871 = vunpack.c.l.s4 286326784
          %v2872 = vunpack.c.0.s8 %v2871
          %v2873 = vperm.slane %v2841, %v2872
          %v2882 = vld [vmem:[#allocation2 + $0x8] sm:$0x44]
          %v2883 = vsel %vm1853, %v2845, %v2882
          %2884 = vst [vmem:[#allocation2 + $0x8] sm:$0x44] %v2883
          %v2885 = vld [vmem:[#allocation2 + $0x20] sm:$0x44]
          %v2886 = vsel %vm1853, %v2849, %v2885
          %2887 = vst [vmem:[#allocation2 + $0x20] sm:$0x44] %v2886
          %v2888 = vld [vmem:[#allocation2 + $0x38] sm:$0x44]
          %v2889 = vsel %vm1853, %v2853, %v2888
          %2890 = vst [vmem:[#allocation2 + $0x38] sm:$0x44] %v2889
          %v2891 = vld [vmem:[#allocation2 + $0x50] sm:$0x44]
          %v2892 = vsel %vm1853, %v2857, %v2891
          %2893 = vst [vmem:[#allocation2 + $0x50] sm:$0x44] %v2892
          %v2894 = vld [vmem:[#allocation2 + $0x68] sm:$0x44]
          %v2895 = vsel %vm1853, %v2861, %v2894
          %2896 = vst [vmem:[#allocation2 + $0x68] sm:$0x44] %v2895
          %v2897 = vld [vmem:[#allocation2 + $0x80] sm:$0x44]
          %v2898 = vsel %vm1853, %v2865, %v2897
          %2899 = vst [vmem:[#allocation2 + $0x80] sm:$0x44] %v2898
          %v2900 = vld [vmem:[#allocation2 + $0x98] sm:$0x44]
          %v2901 = vsel %vm1853, %v2869, %v2900
          %2902 = vst [vmem:[#allocation2 + $0x98] sm:$0x44] %v2901
          %v2903 = vld [vmem:[#allocation2 + $0xb0] sm:$0x44]
          %v2904 = vsel %vm1853, %v2873, %v2903
          %2905 = vst [vmem:[#allocation2 + $0xb0] sm:$0x44] %v2904
          %2906 = vrot.lane.b32.xlu0 %v2144, 32
          %v2907 = vpop.permute.xlu0 %2906
          %v2909 = vsel %vm1076, %v2907, 0
          %2911 = vmatpush.bf16.msra.mxu0 0
          %2912 = vmatpush.bf16.msra.mxu0 0
          %2913 = vmatpush.bf16.msra.mxu0 0
          %2914 = vmatpush.bf16.msra.mxu0 0
          %2915 = vmatpush.bf16.msra.mxu0 0
          %2916 = vmatpush.bf16.msra.mxu0 0
          %2917 = vmatpush.bf16.msra.mxu0 0
          %2918 = vmatpush.bf16.msra.mxu0 %v1072
          %2919 = vmatmul.bf16.gmra.mxu0 %v2909
          %v2920 = vpop.f32.mrf.mxu0
          %v2921 = vadd.f32 0.0, %v2920
          %v2922 = vpop.f32.mrf.mxu0
          %2923 = vdwg.mxu0
          %2924 = vmatpush.bf16.msra.mxu0 0
          %2925 = vmatpush.bf16.msra.mxu0 0
          %2926 = vmatpush.bf16.msra.mxu0 0
          %2927 = vmatpush.bf16.msra.mxu0 0
          %2928 = vmatpush.bf16.msra.mxu0 0
          %2929 = vmatpush.bf16.msra.mxu0 0
          %2930 = vmatpush.bf16.msra.mxu0 0
          %2931 = vmatpush.bf16.msra.mxu0 %v1073
          %2932 = vmatmul.bf16.gmra.mxu0 %v2909
          %v2933 = vpop.f32.mrf.mxu0
          %v2934 = vadd.f32 0.0, %v2933
          %v2935 = vpop.f32.mrf.mxu0
          %2936 = vdwg.mxu0
          %v2937 = vpack.c.bf16 %v2934, %v2921
          %v2939 = vrot.slane %v2937, 3
          %v2942 = vsel %vm1109, %v2937, %v2939
          %v2944 = vsel %vm1114, %v2937, %v2939
          %v2946 = vrot.slane %v2944, 1
          %v2947 = vsel %vm1118, %v2937, %v2939
          %v2949 = vrot.slane %v2947, 2
          %v2950 = vsel %vm1122, %v2937, %v2939
          %v2952 = vrot.slane %v2950, 3
          %v2953 = vunpack.i.l.s16 %v2942
          %v2954 = vunpack.i.h.s16 %v2942
          %v2955 = vunpack.i.l.s16 %v2946
          %v2956 = vunpack.i.h.s16 %v2946
          %v2957 = vunpack.i.l.s16 %v2949
          %v2958 = vunpack.i.h.s16 %v2949
          %v2959 = vunpack.i.l.s16 %v2952
          %v2960 = vunpack.i.h.s16 %v2952
          %v2961 = vpack.i.b16 %v2953, %v2953
          %v2962 = vpack.i.b16 %v2954, %v2954
          %v2963 = vpack.i.b16 %v2955, %v2955
          %v2964 = vpack.i.b16 %v2956, %v2956
          %v2965 = vpack.i.b16 %v2957, %v2957
          %v2966 = vpack.i.b16 %v2958, %v2958
          %v2967 = vpack.i.b16 %v2959, %v2959
          %v2968 = vpack.i.b16 %v2960, %v2960
          %v2970 = vunpack.c.l.s4 286326784
          %v2971 = vunpack.c.0.s8 %v2970
          %v2972 = vperm.slane %v2961, %v2971
          %v2974 = vunpack.c.l.s4 286326784
          %v2975 = vunpack.c.0.s8 %v2974
          %v2976 = vperm.slane %v2962, %v2975
          %v2978 = vunpack.c.l.s4 286326784
          %v2979 = vunpack.c.0.s8 %v2978
          %v2980 = vperm.slane %v2963, %v2979
          %v2982 = vunpack.c.l.s4 286326784
          %v2983 = vunpack.c.0.s8 %v2982
          %v2984 = vperm.slane %v2964, %v2983
          %v2986 = vunpack.c.l.s4 286326784
          %v2987 = vunpack.c.0.s8 %v2986
          %v2988 = vperm.slane %v2965, %v2987
          %v2990 = vunpack.c.l.s4 286326784
          %v2991 = vunpack.c.0.s8 %v2990
          %v2992 = vperm.slane %v2966, %v2991
          %v2994 = vunpack.c.l.s4 286326784
          %v2995 = vunpack.c.0.s8 %v2994
          %v2996 = vperm.slane %v2967, %v2995
          %v2998 = vunpack.c.l.s4 286326784
          %v2999 = vunpack.c.0.s8 %v2998
          %v3000 = vperm.slane %v2968, %v2999
          %v3009 = vld [vmem:[#allocation2 + $0x8] sm:$0x88]
          %v3010 = vsel %vm1987, %v2972, %v3009
          %3011 = vst [vmem:[#allocation2 + $0x8] sm:$0x88] %v3010
          %v3012 = vld [vmem:[#allocation2 + $0x20] sm:$0x88]
          %v3013 = vsel %vm1987, %v2976, %v3012
          %3014 = vst [vmem:[#allocation2 + $0x20] sm:$0x88] %v3013
          %v3015 = vld [vmem:[#allocation2 + $0x38] sm:$0x88]
          %v3016 = vsel %vm1987, %v2980, %v3015
          %3017 = vst [vmem:[#allocation2 + $0x38] sm:$0x88] %v3016
          %v3018 = vld [vmem:[#allocation2 + $0x50] sm:$0x88]
          %v3019 = vsel %vm1987, %v2984, %v3018
          %3020 = vst [vmem:[#allocation2 + $0x50] sm:$0x88] %v3019
          %v3021 = vld [vmem:[#allocation2 + $0x68] sm:$0x88]
          %v3022 = vsel %vm1987, %v2988, %v3021
          %3023 = vst [vmem:[#allocation2 + $0x68] sm:$0x88] %v3022
          %v3024 = vld [vmem:[#allocation2 + $0x80] sm:$0x88]
          %v3025 = vsel %vm1987, %v2992, %v3024
          %3026 = vst [vmem:[#allocation2 + $0x80] sm:$0x88] %v3025
          %v3027 = vld [vmem:[#allocation2 + $0x98] sm:$0x88]
          %v3028 = vsel %vm1987, %v2996, %v3027
          %3029 = vst [vmem:[#allocation2 + $0x98] sm:$0x88] %v3028
          %v3030 = vld [vmem:[#allocation2 + $0xb0] sm:$0x88]
          %v3031 = vsel %vm1987, %v3000, %v3030
          %3032 = vst [vmem:[#allocation2 + $0xb0] sm:$0x88] %v3031
          %3033 = vrot.lane.b32.xlu0 %v2144, 16
          %v3034 = vpop.permute.xlu0 %3033
          %v3036 = vsel %vm1076, %v3034, 0
          %3038 = vmatpush.bf16.msra.mxu0 0
          %3039 = vmatpush.bf16.msra.mxu0 0
          %3040 = vmatpush.bf16.msra.mxu0 0
          %3041 = vmatpush.bf16.msra.mxu0 0
          %3042 = vmatpush.bf16.msra.mxu0 0
          %3043 = vmatpush.bf16.msra.mxu0 0
          %3044 = vmatpush.bf16.msra.mxu0 0
          %3045 = vmatpush.bf16.msra.mxu0 %v1072
          %3046 = vmatmul.bf16.gmra.mxu0 %v3036
          %v3047 = vpop.f32.mrf.mxu0
          %v3048 = vadd.f32 0.0, %v3047
          %v3049 = vpop.f32.mrf.mxu0
          %3050 = vdwg.mxu0
          %3051 = vmatpush.bf16.msra.mxu0 0
          %3052 = vmatpush.bf16.msra.mxu0 0
          %3053 = vmatpush.bf16.msra.mxu0 0
          %3054 = vmatpush.bf16.msra.mxu0 0
          %3055 = vmatpush.bf16.msra.mxu0 0
          %3056 = vmatpush.bf16.msra.mxu0 0
          %3057 = vmatpush.bf16.msra.mxu0 0
          %3058 = vmatpush.bf16.msra.mxu0 %v1073
          %3059 = vmatmul.bf16.gmra.mxu0 %v3036
          %v3060 = vpop.f32.mrf.mxu0
          %v3061 = vadd.f32 0.0, %v3060
          %v3062 = vpop.f32.mrf.mxu0
          %3063 = vdwg.mxu0
          %v3064 = vpack.c.bf16 %v3061, %v3048
          %v3066 = vrot.slane %v3064, 3
          %v3069 = vsel %vm1109, %v3064, %v3066
          %v3071 = vsel %vm1114, %v3064, %v3066
          %v3073 = vrot.slane %v3071, 1
          %v3074 = vsel %vm1118, %v3064, %v3066
          %v3076 = vrot.slane %v3074, 2
          %v3077 = vsel %vm1122, %v3064, %v3066
          %v3079 = vrot.slane %v3077, 3
          %v3080 = vunpack.i.l.s16 %v3069
          %v3081 = vunpack.i.h.s16 %v3069
          %v3082 = vunpack.i.l.s16 %v3073
          %v3083 = vunpack.i.h.s16 %v3073
          %v3084 = vunpack.i.l.s16 %v3076
          %v3085 = vunpack.i.h.s16 %v3076
          %v3086 = vunpack.i.l.s16 %v3079
          %v3087 = vunpack.i.h.s16 %v3079
          %v3088 = vpack.i.b16 %v3080, %v3080
          %v3089 = vpack.i.b16 %v3081, %v3081
          %v3090 = vpack.i.b16 %v3082, %v3082
          %v3091 = vpack.i.b16 %v3083, %v3083
          %v3092 = vpack.i.b16 %v3084, %v3084
          %v3093 = vpack.i.b16 %v3085, %v3085
          %v3094 = vpack.i.b16 %v3086, %v3086
          %v3095 = vpack.i.b16 %v3087, %v3087
          %v3097 = vunpack.c.l.s4 286326784
          %v3098 = vunpack.c.0.s8 %v3097
          %v3099 = vperm.slane %v3088, %v3098
          %v3101 = vunpack.c.l.s4 286326784
          %v3102 = vunpack.c.0.s8 %v3101
          %v3103 = vperm.slane %v3089, %v3102
          %v3105 = vunpack.c.l.s4 286326784
          %v3106 = vunpack.c.0.s8 %v3105
          %v3107 = vperm.slane %v3090, %v3106
          %v3109 = vunpack.c.l.s4 286326784
          %v3110 = vunpack.c.0.s8 %v3109
          %v3111 = vperm.slane %v3091, %v3110
          %v3113 = vunpack.c.l.s4 286326784
          %v3114 = vunpack.c.0.s8 %v3113
          %v3115 = vperm.slane %v3092, %v3114
          %v3117 = vunpack.c.l.s4 286326784
          %v3118 = vunpack.c.0.s8 %v3117
          %v3119 = vperm.slane %v3093, %v3118
          %v3121 = vunpack.c.l.s4 286326784
          %v3122 = vunpack.c.0.s8 %v3121
          %v3123 = vperm.slane %v3094, %v3122
          %v3125 = vunpack.c.l.s4 286326784
          %v3126 = vunpack.c.0.s8 %v3125
          %v3127 = vperm.slane %v3095, %v3126
          %v3136 = vld [vmem:[#allocation2 + $0x8] sm:$0x88]
          %v3137 = vsel %vm2119, %v3099, %v3136
          %3138 = vst [vmem:[#allocation2 + $0x8] sm:$0x88] %v3137
          %v3139 = vld [vmem:[#allocation2 + $0x20] sm:$0x88]
          %v3140 = vsel %vm2119, %v3103, %v3139
          %3141 = vst [vmem:[#allocation2 + $0x20] sm:$0x88] %v3140
          %v3142 = vld [vmem:[#allocation2 + $0x38] sm:$0x88]
          %v3143 = vsel %vm2119, %v3107, %v3142
          %3144 = vst [vmem:[#allocation2 + $0x38] sm:$0x88] %v3143
          %v3145 = vld [vmem:[#allocation2 + $0x50] sm:$0x88]
          %v3146 = vsel %vm2119, %v3111, %v3145
          %3147 = vst [vmem:[#allocation2 + $0x50] sm:$0x88] %v3146
          %v3148 = vld [vmem:[#allocation2 + $0x68] sm:$0x88]
          %v3149 = vsel %vm2119, %v3115, %v3148
          %3150 = vst [vmem:[#allocation2 + $0x68] sm:$0x88] %v3149
          %v3151 = vld [vmem:[#allocation2 + $0x80] sm:$0x88]
          %v3152 = vsel %vm2119, %v3119, %v3151
          %3153 = vst [vmem:[#allocation2 + $0x80] sm:$0x88] %v3152
          %v3154 = vld [vmem:[#allocation2 + $0x98] sm:$0x88]
          %v3155 = vsel %vm2119, %v3123, %v3154
          %3156 = vst [vmem:[#allocation2 + $0x98] sm:$0x88] %v3155
          %v3157 = vld [vmem:[#allocation2 + $0xb0] sm:$0x88]
          %v3158 = vsel %vm2119, %v3127, %v3157
          %3159 = vst [vmem:[#allocation2 + $0xb0] sm:$0x88] %v3158
          %v3160 = vld [vmem:[#allocation11] sm:$0xff]
          %v3161 = vpack.c.bf16 %v1060, %v1060
          %v3163 = vunpack.c.l.b16 %v3160
          %v3164 = vunpack.c.h.b16 %v3160
          %v3165 = vpack.c.b16 %v3163, %v3163
          %v3166 = vpack.c.b16 %v3164, %v3164
          %vm3167 = vcmask 64512
          %v3169 = vsel %vm3167, %v3161, 0
          %vm3171 = vcmask 1043456
          %v3173 = vsel %vm3171, %v3165, 0
          %v3176 = vsel %vm3171, %v3166, 0
          %3178 = vmatpush.bf16.msra.mxu0 0
          %3179 = vmatpush.bf16.msra.mxu0 0
          %3180 = vmatpush.bf16.msra.mxu0 0
          %3181 = vmatpush.bf16.msra.mxu0 0
          %3182 = vmatpush.bf16.msra.mxu0 0
          %3183 = vmatpush.bf16.msra.mxu0 0
          %3184 = vmatpush.bf16.msra.mxu0 0
          %3185 = vmatpush.bf16.msra.mxu0 %v3173
          %3186 = vmatmul.bf16.gmra.mxu0 %v3169
          %v3187 = vpop.f32.mrf.mxu0
          %v3188 = vadd.f32 0.0, %v3187
          %v3189 = vpop.f32.mrf.mxu0
          %3190 = vdwg.mxu0
          %3191 = vmatpush.bf16.msra.mxu0 0
          %3192 = vmatpush.bf16.msra.mxu0 0
          %3193 = vmatpush.bf16.msra.mxu0 0
          %3194 = vmatpush.bf16.msra.mxu0 0
          %3195 = vmatpush.bf16.msra.mxu0 0
          %3196 = vmatpush.bf16.msra.mxu0 0
          %3197 = vmatpush.bf16.msra.mxu0 0
          %3198 = vmatpush.bf16.msra.mxu0 %v3176
          %3199 = vmatmul.bf16.gmra.mxu0 %v3169
          %v3200 = vpop.f32.mrf.mxu0
          %v3201 = vadd.f32 0.0, %v3200
          %v3202 = vpop.f32.mrf.mxu0
          %3203 = vdwg.mxu0
          %v3204 = vpack.c.bf16 %v3201, %v3188
          %v3206 = vrot.slane %v3204, 3
          %v3209 = vsel %vm1109, %v3204, %v3206
          %v3211 = vsel %vm1114, %v3204, %v3206
          %v3213 = vrot.slane %v3211, 1
          %v3214 = vsel %vm1118, %v3204, %v3206
          %v3216 = vrot.slane %v3214, 2
          %v3217 = vsel %vm1122, %v3204, %v3206
          %v3219 = vrot.slane %v3217, 3
          %v3220 = vunpack.i.l.s16 %v3209
          %v3221 = vunpack.i.h.s16 %v3209
          %v3222 = vunpack.i.l.s16 %v3213
          %v3223 = vunpack.i.h.s16 %v3213
          %v3224 = vunpack.i.l.s16 %v3216
          %v3225 = vunpack.i.h.s16 %v3216
          %v3226 = vunpack.i.l.s16 %v3219
          %v3227 = vunpack.i.h.s16 %v3219
          %v3228 = vpack.i.b16 %v3220, %v3220
          %v3229 = vpack.i.b16 %v3221, %v3221
          %v3230 = vpack.i.b16 %v3222, %v3222
          %v3231 = vpack.i.b16 %v3223, %v3223
          %v3232 = vpack.i.b16 %v3224, %v3224
          %v3233 = vpack.i.b16 %v3225, %v3225
          %v3234 = vpack.i.b16 %v3226, %v3226
          %v3235 = vpack.i.b16 %v3227, %v3227
          %v3237 = vunpack.c.l.s4 286326784
          %v3238 = vunpack.c.0.s8 %v3237
          %v3239 = vperm.slane %v3228, %v3238
          %v3241 = vunpack.c.l.s4 286326784
          %v3242 = vunpack.c.0.s8 %v3241
          %v3243 = vperm.slane %v3229, %v3242
          %v3245 = vunpack.c.l.s4 286326784
          %v3246 = vunpack.c.0.s8 %v3245
          %v3247 = vperm.slane %v3230, %v3246
          %v3249 = vunpack.c.l.s4 286326784
          %v3250 = vunpack.c.0.s8 %v3249
          %v3251 = vperm.slane %v3231, %v3250
          %v3253 = vunpack.c.l.s4 286326784
          %v3254 = vunpack.c.0.s8 %v3253
          %v3255 = vperm.slane %v3232, %v3254
          %v3257 = vunpack.c.l.s4 286326784
          %v3258 = vunpack.c.0.s8 %v3257
          %v3259 = vperm.slane %v3233, %v3258
          %v3261 = vunpack.c.l.s4 286326784
          %v3262 = vunpack.c.0.s8 %v3261
          %v3263 = vperm.slane %v3234, %v3262
          %v3265 = vunpack.c.l.s4 286326784
          %v3266 = vunpack.c.0.s8 %v3265
          %v3267 = vperm.slane %v3235, %v3266
          %v3276 = vld [vmem:[#allocation2 + $0x10] sm:$0x11]
          %v3277 = vsel %vm1188, %v3239, %v3276
          %3278 = vst [vmem:[#allocation2 + $0x10] sm:$0x11] %v3277
          %v3279 = vld [vmem:[#allocation2 + $0x28] sm:$0x11]
          %v3280 = vsel %vm1188, %v3243, %v3279
          %3281 = vst [vmem:[#allocation2 + $0x28] sm:$0x11] %v3280
          %v3282 = vld [vmem:[#allocation2 + $0x40] sm:$0x11]
          %v3283 = vsel %vm1188, %v3247, %v3282
          %3284 = vst [vmem:[#allocation2 + $0x40] sm:$0x11] %v3283
          %v3285 = vld [vmem:[#allocation2 + $0x58] sm:$0x11]
          %v3286 = vsel %vm1188, %v3251, %v3285
          %3287 = vst [vmem:[#allocation2 + $0x58] sm:$0x11] %v3286
          %v3288 = vld [vmem:[#allocation2 + $0x70] sm:$0x11]
          %v3289 = vsel %vm1188, %v3255, %v3288
          %3290 = vst [vmem:[#allocation2 + $0x70] sm:$0x11] %v3289
          %v3291 = vld [vmem:[#allocation2 + $0x88] sm:$0x11]
          %v3292 = vsel %vm1188, %v3259, %v3291
          %3293 = vst [vmem:[#allocation2 + $0x88] sm:$0x11] %v3292
          %v3294 = vld [vmem:[#allocation2 + $0xa0] sm:$0x11]
          %v3295 = vsel %vm1188, %v3263, %v3294
          %3296 = vst [vmem:[#allocation2 + $0xa0] sm:$0x11] %v3295
          %v3297 = vld [vmem:[#allocation2 + $0xb8] sm:$0x11]
          %v3298 = vsel %vm1188, %v3267, %v3297
          %3299 = vst [vmem:[#allocation2 + $0xb8] sm:$0x11] %v3298
          %3301 = vrot.lane.b32.xlu0 %v3161, 120
          %v3302 = vpop.permute.xlu0 %3301
          %v3304 = vsel %vm3167, %v3302, 0
          %3306 = vmatpush.bf16.msra.mxu0 0
          %3307 = vmatpush.bf16.msra.mxu0 0
          %3308 = vmatpush.bf16.msra.mxu0 0
          %3309 = vmatpush.bf16.msra.mxu0 0
          %3310 = vmatpush.bf16.msra.mxu0 0
          %3311 = vmatpush.bf16.msra.mxu0 0
          %3312 = vmatpush.bf16.msra.mxu0 0
          %3313 = vmatpush.bf16.msra.mxu0 %v3173
          %3314 = vmatmul.bf16.gmra.mxu0 %v3304
          %v3315 = vpop.f32.mrf.mxu0
          %v3316 = vadd.f32 0.0, %v3315
          %v3317 = vpop.f32.mrf.mxu0
          %3318 = vdwg.mxu0
          %3319 = vmatpush.bf16.msra.mxu0 0
          %3320 = vmatpush.bf16.msra.mxu0 0
          %3321 = vmatpush.bf16.msra.mxu0 0
          %3322 = vmatpush.bf16.msra.mxu0 0
          %3323 = vmatpush.bf16.msra.mxu0 0
          %3324 = vmatpush.bf16.msra.mxu0 0
          %3325 = vmatpush.bf16.msra.mxu0 0
          %3326 = vmatpush.bf16.msra.mxu0 %v3176
          %3327 = vmatmul.bf16.gmra.mxu0 %v3304
          %v3328 = vpop.f32.mrf.mxu0
          %v3329 = vadd.f32 0.0, %v3328
          %v3330 = vpop.f32.mrf.mxu0
          %3331 = vdwg.mxu0
          %v3332 = vpack.c.bf16 %v3329, %v3316
          %v3334 = vrot.slane %v3332, 3
          %v3337 = vsel %vm1109, %v3332, %v3334
          %v3339 = vsel %vm1114, %v3332, %v3334
          %v3341 = vrot.slane %v3339, 1
          %v3342 = vsel %vm1118, %v3332, %v3334
          %v3344 = vrot.slane %v3342, 2
          %v3345 = vsel %vm1122, %v3332, %v3334
          %v3347 = vrot.slane %v3345, 3
          %v3348 = vunpack.i.l.s16 %v3337
          %v3349 = vunpack.i.h.s16 %v3337
          %v3350 = vunpack.i.l.s16 %v3341
          %v3351 = vunpack.i.h.s16 %v3341
          %v3352 = vunpack.i.l.s16 %v3344
          %v3353 = vunpack.i.h.s16 %v3344
          %v3354 = vunpack.i.l.s16 %v3347
          %v3355 = vunpack.i.h.s16 %v3347
          %v3356 = vpack.i.b16 %v3348, %v3348
          %v3357 = vpack.i.b16 %v3349, %v3349
          %v3358 = vpack.i.b16 %v3350, %v3350
          %v3359 = vpack.i.b16 %v3351, %v3351
          %v3360 = vpack.i.b16 %v3352, %v3352
          %v3361 = vpack.i.b16 %v3353, %v3353
          %v3362 = vpack.i.b16 %v3354, %v3354
          %v3363 = vpack.i.b16 %v3355, %v3355
          %v3365 = vunpack.c.l.s4 286326784
          %v3366 = vunpack.c.0.s8 %v3365
          %v3367 = vperm.slane %v3356, %v3366
          %v3369 = vunpack.c.l.s4 286326784
          %v3370 = vunpack.c.0.s8 %v3369
          %v3371 = vperm.slane %v3357, %v3370
          %v3373 = vunpack.c.l.s4 286326784
          %v3374 = vunpack.c.0.s8 %v3373
          %v3375 = vperm.slane %v3358, %v3374
          %v3377 = vunpack.c.l.s4 286326784
          %v3378 = vunpack.c.0.s8 %v3377
          %v3379 = vperm.slane %v3359, %v3378
          %v3381 = vunpack.c.l.s4 286326784
          %v3382 = vunpack.c.0.s8 %v3381
          %v3383 = vperm.slane %v3360, %v3382
          %v3385 = vunpack.c.l.s4 286326784
          %v3386 = vunpack.c.0.s8 %v3385
          %v3387 = vperm.slane %v3361, %v3386
          %v3389 = vunpack.c.l.s4 286326784
          %v3390 = vunpack.c.0.s8 %v3389
          %v3391 = vperm.slane %v3362, %v3390
          %v3393 = vunpack.c.l.s4 286326784
          %v3394 = vunpack.c.0.s8 %v3393
          %v3395 = vperm.slane %v3363, %v3394
          %v3404 = vld [vmem:[#allocation2 + $0x10] sm:$0x11]
          %v3405 = vsel %vm1321, %v3367, %v3404
          %3406 = vst [vmem:[#allocation2 + $0x10] sm:$0x11] %v3405
          %v3407 = vld [vmem:[#allocation2 + $0x28] sm:$0x11]
          %v3408 = vsel %vm1321, %v3371, %v3407
          %3409 = vst [vmem:[#allocation2 + $0x28] sm:$0x11] %v3408
          %v3410 = vld [vmem:[#allocation2 + $0x40] sm:$0x11]
          %v3411 = vsel %vm1321, %v3375, %v3410
          %3412 = vst [vmem:[#allocation2 + $0x40] sm:$0x11] %v3411
          %v3413 = vld [vmem:[#allocation2 + $0x58] sm:$0x11]
          %v3414 = vsel %vm1321, %v3379, %v3413
          %3415 = vst [vmem:[#allocation2 + $0x58] sm:$0x11] %v3414
          %v3416 = vld [vmem:[#allocation2 + $0x70] sm:$0x11]
          %v3417 = vsel %vm1321, %v3383, %v3416
          %3418 = vst [vmem:[#allocation2 + $0x70] sm:$0x11] %v3417
          %v3419 = vld [vmem:[#allocation2 + $0x88] sm:$0x11]
          %v3420 = vsel %vm1321, %v3387, %v3419
          %3421 = vst [vmem:[#allocation2 + $0x88] sm:$0x11] %v3420
          %v3422 = vld [vmem:[#allocation2 + $0xa0] sm:$0x11]
          %v3423 = vsel %vm1321, %v3391, %v3422
          %3424 = vst [vmem:[#allocation2 + $0xa0] sm:$0x11] %v3423
          %v3425 = vld [vmem:[#allocation2 + $0xb8] sm:$0x11]
          %v3426 = vsel %vm1321, %v3395, %v3425
          %3427 = vst [vmem:[#allocation2 + $0xb8] sm:$0x11] %v3426
          %3428 = vrot.lane.b32.xlu0 %v3161, 112
          %v3429 = vpop.permute.xlu0 %3428
          %v3431 = vsel %vm3167, %v3429, 0
          %3433 = vmatpush.bf16.msra.mxu0 0
          %3434 = vmatpush.bf16.msra.mxu0 0
          %3435 = vmatpush.bf16.msra.mxu0 0
          %3436 = vmatpush.bf16.msra.mxu0 0
          %3437 = vmatpush.bf16.msra.mxu0 0
          %3438 = vmatpush.bf16.msra.mxu0 0
          %3439 = vmatpush.bf16.msra.mxu0 0
          %3440 = vmatpush.bf16.msra.mxu0 %v3173
          %3441 = vmatmul.bf16.gmra.mxu0 %v3431
          %v3442 = vpop.f32.mrf.mxu0
          %v3443 = vadd.f32 0.0, %v3442
          %v3444 = vpop.f32.mrf.mxu0
          %3445 = vdwg.mxu0
          %3446 = vmatpush.bf16.msra.mxu0 0
          %3447 = vmatpush.bf16.msra.mxu0 0
          %3448 = vmatpush.bf16.msra.mxu0 0
          %3449 = vmatpush.bf16.msra.mxu0 0
          %3450 = vmatpush.bf16.msra.mxu0 0
          %3451 = vmatpush.bf16.msra.mxu0 0
          %3452 = vmatpush.bf16.msra.mxu0 0
          %3453 = vmatpush.bf16.msra.mxu0 %v3176
          %3454 = vmatmul.bf16.gmra.mxu0 %v3431
          %v3455 = vpop.f32.mrf.mxu0
          %v3456 = vadd.f32 0.0, %v3455
          %v3457 = vpop.f32.mrf.mxu0
          %3458 = vdwg.mxu0
          %v3459 = vpack.c.bf16 %v3456, %v3443
          %v3461 = vrot.slane %v3459, 3
          %v3464 = vsel %vm1109, %v3459, %v3461
          %v3466 = vsel %vm1114, %v3459, %v3461
          %v3468 = vrot.slane %v3466, 1
          %v3469 = vsel %vm1118, %v3459, %v3461
          %v3471 = vrot.slane %v3469, 2
          %v3472 = vsel %vm1122, %v3459, %v3461
          %v3474 = vrot.slane %v3472, 3
          %v3475 = vunpack.i.l.s16 %v3464
          %v3476 = vunpack.i.h.s16 %v3464
          %v3477 = vunpack.i.l.s16 %v3468
          %v3478 = vunpack.i.h.s16 %v3468
          %v3479 = vunpack.i.l.s16 %v3471
          %v3480 = vunpack.i.h.s16 %v3471
          %v3481 = vunpack.i.l.s16 %v3474
          %v3482 = vunpack.i.h.s16 %v3474
          %v3483 = vpack.i.b16 %v3475, %v3475
          %v3484 = vpack.i.b16 %v3476, %v3476
          %v3485 = vpack.i.b16 %v3477, %v3477
          %v3486 = vpack.i.b16 %v3478, %v3478
          %v3487 = vpack.i.b16 %v3479, %v3479
          %v3488 = vpack.i.b16 %v3480, %v3480
          %v3489 = vpack.i.b16 %v3481, %v3481
          %v3490 = vpack.i.b16 %v3482, %v3482
          %v3492 = vunpack.c.l.s4 286326784
          %v3493 = vunpack.c.0.s8 %v3492
          %v3494 = vperm.slane %v3483, %v3493
          %v3496 = vunpack.c.l.s4 286326784
          %v3497 = vunpack.c.0.s8 %v3496
          %v3498 = vperm.slane %v3484, %v3497
          %v3500 = vunpack.c.l.s4 286326784
          %v3501 = vunpack.c.0.s8 %v3500
          %v3502 = vperm.slane %v3485, %v3501
          %v3504 = vunpack.c.l.s4 286326784
          %v3505 = vunpack.c.0.s8 %v3504
          %v3506 = vperm.slane %v3486, %v3505
          %v3508 = vunpack.c.l.s4 286326784
          %v3509 = vunpack.c.0.s8 %v3508
          %v3510 = vperm.slane %v3487, %v3509
          %v3512 = vunpack.c.l.s4 286326784
          %v3513 = vunpack.c.0.s8 %v3512
          %v3514 = vperm.slane %v3488, %v3513
          %v3516 = vunpack.c.l.s4 286326784
          %v3517 = vunpack.c.0.s8 %v3516
          %v3518 = vperm.slane %v3489, %v3517
          %v3520 = vunpack.c.l.s4 286326784
          %v3521 = vunpack.c.0.s8 %v3520
          %v3522 = vperm.slane %v3490, %v3521
          %v3531 = vld [vmem:[#allocation2 + $0x10] sm:$0x22]
          %v3532 = vsel %vm1455, %v3494, %v3531
          %3533 = vst [vmem:[#allocation2 + $0x10] sm:$0x22] %v3532
          %v3534 = vld [vmem:[#allocation2 + $0x28] sm:$0x22]
          %v3535 = vsel %vm1455, %v3498, %v3534
          %3536 = vst [vmem:[#allocation2 + $0x28] sm:$0x22] %v3535
          %v3537 = vld [vmem:[#allocation2 + $0x40] sm:$0x22]
          %v3538 = vsel %vm1455, %v3502, %v3537
          %3539 = vst [vmem:[#allocation2 + $0x40] sm:$0x22] %v3538
          %v3540 = vld [vmem:[#allocation2 + $0x58] sm:$0x22]
          %v3541 = vsel %vm1455, %v3506, %v3540
          %3542 = vst [vmem:[#allocation2 + $0x58] sm:$0x22] %v3541
          %v3543 = vld [vmem:[#allocation2 + $0x70] sm:$0x22]
          %v3544 = vsel %vm1455, %v3510, %v3543
          %3545 = vst [vmem:[#allocation2 + $0x70] sm:$0x22] %v3544
          %v3546 = vld [vmem:[#allocation2 + $0x88] sm:$0x22]
          %v3547 = vsel %vm1455, %v3514, %v3546
          %3548 = vst [vmem:[#allocation2 + $0x88] sm:$0x22] %v3547
          %v3549 = vld [vmem:[#allocation2 + $0xa0] sm:$0x22]
          %v3550 = vsel %vm1455, %v3518, %v3549
          %3551 = vst [vmem:[#allocation2 + $0xa0] sm:$0x22] %v3550
          %v3552 = vld [vmem:[#allocation2 + $0xb8] sm:$0x22]
          %v3553 = vsel %vm1455, %v3522, %v3552
          %3554 = vst [vmem:[#allocation2 + $0xb8] sm:$0x22] %v3553
          %3555 = vrot.lane.b32.xlu0 %v3161, 104
          %v3556 = vpop.permute.xlu0 %3555
          %v3558 = vsel %vm3167, %v3556, 0
          %3560 = vmatpush.bf16.msra.mxu0 0
          %3561 = vmatpush.bf16.msra.mxu0 0
          %3562 = vmatpush.bf16.msra.mxu0 0
          %3563 = vmatpush.bf16.msra.mxu0 0
          %3564 = vmatpush.bf16.msra.mxu0 0
          %3565 = vmatpush.bf16.msra.mxu0 0
          %3566 = vmatpush.bf16.msra.mxu0 0
          %3567 = vmatpush.bf16.msra.mxu0 %v3173
          %3568 = vmatmul.bf16.gmra.mxu0 %v3558
          %v3569 = vpop.f32.mrf.mxu0
          %v3570 = vadd.f32 0.0, %v3569
          %v3571 = vpop.f32.mrf.mxu0
          %3572 = vdwg.mxu0
          %3573 = vmatpush.bf16.msra.mxu0 0
          %3574 = vmatpush.bf16.msra.mxu0 0
          %3575 = vmatpush.bf16.msra.mxu0 0
          %3576 = vmatpush.bf16.msra.mxu0 0
          %3577 = vmatpush.bf16.msra.mxu0 0
          %3578 = vmatpush.bf16.msra.mxu0 0
          %3579 = vmatpush.bf16.msra.mxu0 0
          %3580 = vmatpush.bf16.msra.mxu0 %v3176
          %3581 = vmatmul.bf16.gmra.mxu0 %v3558
          %v3582 = vpop.f32.mrf.mxu0
          %v3583 = vadd.f32 0.0, %v3582
          %v3584 = vpop.f32.mrf.mxu0
          %3585 = vdwg.mxu0
          %v3586 = vpack.c.bf16 %v3583, %v3570
          %v3588 = vrot.slane %v3586, 3
          %v3591 = vsel %vm1109, %v3586, %v3588
          %v3593 = vsel %vm1114, %v3586, %v3588
          %v3595 = vrot.slane %v3593, 1
          %v3596 = vsel %vm1118, %v3586, %v3588
          %v3598 = vrot.slane %v3596, 2
          %v3599 = vsel %vm1122, %v3586, %v3588
          %v3601 = vrot.slane %v3599, 3
          %v3602 = vunpack.i.l.s16 %v3591
          %v3603 = vunpack.i.h.s16 %v3591
          %v3604 = vunpack.i.l.s16 %v3595
          %v3605 = vunpack.i.h.s16 %v3595
          %v3606 = vunpack.i.l.s16 %v3598
          %v3607 = vunpack.i.h.s16 %v3598
          %v3608 = vunpack.i.l.s16 %v3601
          %v3609 = vunpack.i.h.s16 %v3601
          %v3610 = vpack.i.b16 %v3602, %v3602
          %v3611 = vpack.i.b16 %v3603, %v3603
          %v3612 = vpack.i.b16 %v3604, %v3604
          %v3613 = vpack.i.b16 %v3605, %v3605
          %v3614 = vpack.i.b16 %v3606, %v3606
          %v3615 = vpack.i.b16 %v3607, %v3607
          %v3616 = vpack.i.b16 %v3608, %v3608
          %v3617 = vpack.i.b16 %v3609, %v3609
          %v3619 = vunpack.c.l.s4 286326784
          %v3620 = vunpack.c.0.s8 %v3619
          %v3621 = vperm.slane %v3610, %v3620
          %v3623 = vunpack.c.l.s4 286326784
          %v3624 = vunpack.c.0.s8 %v3623
          %v3625 = vperm.slane %v3611, %v3624
          %v3627 = vunpack.c.l.s4 286326784
          %v3628 = vunpack.c.0.s8 %v3627
          %v3629 = vperm.slane %v3612, %v3628
          %v3631 = vunpack.c.l.s4 286326784
          %v3632 = vunpack.c.0.s8 %v3631
          %v3633 = vperm.slane %v3613, %v3632
          %v3635 = vunpack.c.l.s4 286326784
          %v3636 = vunpack.c.0.s8 %v3635
          %v3637 = vperm.slane %v3614, %v3636
          %v3639 = vunpack.c.l.s4 286326784
          %v3640 = vunpack.c.0.s8 %v3639
          %v3641 = vperm.slane %v3615, %v3640
          %v3643 = vunpack.c.l.s4 286326784
          %v3644 = vunpack.c.0.s8 %v3643
          %v3645 = vperm.slane %v3616, %v3644
          %v3647 = vunpack.c.l.s4 286326784
          %v3648 = vunpack.c.0.s8 %v3647
          %v3649 = vperm.slane %v3617, %v3648
          %v3658 = vld [vmem:[#allocation2 + $0x10] sm:$0x22]
          %v3659 = vsel %vm1587, %v3621, %v3658
          %3660 = vst [vmem:[#allocation2 + $0x10] sm:$0x22] %v3659
          %v3661 = vld [vmem:[#allocation2 + $0x28] sm:$0x22]
          %v3662 = vsel %vm1587, %v3625, %v3661
          %3663 = vst [vmem:[#allocation2 + $0x28] sm:$0x22] %v3662
          %v3664 = vld [vmem:[#allocation2 + $0x40] sm:$0x22]
          %v3665 = vsel %vm1587, %v3629, %v3664
          %3666 = vst [vmem:[#allocation2 + $0x40] sm:$0x22] %v3665
          %v3667 = vld [vmem:[#allocation2 + $0x58] sm:$0x22]
          %v3668 = vsel %vm1587, %v3633, %v3667
          %3669 = vst [vmem:[#allocation2 + $0x58] sm:$0x22] %v3668
          %v3670 = vld [vmem:[#allocation2 + $0x70] sm:$0x22]
          %v3671 = vsel %vm1587, %v3637, %v3670
          %3672 = vst [vmem:[#allocation2 + $0x70] sm:$0x22] %v3671
          %v3673 = vld [vmem:[#allocation2 + $0x88] sm:$0x22]
          %v3674 = vsel %vm1587, %v3641, %v3673
          %3675 = vst [vmem:[#allocation2 + $0x88] sm:$0x22] %v3674
          %v3676 = vld [vmem:[#allocation2 + $0xa0] sm:$0x22]
          %v3677 = vsel %vm1587, %v3645, %v3676
          %3678 = vst [vmem:[#allocation2 + $0xa0] sm:$0x22] %v3677
          %v3679 = vld [vmem:[#allocation2 + $0xb8] sm:$0x22]
          %v3680 = vsel %vm1587, %v3649, %v3679
          %3681 = vst [vmem:[#allocation2 + $0xb8] sm:$0x22] %v3680
          %3682 = vrot.lane.b32.xlu0 %v3161, 96
          %v3683 = vpop.permute.xlu0 %3682
          %v3685 = vsel %vm3167, %v3683, 0
          %3687 = vmatpush.bf16.msra.mxu0 0
          %3688 = vmatpush.bf16.msra.mxu0 0
          %3689 = vmatpush.bf16.msra.mxu0 0
          %3690 = vmatpush.bf16.msra.mxu0 0
          %3691 = vmatpush.bf16.msra.mxu0 0
          %3692 = vmatpush.bf16.msra.mxu0 0
          %3693 = vmatpush.bf16.msra.mxu0 0
          %3694 = vmatpush.bf16.msra.mxu0 %v3173
          %3695 = vmatmul.bf16.gmra.mxu0 %v3685
          %v3696 = vpop.f32.mrf.mxu0
          %v3697 = vadd.f32 0.0, %v3696
          %v3698 = vpop.f32.mrf.mxu0
          %3699 = vdwg.mxu0
          %3700 = vmatpush.bf16.msra.mxu0 0
          %3701 = vmatpush.bf16.msra.mxu0 0
          %3702 = vmatpush.bf16.msra.mxu0 0
          %3703 = vmatpush.bf16.msra.mxu0 0
          %3704 = vmatpush.bf16.msra.mxu0 0
          %3705 = vmatpush.bf16.msra.mxu0 0
          %3706 = vmatpush.bf16.msra.mxu0 0
          %3707 = vmatpush.bf16.msra.mxu0 %v3176
          %3708 = vmatmul.bf16.gmra.mxu0 %v3685
          %v3709 = vpop.f32.mrf.mxu0
          %v3710 = vadd.f32 0.0, %v3709
          %v3711 = vpop.f32.mrf.mxu0
          %3712 = vdwg.mxu0
          %v3713 = vpack.c.bf16 %v3710, %v3697
          %v3715 = vrot.slane %v3713, 3
          %v3718 = vsel %vm1109, %v3713, %v3715
          %v3720 = vsel %vm1114, %v3713, %v3715
          %v3722 = vrot.slane %v3720, 1
          %v3723 = vsel %vm1118, %v3713, %v3715
          %v3725 = vrot.slane %v3723, 2
          %v3726 = vsel %vm1122, %v3713, %v3715
          %v3728 = vrot.slane %v3726, 3
          %v3729 = vunpack.i.l.s16 %v3718
          %v3730 = vunpack.i.h.s16 %v3718
          %v3731 = vunpack.i.l.s16 %v3722
          %v3732 = vunpack.i.h.s16 %v3722
          %v3733 = vunpack.i.l.s16 %v3725
          %v3734 = vunpack.i.h.s16 %v3725
          %v3735 = vunpack.i.l.s16 %v3728
          %v3736 = vunpack.i.h.s16 %v3728
          %v3737 = vpack.i.b16 %v3729, %v3729
          %v3738 = vpack.i.b16 %v3730, %v3730
          %v3739 = vpack.i.b16 %v3731, %v3731
          %v3740 = vpack.i.b16 %v3732, %v3732
          %v3741 = vpack.i.b16 %v3733, %v3733
          %v3742 = vpack.i.b16 %v3734, %v3734
          %v3743 = vpack.i.b16 %v3735, %v3735
          %v3744 = vpack.i.b16 %v3736, %v3736
          %v3746 = vunpack.c.l.s4 286326784
          %v3747 = vunpack.c.0.s8 %v3746
          %v3748 = vperm.slane %v3737, %v3747
          %v3750 = vunpack.c.l.s4 286326784
          %v3751 = vunpack.c.0.s8 %v3750
          %v3752 = vperm.slane %v3738, %v3751
          %v3754 = vunpack.c.l.s4 286326784
          %v3755 = vunpack.c.0.s8 %v3754
          %v3756 = vperm.slane %v3739, %v3755
          %v3758 = vunpack.c.l.s4 286326784
          %v3759 = vunpack.c.0.s8 %v3758
          %v3760 = vperm.slane %v3740, %v3759
          %v3762 = vunpack.c.l.s4 286326784
          %v3763 = vunpack.c.0.s8 %v3762
          %v3764 = vperm.slane %v3741, %v3763
          %v3766 = vunpack.c.l.s4 286326784
          %v3767 = vunpack.c.0.s8 %v3766
          %v3768 = vperm.slane %v3742, %v3767
          %v3770 = vunpack.c.l.s4 286326784
          %v3771 = vunpack.c.0.s8 %v3770
          %v3772 = vperm.slane %v3743, %v3771
          %v3774 = vunpack.c.l.s4 286326784
          %v3775 = vunpack.c.0.s8 %v3774
          %v3776 = vperm.slane %v3744, %v3775
          %v3785 = vld [vmem:[#allocation2 + $0x10] sm:$0x44]
          %v3786 = vsel %vm1721, %v3748, %v3785
          %3787 = vst [vmem:[#allocation2 + $0x10] sm:$0x44] %v3786
          %v3788 = vld [vmem:[#allocation2 + $0x28] sm:$0x44]
          %v3789 = vsel %vm1721, %v3752, %v3788
          %3790 = vst [vmem:[#allocation2 + $0x28] sm:$0x44] %v3789
          %v3791 = vld [vmem:[#allocation2 + $0x40] sm:$0x44]
          %v3792 = vsel %vm1721, %v3756, %v3791
          %3793 = vst [vmem:[#allocation2 + $0x40] sm:$0x44] %v3792
          %v3794 = vld [vmem:[#allocation2 + $0x58] sm:$0x44]
          %v3795 = vsel %vm1721, %v3760, %v3794
          %3796 = vst [vmem:[#allocation2 + $0x58] sm:$0x44] %v3795
          %v3797 = vld [vmem:[#allocation2 + $0x70] sm:$0x44]
          %v3798 = vsel %vm1721, %v3764, %v3797
          %3799 = vst [vmem:[#allocation2 + $0x70] sm:$0x44] %v3798
          %v3800 = vld [vmem:[#allocation2 + $0x88] sm:$0x44]
          %v3801 = vsel %vm1721, %v3768, %v3800
          %3802 = vst [vmem:[#allocation2 + $0x88] sm:$0x44] %v3801
          %v3803 = vld [vmem:[#allocation2 + $0xa0] sm:$0x44]
          %v3804 = vsel %vm1721, %v3772, %v3803
          %3805 = vst [vmem:[#allocation2 + $0xa0] sm:$0x44] %v3804
          %v3806 = vld [vmem:[#allocation2 + $0xb8] sm:$0x44]
          %v3807 = vsel %vm1721, %v3776, %v3806
          %3808 = vst [vmem:[#allocation2 + $0xb8] sm:$0x44] %v3807
          %3809 = vrot.lane.b32.xlu0 %v3161, 88
          %v3810 = vpop.permute.xlu0 %3809
          %v3812 = vsel %vm3167, %v3810, 0
          %3814 = vmatpush.bf16.msra.mxu0 0
          %3815 = vmatpush.bf16.msra.mxu0 0
          %3816 = vmatpush.bf16.msra.mxu0 0
          %3817 = vmatpush.bf16.msra.mxu0 0
          %3818 = vmatpush.bf16.msra.mxu0 0
          %3819 = vmatpush.bf16.msra.mxu0 0
          %3820 = vmatpush.bf16.msra.mxu0 0
          %3821 = vmatpush.bf16.msra.mxu0 %v3173
          %3822 = vmatmul.bf16.gmra.mxu0 %v3812
          %v3823 = vpop.f32.mrf.mxu0
          %v3824 = vadd.f32 0.0, %v3823
          %v3825 = vpop.f32.mrf.mxu0
          %3826 = vdwg.mxu0
          %3827 = vmatpush.bf16.msra.mxu0 0
          %3828 = vmatpush.bf16.msra.mxu0 0
          %3829 = vmatpush.bf16.msra.mxu0 0
          %3830 = vmatpush.bf16.msra.mxu0 0
          %3831 = vmatpush.bf16.msra.mxu0 0
          %3832 = vmatpush.bf16.msra.mxu0 0
          %3833 = vmatpush.bf16.msra.mxu0 0
          %3834 = vmatpush.bf16.msra.mxu0 %v3176
          %3835 = vmatmul.bf16.gmra.mxu0 %v3812
          %v3836 = vpop.f32.mrf.mxu0
          %v3837 = vadd.f32 0.0, %v3836
          %v3838 = vpop.f32.mrf.mxu0
          %3839 = vdwg.mxu0
          %v3840 = vpack.c.bf16 %v3837, %v3824
          %v3842 = vrot.slane %v3840, 3
          %v3845 = vsel %vm1109, %v3840, %v3842
          %v3847 = vsel %vm1114, %v3840, %v3842
          %v3849 = vrot.slane %v3847, 1
          %v3850 = vsel %vm1118, %v3840, %v3842
          %v3852 = vrot.slane %v3850, 2
          %v3853 = vsel %vm1122, %v3840, %v3842
          %v3855 = vrot.slane %v3853, 3
          %v3856 = vunpack.i.l.s16 %v3845
          %v3857 = vunpack.i.h.s16 %v3845
          %v3858 = vunpack.i.l.s16 %v3849
          %v3859 = vunpack.i.h.s16 %v3849
          %v3860 = vunpack.i.l.s16 %v3852
          %v3861 = vunpack.i.h.s16 %v3852
          %v3862 = vunpack.i.l.s16 %v3855
          %v3863 = vunpack.i.h.s16 %v3855
          %v3864 = vpack.i.b16 %v3856, %v3856
          %v3865 = vpack.i.b16 %v3857, %v3857
          %v3866 = vpack.i.b16 %v3858, %v3858
          %v3867 = vpack.i.b16 %v3859, %v3859
          %v3868 = vpack.i.b16 %v3860, %v3860
          %v3869 = vpack.i.b16 %v3861, %v3861
          %v3870 = vpack.i.b16 %v3862, %v3862
          %v3871 = vpack.i.b16 %v3863, %v3863
          %v3873 = vunpack.c.l.s4 286326784
          %v3874 = vunpack.c.0.s8 %v3873
          %v3875 = vperm.slane %v3864, %v3874
          %v3877 = vunpack.c.l.s4 286326784
          %v3878 = vunpack.c.0.s8 %v3877
          %v3879 = vperm.slane %v3865, %v3878
          %v3881 = vunpack.c.l.s4 286326784
          %v3882 = vunpack.c.0.s8 %v3881
          %v3883 = vperm.slane %v3866, %v3882
          %v3885 = vunpack.c.l.s4 286326784
          %v3886 = vunpack.c.0.s8 %v3885
          %v3887 = vperm.slane %v3867, %v3886
          %v3889 = vunpack.c.l.s4 286326784
          %v3890 = vunpack.c.0.s8 %v3889
          %v3891 = vperm.slane %v3868, %v3890
          %v3893 = vunpack.c.l.s4 286326784
          %v3894 = vunpack.c.0.s8 %v3893
          %v3895 = vperm.slane %v3869, %v3894
          %v3897 = vunpack.c.l.s4 286326784
          %v3898 = vunpack.c.0.s8 %v3897
          %v3899 = vperm.slane %v3870, %v3898
          %v3901 = vunpack.c.l.s4 286326784
          %v3902 = vunpack.c.0.s8 %v3901
          %v3903 = vperm.slane %v3871, %v3902
          %v3912 = vld [vmem:[#allocation2 + $0x10] sm:$0x44]
          %v3913 = vsel %vm1853, %v3875, %v3912
          %3914 = vst [vmem:[#allocation2 + $0x10] sm:$0x44] %v3913
          %v3915 = vld [vmem:[#allocation2 + $0x28] sm:$0x44]
          %v3916 = vsel %vm1853, %v3879, %v3915
          %3917 = vst [vmem:[#allocation2 + $0x28] sm:$0x44] %v3916
          %v3918 = vld [vmem:[#allocation2 + $0x40] sm:$0x44]
          %v3919 = vsel %vm1853, %v3883, %v3918
          %3920 = vst [vmem:[#allocation2 + $0x40] sm:$0x44] %v3919
          %v3921 = vld [vmem:[#allocation2 + $0x58] sm:$0x44]
          %v3922 = vsel %vm1853, %v3887, %v3921
          %3923 = vst [vmem:[#allocation2 + $0x58] sm:$0x44] %v3922
          %v3924 = vld [vmem:[#allocation2 + $0x70] sm:$0x44]
          %v3925 = vsel %vm1853, %v3891, %v3924
          %3926 = vst [vmem:[#allocation2 + $0x70] sm:$0x44] %v3925
          %v3927 = vld [vmem:[#allocation2 + $0x88] sm:$0x44]
          %v3928 = vsel %vm1853, %v3895, %v3927
          %3929 = vst [vmem:[#allocation2 + $0x88] sm:$0x44] %v3928
          %v3930 = vld [vmem:[#allocation2 + $0xa0] sm:$0x44]
          %v3931 = vsel %vm1853, %v3899, %v3930
          %3932 = vst [vmem:[#allocation2 + $0xa0] sm:$0x44] %v3931
          %v3933 = vld [vmem:[#allocation2 + $0xb8] sm:$0x44]
          %v3934 = vsel %vm1853, %v3903, %v3933
          %3935 = vst [vmem:[#allocation2 + $0xb8] sm:$0x44] %v3934
          %3936 = vrot.lane.b32.xlu0 %v3161, 80
          %v3937 = vpop.permute.xlu0 %3936
          %v3939 = vsel %vm3167, %v3937, 0
          %3941 = vmatpush.bf16.msra.mxu0 0
          %3942 = vmatpush.bf16.msra.mxu0 0
          %3943 = vmatpush.bf16.msra.mxu0 0
          %3944 = vmatpush.bf16.msra.mxu0 0
          %3945 = vmatpush.bf16.msra.mxu0 0
          %3946 = vmatpush.bf16.msra.mxu0 0
          %3947 = vmatpush.bf16.msra.mxu0 0
          %3948 = vmatpush.bf16.msra.mxu0 %v3173
          %3949 = vmatmul.bf16.gmra.mxu0 %v3939
          %v3950 = vpop.f32.mrf.mxu0
          %v3951 = vadd.f32 0.0, %v3950
          %v3952 = vpop.f32.mrf.mxu0
          %3953 = vdwg.mxu0
          %3954 = vmatpush.bf16.msra.mxu0 0
          %3955 = vmatpush.bf16.msra.mxu0 0
          %3956 = vmatpush.bf16.msra.mxu0 0
          %3957 = vmatpush.bf16.msra.mxu0 0
          %3958 = vmatpush.bf16.msra.mxu0 0
          %3959 = vmatpush.bf16.msra.mxu0 0
          %3960 = vmatpush.bf16.msra.mxu0 0
          %3961 = vmatpush.bf16.msra.mxu0 %v3176
          %3962 = vmatmul.bf16.gmra.mxu0 %v3939
          %v3963 = vpop.f32.mrf.mxu0
          %v3964 = vadd.f32 0.0, %v3963
          %v3965 = vpop.f32.mrf.mxu0
          %3966 = vdwg.mxu0
          %v3967 = vpack.c.bf16 %v3964, %v3951
          %v3969 = vrot.slane %v3967, 3
          %v3972 = vsel %vm1109, %v3967, %v3969
          %v3974 = vsel %vm1114, %v3967, %v3969
          %v3976 = vrot.slane %v3974, 1
          %v3977 = vsel %vm1118, %v3967, %v3969
          %v3979 = vrot.slane %v3977, 2
          %v3980 = vsel %vm1122, %v3967, %v3969
          %v3982 = vrot.slane %v3980, 3
          %v3983 = vunpack.i.l.s16 %v3972
          %v3984 = vunpack.i.h.s16 %v3972
          %v3985 = vunpack.i.l.s16 %v3976
          %v3986 = vunpack.i.h.s16 %v3976
          %v3987 = vunpack.i.l.s16 %v3979
          %v3988 = vunpack.i.h.s16 %v3979
          %v3989 = vunpack.i.l.s16 %v3982
          %v3990 = vunpack.i.h.s16 %v3982
          %v3991 = vpack.i.b16 %v3983, %v3983
          %v3992 = vpack.i.b16 %v3984, %v3984
          %v3993 = vpack.i.b16 %v3985, %v3985
          %v3994 = vpack.i.b16 %v3986, %v3986
          %v3995 = vpack.i.b16 %v3987, %v3987
          %v3996 = vpack.i.b16 %v3988, %v3988
          %v3997 = vpack.i.b16 %v3989, %v3989
          %v3998 = vpack.i.b16 %v3990, %v3990
          %v4000 = vunpack.c.l.s4 286326784
          %v4001 = vunpack.c.0.s8 %v4000
          %v4002 = vperm.slane %v3991, %v4001
          %v4004 = vunpack.c.l.s4 286326784
          %v4005 = vunpack.c.0.s8 %v4004
          %v4006 = vperm.slane %v3992, %v4005
          %v4008 = vunpack.c.l.s4 286326784
          %v4009 = vunpack.c.0.s8 %v4008
          %v4010 = vperm.slane %v3993, %v4009
          %v4012 = vunpack.c.l.s4 286326784
          %v4013 = vunpack.c.0.s8 %v4012
          %v4014 = vperm.slane %v3994, %v4013
          %v4016 = vunpack.c.l.s4 286326784
          %v4017 = vunpack.c.0.s8 %v4016
          %v4018 = vperm.slane %v3995, %v4017
          %v4020 = vunpack.c.l.s4 286326784
          %v4021 = vunpack.c.0.s8 %v4020
          %v4022 = vperm.slane %v3996, %v4021
          %v4024 = vunpack.c.l.s4 286326784
          %v4025 = vunpack.c.0.s8 %v4024
          %v4026 = vperm.slane %v3997, %v4025
          %v4028 = vunpack.c.l.s4 286326784
          %v4029 = vunpack.c.0.s8 %v4028
          %v4030 = vperm.slane %v3998, %v4029
          %v4039 = vld [vmem:[#allocation2 + $0x10] sm:$0x88]
          %v4040 = vsel %vm1987, %v4002, %v4039
          %4041 = vst [vmem:[#allocation2 + $0x10] sm:$0x88] %v4040
          %v4042 = vld [vmem:[#allocation2 + $0x28] sm:$0x88]
          %v4043 = vsel %vm1987, %v4006, %v4042
          %4044 = vst [vmem:[#allocation2 + $0x28] sm:$0x88] %v4043
          %v4045 = vld [vmem:[#allocation2 + $0x40] sm:$0x88]
          %v4046 = vsel %vm1987, %v4010, %v4045
          %4047 = vst [vmem:[#allocation2 + $0x40] sm:$0x88] %v4046
          %v4048 = vld [vmem:[#allocation2 + $0x58] sm:$0x88]
          %v4049 = vsel %vm1987, %v4014, %v4048
          %4050 = vst [vmem:[#allocation2 + $0x58] sm:$0x88] %v4049
          %v4051 = vld [vmem:[#allocation2 + $0x70] sm:$0x88]
          %v4052 = vsel %vm1987, %v4018, %v4051
          %4053 = vst [vmem:[#allocation2 + $0x70] sm:$0x88] %v4052
          %v4054 = vld [vmem:[#allocation2 + $0x88] sm:$0x88]
          %v4055 = vsel %vm1987, %v4022, %v4054
          %4056 = vst [vmem:[#allocation2 + $0x88] sm:$0x88] %v4055
          %v4057 = vld [vmem:[#allocation2 + $0xa0] sm:$0x88]
          %v4058 = vsel %vm1987, %v4026, %v4057
          %4059 = vst [vmem:[#allocation2 + $0xa0] sm:$0x88] %v4058
          %v4060 = vld [vmem:[#allocation2 + $0xb8] sm:$0x88]
          %v4061 = vsel %vm1987, %v4030, %v4060
          %4062 = vst [vmem:[#allocation2 + $0xb8] sm:$0x88] %v4061
          %4063 = vrot.lane.b32.xlu0 %v3161, 72
          %v4064 = vpop.permute.xlu0 %4063
          %v4066 = vsel %vm3167, %v4064, 0
          %4068 = vmatpush.bf16.msra.mxu0 0
          %4069 = vmatpush.bf16.msra.mxu0 0
          %4070 = vmatpush.bf16.msra.mxu0 0
          %4071 = vmatpush.bf16.msra.mxu0 0
          %4072 = vmatpush.bf16.msra.mxu0 0
          %4073 = vmatpush.bf16.msra.mxu0 0
          %4074 = vmatpush.bf16.msra.mxu0 0
          %4075 = vmatpush.bf16.msra.mxu0 %v3173
          %4076 = vmatmul.bf16.gmra.mxu0 %v4066
          %v4077 = vpop.f32.mrf.mxu0
          %v4078 = vadd.f32 0.0, %v4077
          %v4079 = vpop.f32.mrf.mxu0
          %4080 = vdwg.mxu0
          %4081 = vmatpush.bf16.msra.mxu0 0
          %4082 = vmatpush.bf16.msra.mxu0 0
          %4083 = vmatpush.bf16.msra.mxu0 0
          %4084 = vmatpush.bf16.msra.mxu0 0
          %4085 = vmatpush.bf16.msra.mxu0 0
          %4086 = vmatpush.bf16.msra.mxu0 0
          %4087 = vmatpush.bf16.msra.mxu0 0
          %4088 = vmatpush.bf16.msra.mxu0 %v3176
          %4089 = vmatmul.bf16.gmra.mxu0 %v4066
          %v4090 = vpop.f32.mrf.mxu0
          %v4091 = vadd.f32 0.0, %v4090
          %v4092 = vpop.f32.mrf.mxu0
          %4093 = vdwg.mxu0
          %v4094 = vpack.c.bf16 %v4091, %v4078
          %v4096 = vrot.slane %v4094, 3
          %v4099 = vsel %vm1109, %v4094, %v4096
          %v4101 = vsel %vm1114, %v4094, %v4096
          %v4103 = vrot.slane %v4101, 1
          %v4104 = vsel %vm1118, %v4094, %v4096
          %v4106 = vrot.slane %v4104, 2
          %v4107 = vsel %vm1122, %v4094, %v4096
          %v4109 = vrot.slane %v4107, 3
          %v4110 = vunpack.i.l.s16 %v4099
          %v4111 = vunpack.i.h.s16 %v4099
          %v4112 = vunpack.i.l.s16 %v4103
          %v4113 = vunpack.i.h.s16 %v4103
          %v4114 = vunpack.i.l.s16 %v4106
          %v4115 = vunpack.i.h.s16 %v4106
          %v4116 = vunpack.i.l.s16 %v4109
          %v4117 = vunpack.i.h.s16 %v4109
          %v4118 = vpack.i.b16 %v4110, %v4110
          %v4119 = vpack.i.b16 %v4111, %v4111
          %v4120 = vpack.i.b16 %v4112, %v4112
          %v4121 = vpack.i.b16 %v4113, %v4113
          %v4122 = vpack.i.b16 %v4114, %v4114
          %v4123 = vpack.i.b16 %v4115, %v4115
          %v4124 = vpack.i.b16 %v4116, %v4116
          %v4125 = vpack.i.b16 %v4117, %v4117
          %v4127 = vunpack.c.l.s4 286326784
          %v4128 = vunpack.c.0.s8 %v4127
          %v4129 = vperm.slane %v4118, %v4128
          %v4131 = vunpack.c.l.s4 286326784
          %v4132 = vunpack.c.0.s8 %v4131
          %v4133 = vperm.slane %v4119, %v4132
          %v4135 = vunpack.c.l.s4 286326784
          %v4136 = vunpack.c.0.s8 %v4135
          %v4137 = vperm.slane %v4120, %v4136
          %v4139 = vunpack.c.l.s4 286326784
          %v4140 = vunpack.c.0.s8 %v4139
          %v4141 = vperm.slane %v4121, %v4140
          %v4143 = vunpack.c.l.s4 286326784
          %v4144 = vunpack.c.0.s8 %v4143
          %v4145 = vperm.slane %v4122, %v4144
          %v4147 = vunpack.c.l.s4 286326784
          %v4148 = vunpack.c.0.s8 %v4147
          %v4149 = vperm.slane %v4123, %v4148
          %v4151 = vunpack.c.l.s4 286326784
          %v4152 = vunpack.c.0.s8 %v4151
          %v4153 = vperm.slane %v4124, %v4152
          %v4155 = vunpack.c.l.s4 286326784
          %v4156 = vunpack.c.0.s8 %v4155
          %v4157 = vperm.slane %v4125, %v4156
          %v4166 = vld [vmem:[#allocation2 + $0x10] sm:$0x88]
          %v4167 = vsel %vm2119, %v4129, %v4166
          %4168 = vst [vmem:[#allocation2 + $0x10] sm:$0x88] %v4167
          %v4169 = vld [vmem:[#allocation2 + $0x28] sm:$0x88]
          %v4170 = vsel %vm2119, %v4133, %v4169
          %4171 = vst [vmem:[#allocation2 + $0x28] sm:$0x88] %v4170
          %v4172 = vld [vmem:[#allocation2 + $0x40] sm:$0x88]
          %v4173 = vsel %vm2119, %v4137, %v4172
          %4174 = vst [vmem:[#allocation2 + $0x40] sm:$0x88] %v4173
          %v4175 = vld [vmem:[#allocation2 + $0x58] sm:$0x88]
          %v4176 = vsel %vm2119, %v4141, %v4175
          %4177 = vst [vmem:[#allocation2 + $0x58] sm:$0x88] %v4176
          %v4178 = vld [vmem:[#allocation2 + $0x70] sm:$0x88]
          %v4179 = vsel %vm2119, %v4145, %v4178
          %4180 = vst [vmem:[#allocation2 + $0x70] sm:$0x88] %v4179
          %v4181 = vld [vmem:[#allocation2 + $0x88] sm:$0x88]
          %v4182 = vsel %vm2119, %v4149, %v4181
          %4183 = vst [vmem:[#allocation2 + $0x88] sm:$0x88] %v4182
          %v4184 = vld [vmem:[#allocation2 + $0xa0] sm:$0x88]
          %v4185 = vsel %vm2119, %v4153, %v4184
          %4186 = vst [vmem:[#allocation2 + $0xa0] sm:$0x88] %v4185
          %v4187 = vld [vmem:[#allocation2 + $0xb8] sm:$0x88]
          %v4188 = vsel %vm2119, %v4157, %v4187
          %4189 = vst [vmem:[#allocation2 + $0xb8] sm:$0x88] %v4188
        $region80: #{tpu_custom_call.1} parent=55 // pred_fallthru
          _
        %v4190 = vld [vmem:[%s467] sm:$0xf]
        %v4191 = vld [vmem:[%s467 + $0x4] sm:$0xf]
        %v4192 = vld [vmem:[%s467 + $0x8] sm:$0xf]
        %v4193 = vld [vmem:[%s467 + $0xc] sm:$0xf]
        %v4194 = vld [vmem:[%s467 + $0x10] sm:$0xf]
        %v4195 = vld [vmem:[%s467 + $0x14] sm:$0xf]
        %v4196 = vld [vmem:[%s467 + $0x18] sm:$0xf]
        %v4197 = vld [vmem:[%s467 + $0x1c] sm:$0xf]
        %v4198 = vld [vmem:[%s467 + $0x20] sm:$0xf]
        %v4199 = vld [vmem:[%s467 + $0x24] sm:$0xf]
        %v4200 = vld [vmem:[%s467 + $0x28] sm:$0xf]
        %v4201 = vld [vmem:[%s467 + $0x2c] sm:$0xf]
        %v4202 = vld [vmem:[%s467 + $0x30] sm:$0xf]
        %v4203 = vld [vmem:[%s467 + $0x34] sm:$0xf]
        %v4204 = vld [vmem:[%s467 + $0x38] sm:$0xf]
        %v4205 = vld [vmem:[%s467 + $0x3c] sm:$0xf]
        %v4206 = vld [vmem:[#allocation2] sm:$0xff]
        %v4207 = vld [vmem:[#allocation2 + $0x8] sm:$0xff]
        %v4208 = vld [vmem:[#allocation2 + $0x10] sm:$0xff]
        %v4225 = vunpack.c.l.b16 %v4190
        %v4226 = vunpack.c.l.b16 %v4191
        %v4227 = vunpack.c.l.b16 %v4192
        %v4228 = vunpack.c.l.b16 %v4193
        %v4229 = vunpack.c.l.b16 %v4194
        %v4230 = vunpack.c.l.b16 %v4195
        %v4231 = vunpack.c.l.b16 %v4196
        %v4232 = vunpack.c.l.b16 %v4197
        %v4233 = vunpack.c.l.b16 %v4198
        %v4234 = vunpack.c.l.b16 %v4199
        %v4235 = vunpack.c.l.b16 %v4200
        %v4236 = vunpack.c.l.b16 %v4201
        %v4237 = vunpack.c.l.b16 %v4202
        %v4238 = vunpack.c.l.b16 %v4203
        %v4239 = vunpack.c.l.b16 %v4204
        %v4240 = vunpack.c.l.b16 %v4205
        %v4241 = vpack.c.b16 %v4226, %v4225
        %v4242 = vpack.c.b16 %v4228, %v4227
        %v4243 = vpack.c.b16 %v4230, %v4229
        %v4244 = vpack.c.b16 %v4232, %v4231
        %v4245 = vpack.c.b16 %v4234, %v4233
        %v4246 = vpack.c.b16 %v4236, %v4235
        %v4247 = vpack.c.b16 %v4238, %v4237
        %v4248 = vpack.c.b16 %v4240, %v4239
        %v4252 = vunpack.c.l.b16 %v4206
        %v4253 = vunpack.c.h.b16 %v4206
        %v4254 = vunpack.c.l.b16 %v4207
        %v4255 = vunpack.c.h.b16 %v4207
        %v4256 = vunpack.c.l.b16 %v4208
        %v4257 = vunpack.c.h.b16 %v4208
        %v4258 = vpack.c.b16 %v4254, %v4252
        %v4259 = vpack.c.b16 %v4255, %v4253
        %v4260 = vpack.c.b16 %v4256, %v4256
        %v4261 = vpack.c.b16 %v4257, %v4257
        %vm4264 = vcmask 195584
        %v4266 = vsel %vm4264, %v4241, 0
        %v4269 = vsel %vm4264, %v4242, 0
        %v4272 = vsel %vm4264, %v4243, 0
        %v4275 = vsel %vm4264, %v4244, 0
        %v4278 = vsel %vm4264, %v4245, 0
        %v4281 = vsel %vm4264, %v4246, 0
        %v4284 = vsel %vm4264, %v4247, 0
        %v4287 = vsel %vm4264, %v4248, 0
        %vm4289 = vcmask 1043456
        %v4291 = vsel %vm4289, %v4260, 0
        %v4294 = vsel %vm4289, %v4261, 0
        %4296 = vmatpush.bf16.msra.mxu0 0
        %4297 = vmatpush.bf16.msra.mxu0 0
        %4298 = vmatpush.bf16.msra.mxu0 0
        %4299 = vmatpush.bf16.msra.mxu0 0
        %4300 = vmatpush.bf16.msra.mxu0 0
        %4301 = vmatpush.bf16.msra.mxu0 0
        %4302 = vmatpush.bf16.msra.mxu0 %v4291
        %4303 = vmatpush.bf16.msra.mxu0 %v4258
        %4304 = vmatmul.bf16.gmra.mxu0 %v4266
        %v4305 = vpop.f32.mrf.mxu0
        %v4306 = vadd.f32 0.0, %v4305
        %v4307 = vpop.f32.mrf.mxu0
        %v4308 = vadd.f32 0.0, %v4307
        %4309 = vmatmul.bf16.gmra.mxu0 %v4269
        %v4310 = vpop.f32.mrf.mxu0
        %v4311 = vadd.f32 0.0, %v4310
        %v4312 = vpop.f32.mrf.mxu0
        %v4313 = vadd.f32 0.0, %v4312
        %4314 = vmatmul.bf16.gmra.mxu0 %v4272
        %v4315 = vpop.f32.mrf.mxu0
        %v4316 = vadd.f32 0.0, %v4315
        %v4317 = vpop.f32.mrf.mxu0
        %v4318 = vadd.f32 0.0, %v4317
        %4319 = vmatmul.bf16.gmra.mxu0 %v4275
        %v4320 = vpop.f32.mrf.mxu0
        %v4321 = vadd.f32 0.0, %v4320
        %v4322 = vpop.f32.mrf.mxu0
        %v4323 = vadd.f32 0.0, %v4322
        %4324 = vmatmul.bf16.gmra.mxu0 %v4278
        %v4325 = vpop.f32.mrf.mxu0
        %v4326 = vadd.f32 0.0, %v4325
        %v4327 = vpop.f32.mrf.mxu0
        %v4328 = vadd.f32 0.0, %v4327
        %4329 = vmatmul.bf16.gmra.mxu0 %v4281
        %v4330 = vpop.f32.mrf.mxu0
        %v4331 = vadd.f32 0.0, %v4330
        %v4332 = vpop.f32.mrf.mxu0
        %v4333 = vadd.f32 0.0, %v4332
        %4334 = vmatmul.bf16.gmra.mxu0 %v4284
        %v4335 = vpop.f32.mrf.mxu0
        %v4336 = vadd.f32 0.0, %v4335
        %v4337 = vpop.f32.mrf.mxu0
        %v4338 = vadd.f32 0.0, %v4337
        %4339 = vmatmul.bf16.gmra.mxu0 %v4287
        %v4340 = vpop.f32.mrf.mxu0
        %v4341 = vadd.f32 0.0, %v4340
        %v4342 = vpop.f32.mrf.mxu0
        %v4343 = vadd.f32 0.0, %v4342
        %4344 = vdwg.mxu0
        %4345 = vmatpush.bf16.msra.mxu0 0
        %4346 = vmatpush.bf16.msra.mxu0 0
        %4347 = vmatpush.bf16.msra.mxu0 0
        %4348 = vmatpush.bf16.msra.mxu0 0
        %4349 = vmatpush.bf16.msra.mxu0 0
        %4350 = vmatpush.bf16.msra.mxu0 0
        %4351 = vmatpush.bf16.msra.mxu0 %v4294
        %4352 = vmatpush.bf16.msra.mxu0 %v4259
        %4353 = vmatmul.bf16.gmra.mxu0 %v4266
        %v4354 = vpop.f32.mrf.mxu0
        %v4355 = vadd.f32 0.0, %v4354
        %v4356 = vpop.f32.mrf.mxu0
        %v4357 = vadd.f32 0.0, %v4356
        %4358 = vmatmul.bf16.gmra.mxu0 %v4269
        %v4359 = vpop.f32.mrf.mxu0
        %v4360 = vadd.f32 0.0, %v4359
        %v4361 = vpop.f32.mrf.mxu0
        %v4362 = vadd.f32 0.0, %v4361
        %4363 = vmatmul.bf16.gmra.mxu0 %v4272
        %v4364 = vpop.f32.mrf.mxu0
        %v4365 = vadd.f32 0.0, %v4364
        %v4366 = vpop.f32.mrf.mxu0
        %v4367 = vadd.f32 0.0, %v4366
        %4368 = vmatmul.bf16.gmra.mxu0 %v4275
        %v4369 = vpop.f32.mrf.mxu0
        %v4370 = vadd.f32 0.0, %v4369
        %v4371 = vpop.f32.mrf.mxu0
        %v4372 = vadd.f32 0.0, %v4371
        %4373 = vmatmul.bf16.gmra.mxu0 %v4278
        %v4374 = vpop.f32.mrf.mxu0
        %v4375 = vadd.f32 0.0, %v4374
        %v4376 = vpop.f32.mrf.mxu0
        %v4377 = vadd.f32 0.0, %v4376
        %4378 = vmatmul.bf16.gmra.mxu0 %v4281
        %v4379 = vpop.f32.mrf.mxu0
        %v4380 = vadd.f32 0.0, %v4379
        %v4381 = vpop.f32.mrf.mxu0
        %v4382 = vadd.f32 0.0, %v4381
        %4383 = vmatmul.bf16.gmra.mxu0 %v4284
        %v4384 = vpop.f32.mrf.mxu0
        %v4385 = vadd.f32 0.0, %v4384
        %v4386 = vpop.f32.mrf.mxu0
        %v4387 = vadd.f32 0.0, %v4386
        %4388 = vmatmul.bf16.gmra.mxu0 %v4287
        %v4389 = vpop.f32.mrf.mxu0
        %v4390 = vadd.f32 0.0, %v4389
        %v4391 = vpop.f32.mrf.mxu0
        %v4392 = vadd.f32 0.0, %v4391
        %4393 = vdwg.mxu0
        %4394 = vst [vmem:[%s457] sm:$0xff] %v4306
        %4395 = vst [vmem:[%s457 + $0x8] sm:$0xff] %v4355
        %4396 = vst [vmem:[%s457 + $0x10] sm:$0xff] %v4308
        %4397 = vst [vmem:[%s457 + $0x18] sm:$0xff] %v4357
        %4398 = vst [vmem:[%s457 + $0x20] sm:$0xff] %v4311
        %4399 = vst [vmem:[%s457 + $0x28] sm:$0xff] %v4360
        %4400 = vst [vmem:[%s457 + $0x30] sm:$0xff] %v4313
        %4401 = vst [vmem:[%s457 + $0x38] sm:$0xff] %v4362
        %4402 = vst [vmem:[%s457 + $0x40] sm:$0xff] %v4316
        %4403 = vst [vmem:[%s457 + $0x48] sm:$0xff] %v4365
        %4404 = vst [vmem:[%s457 + $0x50] sm:$0xff] %v4318
        %4405 = vst [vmem:[%s457 + $0x58] sm:$0xff] %v4367
        %4406 = vst [vmem:[%s457 + $0x60] sm:$0xff] %v4321
        %4407 = vst [vmem:[%s457 + $0x68] sm:$0xff] %v4370
        %4408 = vst [vmem:[%s457 + $0x70] sm:$0xff] %v4323
        %4409 = vst [vmem:[%s457 + $0x78] sm:$0xff] %v4372
        %4410 = vst [vmem:[%s457 + $0x80] sm:$0xff] %v4326
        %4411 = vst [vmem:[%s457 + $0x88] sm:$0xff] %v4375
        %4412 = vst [vmem:[%s457 + $0x90] sm:$0xff] %v4328
        %4413 = vst [vmem:[%s457 + $0x98] sm:$0xff] %v4377
        %4414 = vst [vmem:[%s457 + $0xa0] sm:$0xff] %v4331
        %4415 = vst [vmem:[%s457 + $0xa8] sm:$0xff] %v4380
        %4416 = vst [vmem:[%s457 + $0xb0] sm:$0xff] %v4333
        %4417 = vst [vmem:[%s457 + $0xb8] sm:$0xff] %v4382
        %4418 = vst [vmem:[%s457 + $0xc0] sm:$0xff] %v4336
        %4419 = vst [vmem:[%s457 + $0xc8] sm:$0xff] %v4385
        %4420 = vst [vmem:[%s457 + $0xd0] sm:$0xff] %v4338
        %4421 = vst [vmem:[%s457 + $0xd8] sm:$0xff] %v4387
        %4422 = vst [vmem:[%s457 + $0xe0] sm:$0xff] %v4341
        %4423 = vst [vmem:[%s457 + $0xe8] sm:$0xff] %v4390
        %4424 = vst [vmem:[%s457 + $0xf0] sm:$0xff] %v4343
        %4425 = vst [vmem:[%s457 + $0xf8] sm:$0xff] %v4392
        %s4426 = scalar_lea.vmem [#allocation2], 24
        %v4427 = vld [vmem:[%s4426] sm:$0xff]
        %v4428 = vld [vmem:[%s4426 + $0x8] sm:$0xff]
        %v4429 = vld [vmem:[%s4426 + $0x10] sm:$0xff]
        %v4433 = vunpack.c.l.b16 %v4427
        %v4434 = vunpack.c.h.b16 %v4427
        %v4435 = vunpack.c.l.b16 %v4428
        %v4436 = vunpack.c.h.b16 %v4428
        %v4437 = vunpack.c.l.b16 %v4429
        %v4438 = vunpack.c.h.b16 %v4429
        %v4439 = vpack.c.b16 %v4435, %v4433
        %v4440 = vpack.c.b16 %v4436, %v4434
        %v4441 = vpack.c.b16 %v4437, %v4437
        %v4442 = vpack.c.b16 %v4438, %v4438
        %v4446 = vsel %vm4289, %v4441, 0
        %v4449 = vsel %vm4289, %v4442, 0
        %4451 = vmatpush.bf16.msra.mxu0 0
        %4452 = vmatpush.bf16.msra.mxu0 0
        %4453 = vmatpush.bf16.msra.mxu0 0
        %4454 = vmatpush.bf16.msra.mxu0 0
        %4455 = vmatpush.bf16.msra.mxu0 0
        %4456 = vmatpush.bf16.msra.mxu0 0
        %4457 = vmatpush.bf16.msra.mxu0 %v4446
        %4458 = vmatpush.bf16.msra.mxu0 %v4439
        %4459 = vmatmul.bf16.gmra.mxu0 %v4266
        %v4460 = vpop.f32.mrf.mxu0
        %v4461 = vadd.f32 0.0, %v4460
        %v4462 = vpop.f32.mrf.mxu0
        %v4463 = vadd.f32 0.0, %v4462
        %4464 = vmatmul.bf16.gmra.mxu0 %v4269
        %v4465 = vpop.f32.mrf.mxu0
        %v4466 = vadd.f32 0.0, %v4465
        %v4467 = vpop.f32.mrf.mxu0
        %v4468 = vadd.f32 0.0, %v4467
        %4469 = vmatmul.bf16.gmra.mxu0 %v4272
        %v4470 = vpop.f32.mrf.mxu0
        %v4471 = vadd.f32 0.0, %v4470
        %v4472 = vpop.f32.mrf.mxu0
        %v4473 = vadd.f32 0.0, %v4472
        %4474 = vmatmul.bf16.gmra.mxu0 %v4275
        %v4475 = vpop.f32.mrf.mxu0
        %v4476 = vadd.f32 0.0, %v4475
        %v4477 = vpop.f32.mrf.mxu0
        %v4478 = vadd.f32 0.0, %v4477
        %4479 = vmatmul.bf16.gmra.mxu0 %v4278
        %v4480 = vpop.f32.mrf.mxu0
        %v4481 = vadd.f32 0.0, %v4480
        %v4482 = vpop.f32.mrf.mxu0
        %v4483 = vadd.f32 0.0, %v4482
        %4484 = vmatmul.bf16.gmra.mxu0 %v4281
        %v4485 = vpop.f32.mrf.mxu0
        %v4486 = vadd.f32 0.0, %v4485
        %v4487 = vpop.f32.mrf.mxu0
        %v4488 = vadd.f32 0.0, %v4487
        %4489 = vmatmul.bf16.gmra.mxu0 %v4284
        %v4490 = vpop.f32.mrf.mxu0
        %v4491 = vadd.f32 0.0, %v4490
        %v4492 = vpop.f32.mrf.mxu0
        %v4493 = vadd.f32 0.0, %v4492
        %4494 = vmatmul.bf16.gmra.mxu0 %v4287
        %v4495 = vpop.f32.mrf.mxu0
        %v4496 = vadd.f32 0.0, %v4495
        %v4497 = vpop.f32.mrf.mxu0
        %v4498 = vadd.f32 0.0, %v4497
        %4499 = vdwg.mxu0
        %4500 = vmatpush.bf16.msra.mxu0 0
        %4501 = vmatpush.bf16.msra.mxu0 0
        %4502 = vmatpush.bf16.msra.mxu0 0
        %4503 = vmatpush.bf16.msra.mxu0 0
        %4504 = vmatpush.bf16.msra.mxu0 0
        %4505 = vmatpush.bf16.msra.mxu0 0
        %4506 = vmatpush.bf16.msra.mxu0 %v4449
        %4507 = vmatpush.bf16.msra.mxu0 %v4440
        %4508 = vmatmul.bf16.gmra.mxu0 %v4266
        %v4509 = vpop.f32.mrf.mxu0
        %v4510 = vadd.f32 0.0, %v4509
        %v4511 = vpop.f32.mrf.mxu0
        %v4512 = vadd.f32 0.0, %v4511
        %4513 = vmatmul.bf16.gmra.mxu0 %v4269
        %v4514 = vpop.f32.mrf.mxu0
        %v4515 = vadd.f32 0.0, %v4514
        %v4516 = vpop.f32.mrf.mxu0
        %v4517 = vadd.f32 0.0, %v4516
        %4518 = vmatmul.bf16.gmra.mxu0 %v4272
        %v4519 = vpop.f32.mrf.mxu0
        %v4520 = vadd.f32 0.0, %v4519
        %v4521 = vpop.f32.mrf.mxu0
        %v4522 = vadd.f32 0.0, %v4521
        %4523 = vmatmul.bf16.gmra.mxu0 %v4275
        %v4524 = vpop.f32.mrf.mxu0
        %v4525 = vadd.f32 0.0, %v4524
        %v4526 = vpop.f32.mrf.mxu0
        %v4527 = vadd.f32 0.0, %v4526
        %4528 = vmatmul.bf16.gmra.mxu0 %v4278
        %v4529 = vpop.f32.mrf.mxu0
        %v4530 = vadd.f32 0.0, %v4529
        %v4531 = vpop.f32.mrf.mxu0
        %v4532 = vadd.f32 0.0, %v4531
        %4533 = vmatmul.bf16.gmra.mxu0 %v4281
        %v4534 = vpop.f32.mrf.mxu0
        %v4535 = vadd.f32 0.0, %v4534
        %v4536 = vpop.f32.mrf.mxu0
        %v4537 = vadd.f32 0.0, %v4536
        %4538 = vmatmul.bf16.gmra.mxu0 %v4284
        %v4539 = vpop.f32.mrf.mxu0
        %v4540 = vadd.f32 0.0, %v4539
        %v4541 = vpop.f32.mrf.mxu0
        %v4542 = vadd.f32 0.0, %v4541
        %4543 = vmatmul.bf16.gmra.mxu0 %v4287
        %v4544 = vpop.f32.mrf.mxu0
        %v4545 = vadd.f32 0.0, %v4544
        %v4546 = vpop.f32.mrf.mxu0
        %v4547 = vadd.f32 0.0, %v4546
        %4548 = vdwg.mxu0
        %s4549 = scalar_lea.vmem %s457, 256 [#allocation12]
        %4550 = vst [vmem:[%s4549] sm:$0xff] %v4461
        %4551 = vst [vmem:[%s4549 + $0x8] sm:$0xff] %v4510
        %4552 = vst [vmem:[%s4549 + $0x10] sm:$0xff] %v4463
        %4553 = vst [vmem:[%s4549 + $0x18] sm:$0xff] %v4512
        %4554 = vst [vmem:[%s4549 + $0x20] sm:$0xff] %v4466
        %4555 = vst [vmem:[%s4549 + $0x28] sm:$0xff] %v4515
        %4556 = vst [vmem:[%s4549 + $0x30] sm:$0xff] %v4468
        %4557 = vst [vmem:[%s4549 + $0x38] sm:$0xff] %v4517
        %4558 = vst [vmem:[%s4549 + $0x40] sm:$0xff] %v4471
        %4559 = vst [vmem:[%s4549 + $0x48] sm:$0xff] %v4520
        %4560 = vst [vmem:[%s4549 + $0x50] sm:$0xff] %v4473
        %4561 = vst [vmem:[%s4549 + $0x58] sm:$0xff] %v4522
        %4562 = vst [vmem:[%s4549 + $0x60] sm:$0xff] %v4476
        %4563 = vst [vmem:[%s4549 + $0x68] sm:$0xff] %v4525
        %4564 = vst [vmem:[%s4549 + $0x70] sm:$0xff] %v4478
        %4565 = vst [vmem:[%s4549 + $0x78] sm:$0xff] %v4527
        %4566 = vst [vmem:[%s4549 + $0x80] sm:$0xff] %v4481
        %4567 = vst [vmem:[%s4549 + $0x88] sm:$0xff] %v4530
        %4568 = vst [vmem:[%s4549 + $0x90] sm:$0xff] %v4483
        %4569 = vst [vmem:[%s4549 + $0x98] sm:$0xff] %v4532
        %4570 = vst [vmem:[%s4549 + $0xa0] sm:$0xff] %v4486
        %4571 = vst [vmem:[%s4549 + $0xa8] sm:$0xff] %v4535
        %4572 = vst [vmem:[%s4549 + $0xb0] sm:$0xff] %v4488
        %4573 = vst [vmem:[%s4549 + $0xb8] sm:$0xff] %v4537
        %4574 = vst [vmem:[%s4549 + $0xc0] sm:$0xff] %v4491
        %4575 = vst [vmem:[%s4549 + $0xc8] sm:$0xff] %v4540
        %4576 = vst [vmem:[%s4549 + $0xd0] sm:$0xff] %v4493
        %4577 = vst [vmem:[%s4549 + $0xd8] sm:$0xff] %v4542
        %4578 = vst [vmem:[%s4549 + $0xe0] sm:$0xff] %v4496
        %4579 = vst [vmem:[%s4549 + $0xe8] sm:$0xff] %v4545
        %4580 = vst [vmem:[%s4549 + $0xf0] sm:$0xff] %v4498
        %4581 = vst [vmem:[%s4549 + $0xf8] sm:$0xff] %v4547
        %s4582 = scalar_lea.vmem [#allocation2], 48
        %v4583 = vld [vmem:[%s4582] sm:$0xff]
        %v4584 = vld [vmem:[%s4582 + $0x8] sm:$0xff]
        %v4585 = vld [vmem:[%s4582 + $0x10] sm:$0xff]
        %v4589 = vunpack.c.l.b16 %v4583
        %v4590 = vunpack.c.h.b16 %v4583
        %v4591 = vunpack.c.l.b16 %v4584
        %v4592 = vunpack.c.h.b16 %v4584
        %v4593 = vunpack.c.l.b16 %v4585
        %v4594 = vunpack.c.h.b16 %v4585
        %v4595 = vpack.c.b16 %v4591, %v4589
        %v4596 = vpack.c.b16 %v4592, %v4590
        %v4597 = vpack.c.b16 %v4593, %v4593
        %v4598 = vpack.c.b16 %v4594, %v4594
        %v4602 = vsel %vm4289, %v4597, 0
        %v4605 = vsel %vm4289, %v4598, 0
        %4607 = vmatpush.bf16.msra.mxu0 0
        %4608 = vmatpush.bf16.msra.mxu0 0
        %4609 = vmatpush.bf16.msra.mxu0 0
        %4610 = vmatpush.bf16.msra.mxu0 0
        %4611 = vmatpush.bf16.msra.mxu0 0
        %4612 = vmatpush.bf16.msra.mxu0 0
        %4613 = vmatpush.bf16.msra.mxu0 %v4602
        %4614 = vmatpush.bf16.msra.mxu0 %v4595
        %4615 = vmatmul.bf16.gmra.mxu0 %v4266
        %v4616 = vpop.f32.mrf.mxu0
        %v4617 = vadd.f32 0.0, %v4616
        %v4618 = vpop.f32.mrf.mxu0
        %v4619 = vadd.f32 0.0, %v4618
        %4620 = vmatmul.bf16.gmra.mxu0 %v4269
        %v4621 = vpop.f32.mrf.mxu0
        %v4622 = vadd.f32 0.0, %v4621
        %v4623 = vpop.f32.mrf.mxu0
        %v4624 = vadd.f32 0.0, %v4623
        %4625 = vmatmul.bf16.gmra.mxu0 %v4272
        %v4626 = vpop.f32.mrf.mxu0
        %v4627 = vadd.f32 0.0, %v4626
        %v4628 = vpop.f32.mrf.mxu0
        %v4629 = vadd.f32 0.0, %v4628
        %4630 = vmatmul.bf16.gmra.mxu0 %v4275
        %v4631 = vpop.f32.mrf.mxu0
        %v4632 = vadd.f32 0.0, %v4631
        %v4633 = vpop.f32.mrf.mxu0
        %v4634 = vadd.f32 0.0, %v4633
        %4635 = vmatmul.bf16.gmra.mxu0 %v4278
        %v4636 = vpop.f32.mrf.mxu0
        %v4637 = vadd.f32 0.0, %v4636
        %v4638 = vpop.f32.mrf.mxu0
        %v4639 = vadd.f32 0.0, %v4638
        %4640 = vmatmul.bf16.gmra.mxu0 %v4281
        %v4641 = vpop.f32.mrf.mxu0
        %v4642 = vadd.f32 0.0, %v4641
        %v4643 = vpop.f32.mrf.mxu0
        %v4644 = vadd.f32 0.0, %v4643
        %4645 = vmatmul.bf16.gmra.mxu0 %v4284
        %v4646 = vpop.f32.mrf.mxu0
        %v4647 = vadd.f32 0.0, %v4646
        %v4648 = vpop.f32.mrf.mxu0
        %v4649 = vadd.f32 0.0, %v4648
        %4650 = vmatmul.bf16.gmra.mxu0 %v4287
        %v4651 = vpop.f32.mrf.mxu0
        %v4652 = vadd.f32 0.0, %v4651
        %v4653 = vpop.f32.mrf.mxu0
        %v4654 = vadd.f32 0.0, %v4653
        %4655 = vdwg.mxu0
        %4656 = vmatpush.bf16.msra.mxu0 0
        %4657 = vmatpush.bf16.msra.mxu0 0
        %4658 = vmatpush.bf16.msra.mxu0 0
        %4659 = vmatpush.bf16.msra.mxu0 0
        %4660 = vmatpush.bf16.msra.mxu0 0
        %4661 = vmatpush.bf16.msra.mxu0 0
        %4662 = vmatpush.bf16.msra.mxu0 %v4605
        %4663 = vmatpush.bf16.msra.mxu0 %v4596
        %4664 = vmatmul.bf16.gmra.mxu0 %v4266
        %v4665 = vpop.f32.mrf.mxu0
        %v4666 = vadd.f32 0.0, %v4665
        %v4667 = vpop.f32.mrf.mxu0
        %v4668 = vadd.f32 0.0, %v4667
        %4669 = vmatmul.bf16.gmra.mxu0 %v4269
        %v4670 = vpop.f32.mrf.mxu0
        %v4671 = vadd.f32 0.0, %v4670
        %v4672 = vpop.f32.mrf.mxu0
        %v4673 = vadd.f32 0.0, %v4672
        %4674 = vmatmul.bf16.gmra.mxu0 %v4272
        %v4675 = vpop.f32.mrf.mxu0
        %v4676 = vadd.f32 0.0, %v4675
        %v4677 = vpop.f32.mrf.mxu0
        %v4678 = vadd.f32 0.0, %v4677
        %4679 = vmatmul.bf16.gmra.mxu0 %v4275
        %v4680 = vpop.f32.mrf.mxu0
        %v4681 = vadd.f32 0.0, %v4680
        %v4682 = vpop.f32.mrf.mxu0
        %v4683 = vadd.f32 0.0, %v4682
        %4684 = vmatmul.bf16.gmra.mxu0 %v4278
        %v4685 = vpop.f32.mrf.mxu0
        %v4686 = vadd.f32 0.0, %v4685
        %v4687 = vpop.f32.mrf.mxu0
        %v4688 = vadd.f32 0.0, %v4687
        %4689 = vmatmul.bf16.gmra.mxu0 %v4281
        %v4690 = vpop.f32.mrf.mxu0
        %v4691 = vadd.f32 0.0, %v4690
        %v4692 = vpop.f32.mrf.mxu0
        %v4693 = vadd.f32 0.0, %v4692
        %4694 = vmatmul.bf16.gmra.mxu0 %v4284
        %v4695 = vpop.f32.mrf.mxu0
        %v4696 = vadd.f32 0.0, %v4695
        %v4697 = vpop.f32.mrf.mxu0
        %v4698 = vadd.f32 0.0, %v4697
        %4699 = vmatmul.bf16.gmra.mxu0 %v4287
        %v4700 = vpop.f32.mrf.mxu0
        %v4701 = vadd.f32 0.0, %v4700
        %v4702 = vpop.f32.mrf.mxu0
        %v4703 = vadd.f32 0.0, %v4702
        %4704 = vdwg.mxu0
        %s4705 = scalar_lea.vmem %s457, 512 [#allocation12]
        %4706 = vst [vmem:[%s4705] sm:$0xff] %v4617
        %4707 = vst [vmem:[%s4705 + $0x8] sm:$0xff] %v4666
        %4708 = vst [vmem:[%s4705 + $0x10] sm:$0xff] %v4619
        %4709 = vst [vmem:[%s4705 + $0x18] sm:$0xff] %v4668
        %4710 = vst [vmem:[%s4705 + $0x20] sm:$0xff] %v4622
        %4711 = vst [vmem:[%s4705 + $0x28] sm:$0xff] %v4671
        %4712 = vst [vmem:[%s4705 + $0x30] sm:$0xff] %v4624
        %4713 = vst [vmem:[%s4705 + $0x38] sm:$0xff] %v4673
        %4714 = vst [vmem:[%s4705 + $0x40] sm:$0xff] %v4627
        %4715 = vst [vmem:[%s4705 + $0x48] sm:$0xff] %v4676
        %4716 = vst [vmem:[%s4705 + $0x50] sm:$0xff] %v4629
        %4717 = vst [vmem:[%s4705 + $0x58] sm:$0xff] %v4678
        %4718 = vst [vmem:[%s4705 + $0x60] sm:$0xff] %v4632
        %4719 = vst [vmem:[%s4705 + $0x68] sm:$0xff] %v4681
        %4720 = vst [vmem:[%s4705 + $0x70] sm:$0xff] %v4634
        %4721 = vst [vmem:[%s4705 + $0x78] sm:$0xff] %v4683
        %4722 = vst [vmem:[%s4705 + $0x80] sm:$0xff] %v4637
        %4723 = vst [vmem:[%s4705 + $0x88] sm:$0xff] %v4686
        %4724 = vst [vmem:[%s4705 + $0x90] sm:$0xff] %v4639
        %4725 = vst [vmem:[%s4705 + $0x98] sm:$0xff] %v4688
        %4726 = vst [vmem:[%s4705 + $0xa0] sm:$0xff] %v4642
        %4727 = vst [vmem:[%s4705 + $0xa8] sm:$0xff] %v4691
        %4728 = vst [vmem:[%s4705 + $0xb0] sm:$0xff] %v4644
        %4729 = vst [vmem:[%s4705 + $0xb8] sm:$0xff] %v4693
        %4730 = vst [vmem:[%s4705 + $0xc0] sm:$0xff] %v4647
        %4731 = vst [vmem:[%s4705 + $0xc8] sm:$0xff] %v4696
        %4732 = vst [vmem:[%s4705 + $0xd0] sm:$0xff] %v4649
        %4733 = vst [vmem:[%s4705 + $0xd8] sm:$0xff] %v4698
        %4734 = vst [vmem:[%s4705 + $0xe0] sm:$0xff] %v4652
        %4735 = vst [vmem:[%s4705 + $0xe8] sm:$0xff] %v4701
        %4736 = vst [vmem:[%s4705 + $0xf0] sm:$0xff] %v4654
        %4737 = vst [vmem:[%s4705 + $0xf8] sm:$0xff] %v4703
        %s4738 = scalar_lea.vmem [#allocation2], 72
        %v4739 = vld [vmem:[%s4738] sm:$0xff]
        %v4740 = vld [vmem:[%s4738 + $0x8] sm:$0xff]
        %v4741 = vld [vmem:[%s4738 + $0x10] sm:$0xff]
        %v4745 = vunpack.c.l.b16 %v4739
        %v4746 = vunpack.c.h.b16 %v4739
        %v4747 = vunpack.c.l.b16 %v4740
        %v4748 = vunpack.c.h.b16 %v4740
        %v4749 = vunpack.c.l.b16 %v4741
        %v4750 = vunpack.c.h.b16 %v4741
        %v4751 = vpack.c.b16 %v4747, %v4745
        %v4752 = vpack.c.b16 %v4748, %v4746
        %v4753 = vpack.c.b16 %v4749, %v4749
        %v4754 = vpack.c.b16 %v4750, %v4750
        %v4758 = vsel %vm4289, %v4753, 0
        %v4761 = vsel %vm4289, %v4754, 0
        %4763 = vmatpush.bf16.msra.mxu0 0
        %4764 = vmatpush.bf16.msra.mxu0 0
        %4765 = vmatpush.bf16.msra.mxu0 0
        %4766 = vmatpush.bf16.msra.mxu0 0
        %4767 = vmatpush.bf16.msra.mxu0 0
        %4768 = vmatpush.bf16.msra.mxu0 0
        %4769 = vmatpush.bf16.msra.mxu0 %v4758
        %4770 = vmatpush.bf16.msra.mxu0 %v4751
        %4771 = vmatmul.bf16.gmra.mxu0 %v4266
        %v4772 = vpop.f32.mrf.mxu0
        %v4773 = vadd.f32 0.0, %v4772
        %v4774 = vpop.f32.mrf.mxu0
        %v4775 = vadd.f32 0.0, %v4774
        %4776 = vmatmul.bf16.gmra.mxu0 %v4269
        %v4777 = vpop.f32.mrf.mxu0
        %v4778 = vadd.f32 0.0, %v4777
        %v4779 = vpop.f32.mrf.mxu0
        %v4780 = vadd.f32 0.0, %v4779
        %4781 = vmatmul.bf16.gmra.mxu0 %v4272
        %v4782 = vpop.f32.mrf.mxu0
        %v4783 = vadd.f32 0.0, %v4782
        %v4784 = vpop.f32.mrf.mxu0
        %v4785 = vadd.f32 0.0, %v4784
        %4786 = vmatmul.bf16.gmra.mxu0 %v4275
        %v4787 = vpop.f32.mrf.mxu0
        %v4788 = vadd.f32 0.0, %v4787
        %v4789 = vpop.f32.mrf.mxu0
        %v4790 = vadd.f32 0.0, %v4789
        %4791 = vmatmul.bf16.gmra.mxu0 %v4278
        %v4792 = vpop.f32.mrf.mxu0
        %v4793 = vadd.f32 0.0, %v4792
        %v4794 = vpop.f32.mrf.mxu0
        %v4795 = vadd.f32 0.0, %v4794
        %4796 = vmatmul.bf16.gmra.mxu0 %v4281
        %v4797 = vpop.f32.mrf.mxu0
        %v4798 = vadd.f32 0.0, %v4797
        %v4799 = vpop.f32.mrf.mxu0
        %v4800 = vadd.f32 0.0, %v4799
        %4801 = vmatmul.bf16.gmra.mxu0 %v4284
        %v4802 = vpop.f32.mrf.mxu0
        %v4803 = vadd.f32 0.0, %v4802
        %v4804 = vpop.f32.mrf.mxu0
        %v4805 = vadd.f32 0.0, %v4804
        %4806 = vmatmul.bf16.gmra.mxu0 %v4287
        %v4807 = vpop.f32.mrf.mxu0
        %v4808 = vadd.f32 0.0, %v4807
        %v4809 = vpop.f32.mrf.mxu0
        %v4810 = vadd.f32 0.0, %v4809
        %4811 = vdwg.mxu0
        %4812 = vmatpush.bf16.msra.mxu0 0
        %4813 = vmatpush.bf16.msra.mxu0 0
        %4814 = vmatpush.bf16.msra.mxu0 0
        %4815 = vmatpush.bf16.msra.mxu0 0
        %4816 = vmatpush.bf16.msra.mxu0 0
        %4817 = vmatpush.bf16.msra.mxu0 0
        %4818 = vmatpush.bf16.msra.mxu0 %v4761
        %4819 = vmatpush.bf16.msra.mxu0 %v4752
        %4820 = vmatmul.bf16.gmra.mxu0 %v4266
        %v4821 = vpop.f32.mrf.mxu0
        %v4822 = vadd.f32 0.0, %v4821
        %v4823 = vpop.f32.mrf.mxu0
        %v4824 = vadd.f32 0.0, %v4823
        %4825 = vmatmul.bf16.gmra.mxu0 %v4269
        %v4826 = vpop.f32.mrf.mxu0
        %v4827 = vadd.f32 0.0, %v4826
        %v4828 = vpop.f32.mrf.mxu0
        %v4829 = vadd.f32 0.0, %v4828
        %4830 = vmatmul.bf16.gmra.mxu0 %v4272
        %v4831 = vpop.f32.mrf.mxu0
        %v4832 = vadd.f32 0.0, %v4831
        %v4833 = vpop.f32.mrf.mxu0
        %v4834 = vadd.f32 0.0, %v4833
        %4835 = vmatmul.bf16.gmra.mxu0 %v4275
        %v4836 = vpop.f32.mrf.mxu0
        %v4837 = vadd.f32 0.0, %v4836
        %v4838 = vpop.f32.mrf.mxu0
        %v4839 = vadd.f32 0.0, %v4838
        %4840 = vmatmul.bf16.gmra.mxu0 %v4278
        %v4841 = vpop.f32.mrf.mxu0
        %v4842 = vadd.f32 0.0, %v4841
        %v4843 = vpop.f32.mrf.mxu0
        %v4844 = vadd.f32 0.0, %v4843
        %4845 = vmatmul.bf16.gmra.mxu0 %v4281
        %v4846 = vpop.f32.mrf.mxu0
        %v4847 = vadd.f32 0.0, %v4846
        %v4848 = vpop.f32.mrf.mxu0
        %v4849 = vadd.f32 0.0, %v4848
        %4850 = vmatmul.bf16.gmra.mxu0 %v4284
        %v4851 = vpop.f32.mrf.mxu0
        %v4852 = vadd.f32 0.0, %v4851
        %v4853 = vpop.f32.mrf.mxu0
        %v4854 = vadd.f32 0.0, %v4853
        %4855 = vmatmul.bf16.gmra.mxu0 %v4287
        %v4856 = vpop.f32.mrf.mxu0
        %v4857 = vadd.f32 0.0, %v4856
        %v4858 = vpop.f32.mrf.mxu0
        %v4859 = vadd.f32 0.0, %v4858
        %4860 = vdwg.mxu0
        %s4861 = scalar_lea.vmem %s457, 768 [#allocation12]
        %4862 = vst [vmem:[%s4861] sm:$0xff] %v4773
        %4863 = vst [vmem:[%s4861 + $0x8] sm:$0xff] %v4822
        %4864 = vst [vmem:[%s4861 + $0x10] sm:$0xff] %v4775
        %4865 = vst [vmem:[%s4861 + $0x18] sm:$0xff] %v4824
        %4866 = vst [vmem:[%s4861 + $0x20] sm:$0xff] %v4778
        %4867 = vst [vmem:[%s4861 + $0x28] sm:$0xff] %v4827
        %4868 = vst [vmem:[%s4861 + $0x30] sm:$0xff] %v4780
        %4869 = vst [vmem:[%s4861 + $0x38] sm:$0xff] %v4829
        %4870 = vst [vmem:[%s4861 + $0x40] sm:$0xff] %v4783
        %4871 = vst [vmem:[%s4861 + $0x48] sm:$0xff] %v4832
        %4872 = vst [vmem:[%s4861 + $0x50] sm:$0xff] %v4785
        %4873 = vst [vmem:[%s4861 + $0x58] sm:$0xff] %v4834
        %4874 = vst [vmem:[%s4861 + $0x60] sm:$0xff] %v4788
        %4875 = vst [vmem:[%s4861 + $0x68] sm:$0xff] %v4837
        %4876 = vst [vmem:[%s4861 + $0x70] sm:$0xff] %v4790
        %4877 = vst [vmem:[%s4861 + $0x78] sm:$0xff] %v4839
        %4878 = vst [vmem:[%s4861 + $0x80] sm:$0xff] %v4793
        %4879 = vst [vmem:[%s4861 + $0x88] sm:$0xff] %v4842
        %4880 = vst [vmem:[%s4861 + $0x90] sm:$0xff] %v4795
        %4881 = vst [vmem:[%s4861 + $0x98] sm:$0xff] %v4844
        %4882 = vst [vmem:[%s4861 + $0xa0] sm:$0xff] %v4798
        %4883 = vst [vmem:[%s4861 + $0xa8] sm:$0xff] %v4847
        %4884 = vst [vmem:[%s4861 + $0xb0] sm:$0xff] %v4800
        %4885 = vst [vmem:[%s4861 + $0xb8] sm:$0xff] %v4849
        %4886 = vst [vmem:[%s4861 + $0xc0] sm:$0xff] %v4803
        %4887 = vst [vmem:[%s4861 + $0xc8] sm:$0xff] %v4852
        %4888 = vst [vmem:[%s4861 + $0xd0] sm:$0xff] %v4805
        %4889 = vst [vmem:[%s4861 + $0xd8] sm:$0xff] %v4854
        %4890 = vst [vmem:[%s4861 + $0xe0] sm:$0xff] %v4808
        %4891 = vst [vmem:[%s4861 + $0xe8] sm:$0xff] %v4857
        %4892 = vst [vmem:[%s4861 + $0xf0] sm:$0xff] %v4810
        %4893 = vst [vmem:[%s4861 + $0xf8] sm:$0xff] %v4859
        %s4894 = scalar_lea.vmem [#allocation2], 96
        %v4895 = vld [vmem:[%s4894] sm:$0xff]
        %v4896 = vld [vmem:[%s4894 + $0x8] sm:$0xff]
        %v4897 = vld [vmem:[%s4894 + $0x10] sm:$0xff]
        %v4901 = vunpack.c.l.b16 %v4895
        %v4902 = vunpack.c.h.b16 %v4895
        %v4903 = vunpack.c.l.b16 %v4896
        %v4904 = vunpack.c.h.b16 %v4896
        %v4905 = vunpack.c.l.b16 %v4897
        %v4906 = vunpack.c.h.b16 %v4897
        %v4907 = vpack.c.b16 %v4903, %v4901
        %v4908 = vpack.c.b16 %v4904, %v4902
        %v4909 = vpack.c.b16 %v4905, %v4905
        %v4910 = vpack.c.b16 %v4906, %v4906
        %v4914 = vsel %vm4289, %v4909, 0
        %v4917 = vsel %vm4289, %v4910, 0
        %4919 = vmatpush.bf16.msra.mxu0 0
        %4920 = vmatpush.bf16.msra.mxu0 0
        %4921 = vmatpush.bf16.msra.mxu0 0
        %4922 = vmatpush.bf16.msra.mxu0 0
        %4923 = vmatpush.bf16.msra.mxu0 0
        %4924 = vmatpush.bf16.msra.mxu0 0
        %4925 = vmatpush.bf16.msra.mxu0 %v4914
        %4926 = vmatpush.bf16.msra.mxu0 %v4907
        %4927 = vmatmul.bf16.gmra.mxu0 %v4266
        %v4928 = vpop.f32.mrf.mxu0
        %v4929 = vadd.f32 0.0, %v4928
        %v4930 = vpop.f32.mrf.mxu0
        %v4931 = vadd.f32 0.0, %v4930
        %4932 = vmatmul.bf16.gmra.mxu0 %v4269
        %v4933 = vpop.f32.mrf.mxu0
        %v4934 = vadd.f32 0.0, %v4933
        %v4935 = vpop.f32.mrf.mxu0
        %v4936 = vadd.f32 0.0, %v4935
        %4937 = vmatmul.bf16.gmra.mxu0 %v4272
        %v4938 = vpop.f32.mrf.mxu0
        %v4939 = vadd.f32 0.0, %v4938
        %v4940 = vpop.f32.mrf.mxu0
        %v4941 = vadd.f32 0.0, %v4940
        %4942 = vmatmul.bf16.gmra.mxu0 %v4275
        %v4943 = vpop.f32.mrf.mxu0
        %v4944 = vadd.f32 0.0, %v4943
        %v4945 = vpop.f32.mrf.mxu0
        %v4946 = vadd.f32 0.0, %v4945
        %4947 = vmatmul.bf16.gmra.mxu0 %v4278
        %v4948 = vpop.f32.mrf.mxu0
        %v4949 = vadd.f32 0.0, %v4948
        %v4950 = vpop.f32.mrf.mxu0
        %v4951 = vadd.f32 0.0, %v4950
        %4952 = vmatmul.bf16.gmra.mxu0 %v4281
        %v4953 = vpop.f32.mrf.mxu0
        %v4954 = vadd.f32 0.0, %v4953
        %v4955 = vpop.f32.mrf.mxu0
        %v4956 = vadd.f32 0.0, %v4955
        %4957 = vmatmul.bf16.gmra.mxu0 %v4284
        %v4958 = vpop.f32.mrf.mxu0
        %v4959 = vadd.f32 0.0, %v4958
        %v4960 = vpop.f32.mrf.mxu0
        %v4961 = vadd.f32 0.0, %v4960
        %4962 = vmatmul.bf16.gmra.mxu0 %v4287
        %v4963 = vpop.f32.mrf.mxu0
        %v4964 = vadd.f32 0.0, %v4963
        %v4965 = vpop.f32.mrf.mxu0
        %v4966 = vadd.f32 0.0, %v4965
        %4967 = vdwg.mxu0
        %4968 = vmatpush.bf16.msra.mxu0 0
        %4969 = vmatpush.bf16.msra.mxu0 0
        %4970 = vmatpush.bf16.msra.mxu0 0
        %4971 = vmatpush.bf16.msra.mxu0 0
        %4972 = vmatpush.bf16.msra.mxu0 0
        %4973 = vmatpush.bf16.msra.mxu0 0
        %4974 = vmatpush.bf16.msra.mxu0 %v4917
        %4975 = vmatpush.bf16.msra.mxu0 %v4908
        %4976 = vmatmul.bf16.gmra.mxu0 %v4266
        %v4977 = vpop.f32.mrf.mxu0
        %v4978 = vadd.f32 0.0, %v4977
        %v4979 = vpop.f32.mrf.mxu0
        %v4980 = vadd.f32 0.0, %v4979
        %4981 = vmatmul.bf16.gmra.mxu0 %v4269
        %v4982 = vpop.f32.mrf.mxu0
        %v4983 = vadd.f32 0.0, %v4982
        %v4984 = vpop.f32.mrf.mxu0
        %v4985 = vadd.f32 0.0, %v4984
        %4986 = vmatmul.bf16.gmra.mxu0 %v4272
        %v4987 = vpop.f32.mrf.mxu0
        %v4988 = vadd.f32 0.0, %v4987
        %v4989 = vpop.f32.mrf.mxu0
        %v4990 = vadd.f32 0.0, %v4989
        %4991 = vmatmul.bf16.gmra.mxu0 %v4275
        %v4992 = vpop.f32.mrf.mxu0
        %v4993 = vadd.f32 0.0, %v4992
        %v4994 = vpop.f32.mrf.mxu0
        %v4995 = vadd.f32 0.0, %v4994
        %4996 = vmatmul.bf16.gmra.mxu0 %v4278
        %v4997 = vpop.f32.mrf.mxu0
        %v4998 = vadd.f32 0.0, %v4997
        %v4999 = vpop.f32.mrf.mxu0
        %v5000 = vadd.f32 0.0, %v4999
        %5001 = vmatmul.bf16.gmra.mxu0 %v4281
        %v5002 = vpop.f32.mrf.mxu0
        %v5003 = vadd.f32 0.0, %v5002
        %v5004 = vpop.f32.mrf.mxu0
        %v5005 = vadd.f32 0.0, %v5004
        %5006 = vmatmul.bf16.gmra.mxu0 %v4284
        %v5007 = vpop.f32.mrf.mxu0
        %v5008 = vadd.f32 0.0, %v5007
        %v5009 = vpop.f32.mrf.mxu0
        %v5010 = vadd.f32 0.0, %v5009
        %5011 = vmatmul.bf16.gmra.mxu0 %v4287
        %v5012 = vpop.f32.mrf.mxu0
        %v5013 = vadd.f32 0.0, %v5012
        %v5014 = vpop.f32.mrf.mxu0
        %v5015 = vadd.f32 0.0, %v5014
        %5016 = vdwg.mxu0
        %s5017 = scalar_lea.vmem %s457, 1024 [#allocation12]
        %5018 = vst [vmem:[%s5017] sm:$0xff] %v4929
        %5019 = vst [vmem:[%s5017 + $0x8] sm:$0xff] %v4978
        %5020 = vst [vmem:[%s5017 + $0x10] sm:$0xff] %v4931
        %5021 = vst [vmem:[%s5017 + $0x18] sm:$0xff] %v4980
        %5022 = vst [vmem:[%s5017 + $0x20] sm:$0xff] %v4934
        %5023 = vst [vmem:[%s5017 + $0x28] sm:$0xff] %v4983
        %5024 = vst [vmem:[%s5017 + $0x30] sm:$0xff] %v4936
        %5025 = vst [vmem:[%s5017 + $0x38] sm:$0xff] %v4985
        %5026 = vst [vmem:[%s5017 + $0x40] sm:$0xff] %v4939
        %5027 = vst [vmem:[%s5017 + $0x48] sm:$0xff] %v4988
        %5028 = vst [vmem:[%s5017 + $0x50] sm:$0xff] %v4941
        %5029 = vst [vmem:[%s5017 + $0x58] sm:$0xff] %v4990
        %5030 = vst [vmem:[%s5017 + $0x60] sm:$0xff] %v4944
        %5031 = vst [vmem:[%s5017 + $0x68] sm:$0xff] %v4993
        %5032 = vst [vmem:[%s5017 + $0x70] sm:$0xff] %v4946
        %5033 = vst [vmem:[%s5017 + $0x78] sm:$0xff] %v4995
        %5034 = vst [vmem:[%s5017 + $0x80] sm:$0xff] %v4949
        %5035 = vst [vmem:[%s5017 + $0x88] sm:$0xff] %v4998
        %5036 = vst [vmem:[%s5017 + $0x90] sm:$0xff] %v4951
        %5037 = vst [vmem:[%s5017 + $0x98] sm:$0xff] %v5000
        %5038 = vst [vmem:[%s5017 + $0xa0] sm:$0xff] %v4954
        %5039 = vst [vmem:[%s5017 + $0xa8] sm:$0xff] %v5003
        %5040 = vst [vmem:[%s5017 + $0xb0] sm:$0xff] %v4956
        %5041 = vst [vmem:[%s5017 + $0xb8] sm:$0xff] %v5005
        %5042 = vst [vmem:[%s5017 + $0xc0] sm:$0xff] %v4959
        %5043 = vst [vmem:[%s5017 + $0xc8] sm:$0xff] %v5008
        %5044 = vst [vmem:[%s5017 + $0xd0] sm:$0xff] %v4961
        %5045 = vst [vmem:[%s5017 + $0xd8] sm:$0xff] %v5010
        %5046 = vst [vmem:[%s5017 + $0xe0] sm:$0xff] %v4964
        %5047 = vst [vmem:[%s5017 + $0xe8] sm:$0xff] %v5013
        %5048 = vst [vmem:[%s5017 + $0xf0] sm:$0xff] %v4966
        %5049 = vst [vmem:[%s5017 + $0xf8] sm:$0xff] %v5015
        %s5050 = scalar_lea.vmem [#allocation2], 120
        %v5051 = vld [vmem:[%s5050] sm:$0xff]
        %v5052 = vld [vmem:[%s5050 + $0x8] sm:$0xff]
        %v5053 = vld [vmem:[%s5050 + $0x10] sm:$0xff]
        %v5057 = vunpack.c.l.b16 %v5051
        %v5058 = vunpack.c.h.b16 %v5051
        %v5059 = vunpack.c.l.b16 %v5052
        %v5060 = vunpack.c.h.b16 %v5052
        %v5061 = vunpack.c.l.b16 %v5053
        %v5062 = vunpack.c.h.b16 %v5053
        %v5063 = vpack.c.b16 %v5059, %v5057
        %v5064 = vpack.c.b16 %v5060, %v5058
        %v5065 = vpack.c.b16 %v5061, %v5061
        %v5066 = vpack.c.b16 %v5062, %v5062
        %v5070 = vsel %vm4289, %v5065, 0
        %v5073 = vsel %vm4289, %v5066, 0
        %5075 = vmatpush.bf16.msra.mxu0 0
        %5076 = vmatpush.bf16.msra.mxu0 0
        %5077 = vmatpush.bf16.msra.mxu0 0
        %5078 = vmatpush.bf16.msra.mxu0 0
        %5079 = vmatpush.bf16.msra.mxu0 0
        %5080 = vmatpush.bf16.msra.mxu0 0
        %5081 = vmatpush.bf16.msra.mxu0 %v5070
        %5082 = vmatpush.bf16.msra.mxu0 %v5063
        %5083 = vmatmul.bf16.gmra.mxu0 %v4266
        %v5084 = vpop.f32.mrf.mxu0
        %v5085 = vadd.f32 0.0, %v5084
        %v5086 = vpop.f32.mrf.mxu0
        %v5087 = vadd.f32 0.0, %v5086
        %5088 = vmatmul.bf16.gmra.mxu0 %v4269
        %v5089 = vpop.f32.mrf.mxu0
        %v5090 = vadd.f32 0.0, %v5089
        %v5091 = vpop.f32.mrf.mxu0
        %v5092 = vadd.f32 0.0, %v5091
        %5093 = vmatmul.bf16.gmra.mxu0 %v4272
        %v5094 = vpop.f32.mrf.mxu0
        %v5095 = vadd.f32 0.0, %v5094
        %v5096 = vpop.f32.mrf.mxu0
        %v5097 = vadd.f32 0.0, %v5096
        %5098 = vmatmul.bf16.gmra.mxu0 %v4275
        %v5099 = vpop.f32.mrf.mxu0
        %v5100 = vadd.f32 0.0, %v5099
        %v5101 = vpop.f32.mrf.mxu0
        %v5102 = vadd.f32 0.0, %v5101
        %5103 = vmatmul.bf16.gmra.mxu0 %v4278
        %v5104 = vpop.f32.mrf.mxu0
        %v5105 = vadd.f32 0.0, %v5104
        %v5106 = vpop.f32.mrf.mxu0
        %v5107 = vadd.f32 0.0, %v5106
        %5108 = vmatmul.bf16.gmra.mxu0 %v4281
        %v5109 = vpop.f32.mrf.mxu0
        %v5110 = vadd.f32 0.0, %v5109
        %v5111 = vpop.f32.mrf.mxu0
        %v5112 = vadd.f32 0.0, %v5111
        %5113 = vmatmul.bf16.gmra.mxu0 %v4284
        %v5114 = vpop.f32.mrf.mxu0
        %v5115 = vadd.f32 0.0, %v5114
        %v5116 = vpop.f32.mrf.mxu0
        %v5117 = vadd.f32 0.0, %v5116
        %5118 = vmatmul.bf16.gmra.mxu0 %v4287
        %v5119 = vpop.f32.mrf.mxu0
        %v5120 = vadd.f32 0.0, %v5119
        %v5121 = vpop.f32.mrf.mxu0
        %v5122 = vadd.f32 0.0, %v5121
        %5123 = vdwg.mxu0
        %5124 = vmatpush.bf16.msra.mxu0 0
        %5125 = vmatpush.bf16.msra.mxu0 0
        %5126 = vmatpush.bf16.msra.mxu0 0
        %5127 = vmatpush.bf16.msra.mxu0 0
        %5128 = vmatpush.bf16.msra.mxu0 0
        %5129 = vmatpush.bf16.msra.mxu0 0
        %5130 = vmatpush.bf16.msra.mxu0 %v5073
        %5131 = vmatpush.bf16.msra.mxu0 %v5064
        %5132 = vmatmul.bf16.gmra.mxu0 %v4266
        %v5133 = vpop.f32.mrf.mxu0
        %v5134 = vadd.f32 0.0, %v5133
        %v5135 = vpop.f32.mrf.mxu0
        %v5136 = vadd.f32 0.0, %v5135
        %5137 = vmatmul.bf16.gmra.mxu0 %v4269
        %v5138 = vpop.f32.mrf.mxu0
        %v5139 = vadd.f32 0.0, %v5138
        %v5140 = vpop.f32.mrf.mxu0
        %v5141 = vadd.f32 0.0, %v5140
        %5142 = vmatmul.bf16.gmra.mxu0 %v4272
        %v5143 = vpop.f32.mrf.mxu0
        %v5144 = vadd.f32 0.0, %v5143
        %v5145 = vpop.f32.mrf.mxu0
        %v5146 = vadd.f32 0.0, %v5145
        %5147 = vmatmul.bf16.gmra.mxu0 %v4275
        %v5148 = vpop.f32.mrf.mxu0
        %v5149 = vadd.f32 0.0, %v5148
        %v5150 = vpop.f32.mrf.mxu0
        %v5151 = vadd.f32 0.0, %v5150
        %5152 = vmatmul.bf16.gmra.mxu0 %v4278
        %v5153 = vpop.f32.mrf.mxu0
        %v5154 = vadd.f32 0.0, %v5153
        %v5155 = vpop.f32.mrf.mxu0
        %v5156 = vadd.f32 0.0, %v5155
        %5157 = vmatmul.bf16.gmra.mxu0 %v4281
        %v5158 = vpop.f32.mrf.mxu0
        %v5159 = vadd.f32 0.0, %v5158
        %v5160 = vpop.f32.mrf.mxu0
        %v5161 = vadd.f32 0.0, %v5160
        %5162 = vmatmul.bf16.gmra.mxu0 %v4284
        %v5163 = vpop.f32.mrf.mxu0
        %v5164 = vadd.f32 0.0, %v5163
        %v5165 = vpop.f32.mrf.mxu0
        %v5166 = vadd.f32 0.0, %v5165
        %5167 = vmatmul.bf16.gmra.mxu0 %v4287
        %v5168 = vpop.f32.mrf.mxu0
        %v5169 = vadd.f32 0.0, %v5168
        %v5170 = vpop.f32.mrf.mxu0
        %v5171 = vadd.f32 0.0, %v5170
        %5172 = vdwg.mxu0
        %s5173 = scalar_lea.vmem %s457, 1280 [#allocation12]
        %5174 = vst [vmem:[%s5173] sm:$0xff] %v5085
        %5175 = vst [vmem:[%s5173 + $0x8] sm:$0xff] %v5134
        %5176 = vst [vmem:[%s5173 + $0x10] sm:$0xff] %v5087
        %5177 = vst [vmem:[%s5173 + $0x18] sm:$0xff] %v5136
        %5178 = vst [vmem:[%s5173 + $0x20] sm:$0xff] %v5090
        %5179 = vst [vmem:[%s5173 + $0x28] sm:$0xff] %v5139
        %5180 = vst [vmem:[%s5173 + $0x30] sm:$0xff] %v5092
        %5181 = vst [vmem:[%s5173 + $0x38] sm:$0xff] %v5141
        %5182 = vst [vmem:[%s5173 + $0x40] sm:$0xff] %v5095
        %5183 = vst [vmem:[%s5173 + $0x48] sm:$0xff] %v5144
        %5184 = vst [vmem:[%s5173 + $0x50] sm:$0xff] %v5097
        %5185 = vst [vmem:[%s5173 + $0x58] sm:$0xff] %v5146
        %5186 = vst [vmem:[%s5173 + $0x60] sm:$0xff] %v5100
        %5187 = vst [vmem:[%s5173 + $0x68] sm:$0xff] %v5149
        %5188 = vst [vmem:[%s5173 + $0x70] sm:$0xff] %v5102
        %5189 = vst [vmem:[%s5173 + $0x78] sm:$0xff] %v5151
        %5190 = vst [vmem:[%s5173 + $0x80] sm:$0xff] %v5105
        %5191 = vst [vmem:[%s5173 + $0x88] sm:$0xff] %v5154
        %5192 = vst [vmem:[%s5173 + $0x90] sm:$0xff] %v5107
        %5193 = vst [vmem:[%s5173 + $0x98] sm:$0xff] %v5156
        %5194 = vst [vmem:[%s5173 + $0xa0] sm:$0xff] %v5110
        %5195 = vst [vmem:[%s5173 + $0xa8] sm:$0xff] %v5159
        %5196 = vst [vmem:[%s5173 + $0xb0] sm:$0xff] %v5112
        %5197 = vst [vmem:[%s5173 + $0xb8] sm:$0xff] %v5161
        %5198 = vst [vmem:[%s5173 + $0xc0] sm:$0xff] %v5115
        %5199 = vst [vmem:[%s5173 + $0xc8] sm:$0xff] %v5164
        %5200 = vst [vmem:[%s5173 + $0xd0] sm:$0xff] %v5117
        %5201 = vst [vmem:[%s5173 + $0xd8] sm:$0xff] %v5166
        %5202 = vst [vmem:[%s5173 + $0xe0] sm:$0xff] %v5120
        %5203 = vst [vmem:[%s5173 + $0xe8] sm:$0xff] %v5169
        %5204 = vst [vmem:[%s5173 + $0xf0] sm:$0xff] %v5122
        %5205 = vst [vmem:[%s5173 + $0xf8] sm:$0xff] %v5171
        %s5206 = scalar_lea.vmem [#allocation2], 144
        %v5207 = vld [vmem:[%s5206] sm:$0xff]
        %v5208 = vld [vmem:[%s5206 + $0x8] sm:$0xff]
        %v5209 = vld [vmem:[%s5206 + $0x10] sm:$0xff]
        %v5213 = vunpack.c.l.b16 %v5207
        %v5214 = vunpack.c.h.b16 %v5207
        %v5215 = vunpack.c.l.b16 %v5208
        %v5216 = vunpack.c.h.b16 %v5208
        %v5217 = vunpack.c.l.b16 %v5209
        %v5218 = vunpack.c.h.b16 %v5209
        %v5219 = vpack.c.b16 %v5215, %v5213
        %v5220 = vpack.c.b16 %v5216, %v5214
        %v5221 = vpack.c.b16 %v5217, %v5217
        %v5222 = vpack.c.b16 %v5218, %v5218
        %v5226 = vsel %vm4289, %v5221, 0
        %v5229 = vsel %vm4289, %v5222, 0
        %5231 = vmatpush.bf16.msra.mxu0 0
        %5232 = vmatpush.bf16.msra.mxu0 0
        %5233 = vmatpush.bf16.msra.mxu0 0
        %5234 = vmatpush.bf16.msra.mxu0 0
        %5235 = vmatpush.bf16.msra.mxu0 0
        %5236 = vmatpush.bf16.msra.mxu0 0
        %5237 = vmatpush.bf16.msra.mxu0 %v5226
        %5238 = vmatpush.bf16.msra.mxu0 %v5219
        %5239 = vmatmul.bf16.gmra.mxu0 %v4266
        %v5240 = vpop.f32.mrf.mxu0
        %v5241 = vadd.f32 0.0, %v5240
        %v5242 = vpop.f32.mrf.mxu0
        %v5243 = vadd.f32 0.0, %v5242
        %5244 = vmatmul.bf16.gmra.mxu0 %v4269
        %v5245 = vpop.f32.mrf.mxu0
        %v5246 = vadd.f32 0.0, %v5245
        %v5247 = vpop.f32.mrf.mxu0
        %v5248 = vadd.f32 0.0, %v5247
        %5249 = vmatmul.bf16.gmra.mxu0 %v4272
        %v5250 = vpop.f32.mrf.mxu0
        %v5251 = vadd.f32 0.0, %v5250
        %v5252 = vpop.f32.mrf.mxu0
        %v5253 = vadd.f32 0.0, %v5252
        %5254 = vmatmul.bf16.gmra.mxu0 %v4275
        %v5255 = vpop.f32.mrf.mxu0
        %v5256 = vadd.f32 0.0, %v5255
        %v5257 = vpop.f32.mrf.mxu0
        %v5258 = vadd.f32 0.0, %v5257
        %5259 = vmatmul.bf16.gmra.mxu0 %v4278
        %v5260 = vpop.f32.mrf.mxu0
        %v5261 = vadd.f32 0.0, %v5260
        %v5262 = vpop.f32.mrf.mxu0
        %v5263 = vadd.f32 0.0, %v5262
        %5264 = vmatmul.bf16.gmra.mxu0 %v4281
        %v5265 = vpop.f32.mrf.mxu0
        %v5266 = vadd.f32 0.0, %v5265
        %v5267 = vpop.f32.mrf.mxu0
        %v5268 = vadd.f32 0.0, %v5267
        %5269 = vmatmul.bf16.gmra.mxu0 %v4284
        %v5270 = vpop.f32.mrf.mxu0
        %v5271 = vadd.f32 0.0, %v5270
        %v5272 = vpop.f32.mrf.mxu0
        %v5273 = vadd.f32 0.0, %v5272
        %5274 = vmatmul.bf16.gmra.mxu0 %v4287
        %v5275 = vpop.f32.mrf.mxu0
        %v5276 = vadd.f32 0.0, %v5275
        %v5277 = vpop.f32.mrf.mxu0
        %v5278 = vadd.f32 0.0, %v5277
        %5279 = vdwg.mxu0
        %5280 = vmatpush.bf16.msra.mxu0 0
        %5281 = vmatpush.bf16.msra.mxu0 0
        %5282 = vmatpush.bf16.msra.mxu0 0
        %5283 = vmatpush.bf16.msra.mxu0 0
        %5284 = vmatpush.bf16.msra.mxu0 0
        %5285 = vmatpush.bf16.msra.mxu0 0
        %5286 = vmatpush.bf16.msra.mxu0 %v5229
        %5287 = vmatpush.bf16.msra.mxu0 %v5220
        %5288 = vmatmul.bf16.gmra.mxu0 %v4266
        %v5289 = vpop.f32.mrf.mxu0
        %v5290 = vadd.f32 0.0, %v5289
        %v5291 = vpop.f32.mrf.mxu0
        %v5292 = vadd.f32 0.0, %v5291
        %5293 = vmatmul.bf16.gmra.mxu0 %v4269
        %v5294 = vpop.f32.mrf.mxu0
        %v5295 = vadd.f32 0.0, %v5294
        %v5296 = vpop.f32.mrf.mxu0
        %v5297 = vadd.f32 0.0, %v5296
        %5298 = vmatmul.bf16.gmra.mxu0 %v4272
        %v5299 = vpop.f32.mrf.mxu0
        %v5300 = vadd.f32 0.0, %v5299
        %v5301 = vpop.f32.mrf.mxu0
        %v5302 = vadd.f32 0.0, %v5301
        %5303 = vmatmul.bf16.gmra.mxu0 %v4275
        %v5304 = vpop.f32.mrf.mxu0
        %v5305 = vadd.f32 0.0, %v5304
        %v5306 = vpop.f32.mrf.mxu0
        %v5307 = vadd.f32 0.0, %v5306
        %5308 = vmatmul.bf16.gmra.mxu0 %v4278
        %v5309 = vpop.f32.mrf.mxu0
        %v5310 = vadd.f32 0.0, %v5309
        %v5311 = vpop.f32.mrf.mxu0
        %v5312 = vadd.f32 0.0, %v5311
        %5313 = vmatmul.bf16.gmra.mxu0 %v4281
        %v5314 = vpop.f32.mrf.mxu0
        %v5315 = vadd.f32 0.0, %v5314
        %v5316 = vpop.f32.mrf.mxu0
        %v5317 = vadd.f32 0.0, %v5316
        %5318 = vmatmul.bf16.gmra.mxu0 %v4284
        %v5319 = vpop.f32.mrf.mxu0
        %v5320 = vadd.f32 0.0, %v5319
        %v5321 = vpop.f32.mrf.mxu0
        %v5322 = vadd.f32 0.0, %v5321
        %5323 = vmatmul.bf16.gmra.mxu0 %v4287
        %v5324 = vpop.f32.mrf.mxu0
        %v5325 = vadd.f32 0.0, %v5324
        %v5326 = vpop.f32.mrf.mxu0
        %v5327 = vadd.f32 0.0, %v5326
        %5328 = vdwg.mxu0
        %s5329 = scalar_lea.vmem %s457, 1536 [#allocation12]
        %5330 = vst [vmem:[%s5329] sm:$0xff] %v5241
        %5331 = vst [vmem:[%s5329 + $0x8] sm:$0xff] %v5290
        %5332 = vst [vmem:[%s5329 + $0x10] sm:$0xff] %v5243
        %5333 = vst [vmem:[%s5329 + $0x18] sm:$0xff] %v5292
        %5334 = vst [vmem:[%s5329 + $0x20] sm:$0xff] %v5246
        %5335 = vst [vmem:[%s5329 + $0x28] sm:$0xff] %v5295
        %5336 = vst [vmem:[%s5329 + $0x30] sm:$0xff] %v5248
        %5337 = vst [vmem:[%s5329 + $0x38] sm:$0xff] %v5297
        %5338 = vst [vmem:[%s5329 + $0x40] sm:$0xff] %v5251
        %5339 = vst [vmem:[%s5329 + $0x48] sm:$0xff] %v5300
        %5340 = vst [vmem:[%s5329 + $0x50] sm:$0xff] %v5253
        %5341 = vst [vmem:[%s5329 + $0x58] sm:$0xff] %v5302
        %5342 = vst [vmem:[%s5329 + $0x60] sm:$0xff] %v5256
        %5343 = vst [vmem:[%s5329 + $0x68] sm:$0xff] %v5305
        %5344 = vst [vmem:[%s5329 + $0x70] sm:$0xff] %v5258
        %5345 = vst [vmem:[%s5329 + $0x78] sm:$0xff] %v5307
        %5346 = vst [vmem:[%s5329 + $0x80] sm:$0xff] %v5261
        %5347 = vst [vmem:[%s5329 + $0x88] sm:$0xff] %v5310
        %5348 = vst [vmem:[%s5329 + $0x90] sm:$0xff] %v5263
        %5349 = vst [vmem:[%s5329 + $0x98] sm:$0xff] %v5312
        %5350 = vst [vmem:[%s5329 + $0xa0] sm:$0xff] %v5266
        %5351 = vst [vmem:[%s5329 + $0xa8] sm:$0xff] %v5315
        %5352 = vst [vmem:[%s5329 + $0xb0] sm:$0xff] %v5268
        %5353 = vst [vmem:[%s5329 + $0xb8] sm:$0xff] %v5317
        %5354 = vst [vmem:[%s5329 + $0xc0] sm:$0xff] %v5271
        %5355 = vst [vmem:[%s5329 + $0xc8] sm:$0xff] %v5320
        %5356 = vst [vmem:[%s5329 + $0xd0] sm:$0xff] %v5273
        %5357 = vst [vmem:[%s5329 + $0xd8] sm:$0xff] %v5322
        %5358 = vst [vmem:[%s5329 + $0xe0] sm:$0xff] %v5276
        %5359 = vst [vmem:[%s5329 + $0xe8] sm:$0xff] %v5325
        %5360 = vst [vmem:[%s5329 + $0xf0] sm:$0xff] %v5278
        %5361 = vst [vmem:[%s5329 + $0xf8] sm:$0xff] %v5327
        %s5362 = scalar_lea.vmem [#allocation2], 168
        %v5363 = vld [vmem:[%s5362] sm:$0xff]
        %v5364 = vld [vmem:[%s5362 + $0x8] sm:$0xff]
        %v5365 = vld [vmem:[%s5362 + $0x10] sm:$0xff]
        %v5369 = vunpack.c.l.b16 %v5363
        %v5370 = vunpack.c.h.b16 %v5363
        %v5371 = vunpack.c.l.b16 %v5364
        %v5372 = vunpack.c.h.b16 %v5364
        %v5373 = vunpack.c.l.b16 %v5365
        %v5374 = vunpack.c.h.b16 %v5365
        %v5375 = vpack.c.b16 %v5371, %v5369
        %v5376 = vpack.c.b16 %v5372, %v5370
        %v5377 = vpack.c.b16 %v5373, %v5373
        %v5378 = vpack.c.b16 %v5374, %v5374
        %v5382 = vsel %vm4289, %v5377, 0
        %v5385 = vsel %vm4289, %v5378, 0
        %5387 = vmatpush.bf16.msra.mxu0 0
        %5388 = vmatpush.bf16.msra.mxu0 0
        %5389 = vmatpush.bf16.msra.mxu0 0
        %5390 = vmatpush.bf16.msra.mxu0 0
        %5391 = vmatpush.bf16.msra.mxu0 0
        %5392 = vmatpush.bf16.msra.mxu0 0
        %5393 = vmatpush.bf16.msra.mxu0 %v5382
        %5394 = vmatpush.bf16.msra.mxu0 %v5375
        %5395 = vmatmul.bf16.gmra.mxu0 %v4266
        %v5396 = vpop.f32.mrf.mxu0
        %v5397 = vadd.f32 0.0, %v5396
        %v5398 = vpop.f32.mrf.mxu0
        %v5399 = vadd.f32 0.0, %v5398
        %5400 = vmatmul.bf16.gmra.mxu0 %v4269
        %v5401 = vpop.f32.mrf.mxu0
        %v5402 = vadd.f32 0.0, %v5401
        %v5403 = vpop.f32.mrf.mxu0
        %v5404 = vadd.f32 0.0, %v5403
        %5405 = vmatmul.bf16.gmra.mxu0 %v4272
        %v5406 = vpop.f32.mrf.mxu0
        %v5407 = vadd.f32 0.0, %v5406
        %v5408 = vpop.f32.mrf.mxu0
        %v5409 = vadd.f32 0.0, %v5408
        %5410 = vmatmul.bf16.gmra.mxu0 %v4275
        %v5411 = vpop.f32.mrf.mxu0
        %v5412 = vadd.f32 0.0, %v5411
        %v5413 = vpop.f32.mrf.mxu0
        %v5414 = vadd.f32 0.0, %v5413
        %5415 = vmatmul.bf16.gmra.mxu0 %v4278
        %v5416 = vpop.f32.mrf.mxu0
        %v5417 = vadd.f32 0.0, %v5416
        %v5418 = vpop.f32.mrf.mxu0
        %v5419 = vadd.f32 0.0, %v5418
        %5420 = vmatmul.bf16.gmra.mxu0 %v4281
        %v5421 = vpop.f32.mrf.mxu0
        %v5422 = vadd.f32 0.0, %v5421
        %v5423 = vpop.f32.mrf.mxu0
        %v5424 = vadd.f32 0.0, %v5423
        %5425 = vmatmul.bf16.gmra.mxu0 %v4284
        %v5426 = vpop.f32.mrf.mxu0
        %v5427 = vadd.f32 0.0, %v5426
        %v5428 = vpop.f32.mrf.mxu0
        %v5429 = vadd.f32 0.0, %v5428
        %5430 = vmatmul.bf16.gmra.mxu0 %v4287
        %v5431 = vpop.f32.mrf.mxu0
        %v5432 = vadd.f32 0.0, %v5431
        %v5433 = vpop.f32.mrf.mxu0
        %v5434 = vadd.f32 0.0, %v5433
        %5435 = vdwg.mxu0
        %5436 = vmatpush.bf16.msra.mxu0 0
        %5437 = vmatpush.bf16.msra.mxu0 0
        %5438 = vmatpush.bf16.msra.mxu0 0
        %5439 = vmatpush.bf16.msra.mxu0 0
        %5440 = vmatpush.bf16.msra.mxu0 0
        %5441 = vmatpush.bf16.msra.mxu0 0
        %5442 = vmatpush.bf16.msra.mxu0 %v5385
        %5443 = vmatpush.bf16.msra.mxu0 %v5376
        %5444 = vmatmul.bf16.gmra.mxu0 %v4266
        %v5445 = vpop.f32.mrf.mxu0
        %v5446 = vadd.f32 0.0, %v5445
        %v5447 = vpop.f32.mrf.mxu0
        %v5448 = vadd.f32 0.0, %v5447
        %5449 = vmatmul.bf16.gmra.mxu0 %v4269
        %v5450 = vpop.f32.mrf.mxu0
        %v5451 = vadd.f32 0.0, %v5450
        %v5452 = vpop.f32.mrf.mxu0
        %v5453 = vadd.f32 0.0, %v5452
        %5454 = vmatmul.bf16.gmra.mxu0 %v4272
        %v5455 = vpop.f32.mrf.mxu0
        %v5456 = vadd.f32 0.0, %v5455
        %v5457 = vpop.f32.mrf.mxu0
        %v5458 = vadd.f32 0.0, %v5457
        %5459 = vmatmul.bf16.gmra.mxu0 %v4275
        %v5460 = vpop.f32.mrf.mxu0
        %v5461 = vadd.f32 0.0, %v5460
        %v5462 = vpop.f32.mrf.mxu0
        %v5463 = vadd.f32 0.0, %v5462
        %5464 = vmatmul.bf16.gmra.mxu0 %v4278
        %v5465 = vpop.f32.mrf.mxu0
        %v5466 = vadd.f32 0.0, %v5465
        %v5467 = vpop.f32.mrf.mxu0
        %v5468 = vadd.f32 0.0, %v5467
        %5469 = vmatmul.bf16.gmra.mxu0 %v4281
        %v5470 = vpop.f32.mrf.mxu0
        %v5471 = vadd.f32 0.0, %v5470
        %v5472 = vpop.f32.mrf.mxu0
        %v5473 = vadd.f32 0.0, %v5472
        %5474 = vmatmul.bf16.gmra.mxu0 %v4284
        %v5475 = vpop.f32.mrf.mxu0
        %v5476 = vadd.f32 0.0, %v5475
        %v5477 = vpop.f32.mrf.mxu0
        %v5478 = vadd.f32 0.0, %v5477
        %5479 = vmatmul.bf16.gmra.mxu0 %v4287
        %v5480 = vpop.f32.mrf.mxu0
        %v5481 = vadd.f32 0.0, %v5480
        %v5482 = vpop.f32.mrf.mxu0
        %v5483 = vadd.f32 0.0, %v5482
        %5484 = vdwg.mxu0
        %s5485 = scalar_lea.vmem %s457, 1792 [#allocation12]
        %5486 = vst [vmem:[%s5485] sm:$0xff] %v5397
        %5487 = vst [vmem:[%s5485 + $0x8] sm:$0xff] %v5446
        %5488 = vst [vmem:[%s5485 + $0x10] sm:$0xff] %v5399
        %5489 = vst [vmem:[%s5485 + $0x18] sm:$0xff] %v5448
        %5490 = vst [vmem:[%s5485 + $0x20] sm:$0xff] %v5402
        %5491 = vst [vmem:[%s5485 + $0x28] sm:$0xff] %v5451
        %5492 = vst [vmem:[%s5485 + $0x30] sm:$0xff] %v5404
        %5493 = vst [vmem:[%s5485 + $0x38] sm:$0xff] %v5453
        %5494 = vst [vmem:[%s5485 + $0x40] sm:$0xff] %v5407
        %5495 = vst [vmem:[%s5485 + $0x48] sm:$0xff] %v5456
        %5496 = vst [vmem:[%s5485 + $0x50] sm:$0xff] %v5409
        %5497 = vst [vmem:[%s5485 + $0x58] sm:$0xff] %v5458
        %5498 = vst [vmem:[%s5485 + $0x60] sm:$0xff] %v5412
        %5499 = vst [vmem:[%s5485 + $0x68] sm:$0xff] %v5461
        %5500 = vst [vmem:[%s5485 + $0x70] sm:$0xff] %v5414
        %5501 = vst [vmem:[%s5485 + $0x78] sm:$0xff] %v5463
        %5502 = vst [vmem:[%s5485 + $0x80] sm:$0xff] %v5417
        %5503 = vst [vmem:[%s5485 + $0x88] sm:$0xff] %v5466
        %5504 = vst [vmem:[%s5485 + $0x90] sm:$0xff] %v5419
        %5505 = vst [vmem:[%s5485 + $0x98] sm:$0xff] %v5468
        %5506 = vst [vmem:[%s5485 + $0xa0] sm:$0xff] %v5422
        %5507 = vst [vmem:[%s5485 + $0xa8] sm:$0xff] %v5471
        %5508 = vst [vmem:[%s5485 + $0xb0] sm:$0xff] %v5424
        %5509 = vst [vmem:[%s5485 + $0xb8] sm:$0xff] %v5473
        %5510 = vst [vmem:[%s5485 + $0xc0] sm:$0xff] %v5427
        %5511 = vst [vmem:[%s5485 + $0xc8] sm:$0xff] %v5476
        %5512 = vst [vmem:[%s5485 + $0xd0] sm:$0xff] %v5429
        %5513 = vst [vmem:[%s5485 + $0xd8] sm:$0xff] %v5478
        %5514 = vst [vmem:[%s5485 + $0xe0] sm:$0xff] %v5432
        %5515 = vst [vmem:[%s5485 + $0xe8] sm:$0xff] %v5481
        %5516 = vst [vmem:[%s5485 + $0xf0] sm:$0xff] %v5434
        %5517 = vst [vmem:[%s5485 + $0xf8] sm:$0xff] %v5483
        %s5518 = sand.u32 %s254, 1
        %s5519 = scalar_lea.sflag [#allocation5], %s5518
        %s5520 = sand.u32 %s254, 1
        %s5521 = smul.addr %s5520, 2048
        %s5522 = scalar_lea.vmem [#allocation12], %s5521
        // Predicated region
        $region81: #{tpu_custom_call.1} parent=55 // pred_check
          %p5523 = pneg %p264
        $region82: #{tpu_custom_call.1} parent=55 // pred_check_branch
          %5525 = sbr.rel (%p5523) target = $region84
        $region83: #{tpu_custom_call.1} parent=55 // pred_region
          #allocation14 [shape = 'u32[6]{0}', space=smem, size = 0x18, scoped, tag = 'DMA stride descriptor']
          %s5526 = smul.u32 16, %s33
          %5528 = vsyncadd %s5519, 0
          %s5529 = smul.addr %s5526, 2
          %s5530 = smul.addr %s32, 512
          %s5531 = sadd.s32 %s5529, %s5530
          %s5532 = smul.addr %s5531, 8
          %s5533 = scalar_lea.hbm %s9, %s5532
          %s5535 = sshll.u32 1, 14
          %s5536 = sxor.u32 4294967295, %s5535
          %s5539 = sshll.u32 7, 18
          %s5540 = sxor.u32 4294967295, %s5539
          %s5541 = sand.u32 0, %s5540
          %s5543 = sor.u32 %s5541, 0
          %s5544 = sshll.u32 %s5522, 4
          %s5545 = int_to_ptr.vmem [resolvable:$true] %s5544
          %s5546 = sshll.u32 %s5533, 4
          %s5547 = int_to_ptr.hbm [resolvable:$true] %s5546
          %5553 = sst [smem:[#allocation14]] 4096
          %s5554 = scalar_lea.smem [#allocation14], 1
          %5555 = sst [smem:[%s5554]] 8192
          %s5556 = scalar_lea.smem [#allocation14], 2
          %5557 = sst [smem:[%s5556]] 16
          %s5558 = scalar_lea.smem [#allocation14], 3
          %5559 = sst [smem:[%s5558]] 256
          %s5560 = scalar_lea.smem [#allocation14], 4
          %5561 = sst [smem:[%s5560]] 256
          %s5562 = scalar_lea.smem [#allocation14], 5
          %5563 = sst [smem:[%s5562]] 16
          %5565 = dma.general %s5545, 32768, %s5547, %s5519, [#allocation13], [#allocation14], %s5543, 0
        $region84: #{tpu_custom_call.1} parent=55 // pred_fallthru
          _
      $region56: #{tpu_custom_call.1} parent=5 // pred_fallthru
        _
      %p5566 = scmp.le.s32.totalorder 2, %s23
      // Predicated region
      $region85: #{tpu_custom_call.1} parent=5 // pred_check
        %p5567 = pneg %p5566
      $region86: #{tpu_custom_call.1} parent=5 // pred_check_branch
        %5569 = sbr.rel (%p5567) target = $region88
      $region87: #{tpu_custom_call.1} parent=5 // pred_region
        %s5570 = ssub.s32 %s23, 2
        // Predicated region
        $region89: #{tpu_custom_call.1} parent=87 // pred_check
          %p5571 = pneg %p270
        $region90: #{tpu_custom_call.1} parent=87 // pred_check_branch
          %5573 = sbr.rel (%p5571) target = $region92
        $region91: #{tpu_custom_call.1} parent=87 // pred_region
          %s5574 = sand.u32 %s255, 1
          %s5575 = scalar_lea.sflag [#allocation5], %s5574
          %s5576 = sand.u32 %s255, 1
          %s5577 = smul.addr %s5576, 2048
          %s5578 = scalar_lea.vmem [#allocation12], %s5577
          %5580 = dma.done %s5575, 32768
        $region92: #{tpu_custom_call.1} parent=87 // pred_fallthru
          _
      $region88: #{tpu_custom_call.1} parent=5 // pred_fallthru
        _
    $region6: #{tpu_custom_call.1} parent=1 // loop_footer
      %s27 = sadd.s32 1, %s23
    $region7: #{tpu_custom_call.1} parent=1 // loop_footer_branch
      %22 = sbr.rel target = $region3
    $region8: #{tpu_custom_call.1} parent=1 // loop_exit
      _
    %5581 = vsyncpa [#allocation4], 1
    %s5582 = scalar_lea.sflag [#allocation4], 1
    %5583 = vsyncpa %s5582, 1
    %5584 = vsyncpa [#allocation7], 1
    %5585 = vsyncpa [#allocation10], 1
    %5586 = vsyncpa [#allocation5], 1
    %s5587 = scalar_lea.sflag [#allocation5], 1
    %5588 = vsyncpa %s5587, 1

</llo_original>
